<compile_context>
chip_gen: v7x
topology: tpu7x:2x2x1
jax: 0.10.0
libtpu: 0.0.40
codegen_flags: <defaults>
</compile_context>

<pallas_src>
import math

import jax
import jax.numpy as jnp
from jax.experimental import pallas as pl
from jax.experimental.pallas import tpu as pltpu

# ---------------- config (small synthetic shapes) ----------------
B, NDOC, LQ, LD = 2, 2, 8, 16      # batch, docs per query, query len, doc len
H = 32                             # num_hidden_nodes
V = 64                             # vocab_size
K = 8                              # rbf_kernel_dim
POOL, STRIDE = 4, 2                # rbf_kernel_pool_size / stride
NHEADS = 4                         # num_attn_heads
EPS_COS = 1e-8                     # torch.nn.CosineSimilarity eps

HIGHEST = jax.lax.Precision.HIGHEST


# ---------------- Pallas kernel: score all (query, doc) pairs in one shot ----------------
def _score_kernel(q_ref, dm_ref, md_ref, mq_ref,
                  wqt_ref, bqt_ref, pmatTB_ref, w1big_ref, b1big_ref,
                  w2big_ref, wneg_ref, musrow_ref, scal_ref, o_ref):
    f32 = jnp.float32
    inv_denom = scal_ref[0]
    b2 = scal_ref[1]
    eps_sq = EPS_COS * EPS_COS

    Bq, LQ_, H_ = q_ref.shape
    _, NDLD, _ = dm_ref.shape
    BNDLP = pmatTB_ref.shape[0]
    ndoc = o_ref.shape[-1]
    lp_pad = BNDLP // (Bq * ndoc)
    n_k = musrow_ref.shape[-1] // LQ_

    # fc_qt projection + L2 normalisation of the query terms (all queries at once).
    # HIGHEST: this feeds the cosine sim, which the sigma=0.1 RBF amplifies ~100x.
    q = jnp.einsum("blh,hm->blm", q_ref[...], wqt_ref[...],
                   precision=HIGHEST, preferred_element_type=f32) + bqt_ref[...]
    qn = q * jax.lax.rsqrt(jnp.maximum(jnp.sum(q * q, -1, keepdims=True), eps_sq))

    dm = dm_ref[...]                                             # (B, NDOC*LD, H), fc_ctx premixed
    dn = dm * jax.lax.rsqrt(jnp.maximum(jnp.sum(dm * dm, -1, keepdims=True), eps_sq))

    # cosine similarity, batched over queries (flash-attention style einsum): (B, NDLD, LQ)
    sim = jnp.einsum("bdh,bqh->bdq", dn, qn,
                     precision=HIGHEST, preferred_element_type=f32)

    # RBF expansion over all K kernels at once; rows = (b, doc-pos), cols = (k, q)
    simr = jnp.broadcast_to(sim[:, :, None, :], (Bq, NDLD, n_k, LQ_)
                            ).reshape(Bq * NDLD, n_k * LQ_)
    diff = simr - musrow_ref[...]                                # mus row broadcast
    rbf = jnp.exp(-(diff * diff) * inv_denom) * md_ref[...]     # doc-pad mask (column)

    # sum-pool over doc positions (AvgPool1d * pool_size) as one block-diag 0/1 matmul.
    # HIGHEST so pooled sums match the reference's exact f32 sums (log is error-sensitive
    # when pooled is small).
    pooled = jnp.dot(pmatTB_ref[...], rbf,
                     precision=HIGHEST, preferred_element_type=f32)   # (B*NDOC*LPp, K*LQ)
    logp = jnp.log(pooled + 1e-6)

    # MLP layer 1: contract K with W1 (block-diag over query terms) -> lane-dense LQ*H.
    # DEFAULT precision (reference uses the same); RBF-insensitive downstream of exp/log.
    z = jnp.dot(logp, w1big_ref[...], preferred_element_type=f32)
    hid = jnp.maximum(z + b1big_ref[...], 0.0)      # ReLU; dropout = identity (eval)
    # MLP layer 2 + padded-window -inf mask (must precede the max)
    score = (jnp.dot(hid, w2big_ref[...], preferred_element_type=f32)
             + b2 + wneg_ref[...])                  # (B*NDOC*LPp, LQ)

    # max over pooled windows per (query, doc): single reshape + reduce
    per_q = jnp.max(score.reshape(Bq, ndoc, lp_pad, LQ_), axis=2)     # (B, NDOC, LQ)

    # query mask + sum over query terms (exact f32, matches the reference sum)
    o_ref[...] = jnp.sum(per_q * mq_ref[...], axis=-1)                # (B, NDOC)


# ---------------- one-time constant precompute (hoisted out of the forward) ----------------
def build_score_constants(params):
    f32 = jnp.float32
    LP = (LD - POOL) // STRIDE + 1
    LP_PAD = ((LP + 7) // 8) * 8            # pad windows to a sublane multiple
    nblk = B * NDOC

    # 0/1 sum-pool matrix per doc (padded windows zeroed), block-diag over ALL B*NDOC docs
    l = jnp.arange(LD)[:, None]
    w = jnp.arange(LP_PAD)[None, :]
    pmat_doc = ((l >= w * STRIDE) & (l < w * STRIDE + POOL) & (w < LP)).astype(f32)  # (LD, LPp)
    pmatTB = jnp.kron(jnp.eye(nblk, dtype=f32), pmat_doc.T)        # (B*NDOC*LPp, B*NDOC*LD)

    # additive -inf mask for padded pooling windows (applied before the max)
    wvalid = jnp.tile(jnp.arange(LP_PAD) < LP, nblk)
    wneg = jnp.where(wvalid, 0.0, -1e30).astype(f32)[:, None]      # (B*NDOC*LPp, 1)

    # block-diagonal MLP weights: one MXU op contracts the K rbf kernels for all
    # (query-term, window) pairs at once with a lane-dense (LQ*H) intermediate.
    eyeq = jnp.eye(LQ, dtype=f32)
    w1big = jnp.einsum("kh,qr->kqrh", params["W1"].astype(f32), eyeq).reshape(K * LQ, LQ * H)
    b1big = jnp.tile(params["b1"].astype(f32), LQ).reshape(1, LQ * H)
    w2big = jnp.einsum("h,qr->qhr", params["w2"].astype(f32), eyeq).reshape(LQ * H, LQ)

    # mus as a row vector over the (k, q) column layout -> single broadcast-subtract
    musrow = jnp.repeat(params["mus"].astype(f32), LQ).reshape(1, K * LQ)
    scalars = jnp.stack([1.0 / params["denom"], params["b2"]]).astype(f32)

    return dict(W_qt=params["W_qt"].astype(f32),
                b_qt=params["b_qt"].reshape(1, H).astype(f32),
                pmatTB=pmatTB, w1big=w1big, b1big=b1big, w2big=w2big,
                wneg=wneg, musrow=musrow, scalars=scalars)


def rbf_score_pallas(q_emb, dm_flat, mask_d_flat, mask_q, c):
    """q_emb (B, LQ, H); dm_flat (B*NDOC, LD, H) = fc_ctx mix; masks as 0/1 floats."""
    Bq, LQ_, H_ = q_emb.shape
    BD, LD_, _ = dm_flat.shape
    ndoc = BD // Bq
    NDLD = ndoc * LD_
    BNDLP, BNDLD = c["pmatTB"].shape
    KLQ = c["w1big"].shape[0]
    f32 = jnp.float32

    dm3 = dm_flat.reshape(Bq, NDLD, H_).astype(f32)
    md2 = mask_d_flat.reshape(Bq * NDLD, 1).astype(f32)
    mq3 = mask_q.reshape(Bq, 1, LQ_).astype(f32)

    grid_spec = pltpu.PrefetchScalarGridSpec(
        num_scalar_prefetch=0,
        grid=(1,),                                               # single step: whole batch at once
        in_specs=[
            pl.BlockSpec((Bq, LQ_, H_), lambda i: (0, 0, 0)),    # q_emb
            pl.BlockSpec((Bq, NDLD, H_), lambda i: (0, 0, 0)),   # dm (fc_ctx mix, all docs)
            pl.BlockSpec((Bq * NDLD, 1), lambda i: (0, 0)),      # mask_d column
            pl.BlockSpec((Bq, 1, LQ_), lambda i: (0, 0, 0)),     # mask_q
            pl.BlockSpec((H_, H_), lambda i: (0, 0)),            # W_qt
            pl.BlockSpec((1, H_), lambda i: (0, 0)),             # b_qt
            pl.BlockSpec((BNDLP, BNDLD), lambda i: (0, 0)),      # pool matrix^T (block-diag)
            pl.BlockSpec((KLQ, LQ_ * H_), lambda i: (0, 0)),     # W1 block-diag
            pl.BlockSpec((1, LQ_ * H_), lambda i: (0, 0)),       # b1 tiled
            pl.BlockSpec((LQ_ * H_, LQ_), lambda i: (0, 0)),     # w2 block-diag
            pl.BlockSpec((BNDLP, 1), lambda i: (0, 0)),          # padded-window -inf mask
            pl.BlockSpec((1, KLQ), lambda i: (0, 0)),            # mus row
            pl.BlockSpec(memory_space=pltpu.MemorySpace.SMEM),   # [1/denom, b2]
        ],
        out_specs=pl.BlockSpec((Bq, ndoc), lambda i: (0, 0)),
    )
    out = pl.pallas_call(
        _score_kernel,
        out_shape=jax.ShapeDtypeStruct((Bq, ndoc), f32),
        grid_spec=grid_spec,
        compiler_params=pltpu.CompilerParams(
            dimension_semantics=("arbitrary",),
            vmem_limit_bytes=32 * 1024 * 1024),                  # portable cap (fits v7x VMEM)
    )(q_emb.astype(f32), dm3, md2, mq3,
      c["W_qt"], c["b_qt"], c["pmatTB"], c["w1big"], c["b1big"], c["w2big"],
      c["wneg"], c["musrow"], c["scalars"])
    return out                                                   # (B, NDOC)


# ---------------- plain-JAX glue: embeddings + contextualizer ----------------
def positional_encoding(length, dim):
    pos = jnp.arange(length, dtype=jnp.float32)[:, None]
    div = jnp.exp(jnp.arange(0, dim, 2, dtype=jnp.float32)
                  * (-math.log(10000.0) / dim))
    pe = jnp.zeros((length, dim), jnp.float32)
    pe = pe.at[:, 0::2].set(jnp.sin(pos * div))
    pe = pe.at[:, 1::2].set(jnp.cos(pos * div))
    return pe


def layer_norm(x, g, b, eps=1e-5):
    mu = x.mean(-1, keepdims=True)
    var = ((x - mu) ** 2).mean(-1, keepdims=True)
    return (x - mu) * jax.lax.rsqrt(var + eps) * g + b


def contextualize(d_flat, mask_d_flat, p):
    # Stand-in for self.pos_encoder + self.contextualize (see TODO at top).
    N, L, Hd = d_flat.shape
    x = d_flat + positional_encoding(L, Hd)[None]
    pad = mask_d_flat < 0.5                       # True == key is padding
    nh, hd = NHEADS, Hd // NHEADS
    q = (x @ p["Wq"] + p["bq"]).reshape(N, L, nh, hd).transpose(0, 2, 1, 3)
    k = (x @ p["Wk"] + p["bk"]).reshape(N, L, nh, hd).transpose(0, 2, 1, 3)
    v = (x @ p["Wv"] + p["bv"]).reshape(N, L, nh, hd).transpose(0, 2, 1, 3)
    sc = jnp.einsum("nhqd,nhkd->nhqk", q, k) / math.sqrt(hd)
    sc = jnp.where(pad[:, None, None, :], -1e9, sc)
    attn = jax.nn.softmax(sc, axis=-1)
    ctx = jnp.einsum("nhqk,nhkd->nhqd", attn, v).transpose(0, 2, 1, 3)
    ctx = ctx.reshape(N, L, Hd)
    x = layer_norm(x + ctx @ p["Wo"] + p["bo"], p["ln1_g"], p["ln1_b"])
    ff = jnp.maximum(x @ p["Wf1"] + p["bf1"], 0.0) @ p["Wf2"] + p["bf2"]
    x = layer_norm(x + ff, p["ln2_g"], p["ln2_b"])
    return x


def ndrm1_forward(params, consts, q_ids, d_ids, mask_q, mask_d):
    emb = params["embed"]
    q_emb = emb[q_ids]                                   # (B, LQ, H)
    d_emb4 = emb[d_ids]                                  # (B, NDOC, LD, H)
    Bq, nd, Ld, Hd = d_emb4.shape
    d_flat = d_emb4.reshape(Bq * nd, Ld, Hd)
    md_flat = mask_d.reshape(Bq * nd, Ld)
    d_ctx = contextualize(d_flat, md_flat, params)       # (B*NDOC, LD, H)
    # fc_ctx Linear(2 -> 1) mix fused here (halves the doc-side DMA into the kernel)
    dm = (d_flat * params["w_ctx"][0] + d_ctx * params["w_ctx"][1]
          + params["b_ctx"])
    # Pallas kernel does the rest (qti_mode=False => summed over query terms)
    return rbf_score_pallas(q_emb, dm, md_flat, mask_q, consts)


# ---------------- pure-JAX reference (mirrors the PyTorch forward) ----------------
def ndrm1_reference(params, q_ids, d_ids, mask_q, mask_d):
    emb = params["embed"]
    q_emb = emb[q_ids]
    d_emb4 = emb[d_ids]
    Bq, nd, Ld, Hd = d_emb4.shape
    d_flat = d_emb4.reshape(Bq * nd, Ld, Hd)
    md_flat = mask_d.reshape(Bq * nd, Ld)
    d_ctx = contextualize(d_flat, md_flat, params)
    # HIGHEST on the two dots that feed the RBF-sensitive cosine similarity
    qf = jnp.einsum("blh,hm->blm", q_emb, params["W_qt"],
                    precision=HIGHEST) + params["b_qt"]
    dm = (d_flat * params["w_ctx"][0] + d_ctx * params["w_ctx"][1]
          + params["b_ctx"]).reshape(Bq, nd, Ld, Hd)
    eps_sq = EPS_COS * EPS_COS
    qn = qf * jax.lax.rsqrt(jnp.maximum((qf * qf).sum(-1, keepdims=True), eps_sq))
    dn = dm * jax.lax.rsqrt(jnp.maximum((dm * dm).sum(-1, keepdims=True), eps_sq))
    sim = jnp.einsum("bqh,bndh->bnqd", qn, dn, precision=HIGHEST)   # (B,NDOC,LQ,LD)
    rbf = jnp.exp(-((sim[..., None] - params["mus"]) ** 2) / params["denom"])
    rbf = rbf * mask_d[:, :, None, :, None]
    LP = (Ld - POOL) // STRIDE + 1
    pooled = jnp.stack([rbf[..., w * STRIDE:w * STRIDE + POOL, :].sum(axis=-2)
                        for w in range(LP)], axis=-2)               # (B,NDOC,LQ,LP,K)
    logp = jnp.log(pooled + 1e-6)
    # MLP at default precision (same as the kernel's W1/w2 dots)
    h = jnp.maximum(logp @ params["W1"] + params["b1"], 0.0)
    sc = h @ params["w2"] + params["b2"]                            # (B,NDOC,LQ,LP)
    y = sc.max(axis=-1)                                             # (B,NDOC,LQ)
    y = y * mask_q[:, None, :]
    return y.sum(axis=-1)                                           # (B,NDOC)


# ---------------- deterministic parameter init ----------------
def init_params(key):
    ks = jax.random.split(key, 16)

    def nrm(k, shape, s=0.1):
        return jax.random.normal(k, shape, jnp.float32) * s

    return dict(
        embed=nrm(ks[0], (V, H), 0.5),
        W_qt=nrm(ks[1], (H, H)), b_qt=nrm(ks[2], (H,), 0.02),
        Wq=nrm(ks[3], (H, H)), bq=jnp.zeros((H,), jnp.float32),
        Wk=nrm(ks[4], (H, H)), bk=jnp.zeros((H,), jnp.float32),
        Wv=nrm(ks[5], (H, H)), bv=jnp.zeros((H,), jnp.float32),
        Wo=nrm(ks[6], (H, H)), bo=jnp.zeros((H,), jnp.float32),
        ln1_g=jnp.ones((H,), jnp.float32), ln1_b=jnp.zeros((H,), jnp.float32),
        Wf1=nrm(ks[7], (H, H)), bf1=jnp.zeros((H,), jnp.float32),
        Wf2=nrm(ks[8], (H, H)), bf2=jnp.zeros((H,), jnp.float32),
        ln2_g=jnp.ones((H,), jnp.float32), ln2_b=jnp.zeros((H,), jnp.float32),
        w_ctx=nrm(ks[9], (2,), 0.5), b_ctx=nrm(ks[10], (), 0.05),
        W1=nrm(ks[11], (K, H), 0.3), b1=nrm(ks[12], (H,), 0.05),
        w2=nrm(ks[13], (H,), 0.3), b2=nrm(ks[14], (), 0.05),
        mus=jnp.array([1.0 - 2.0 * i / K for i in range(K)], jnp.float32),
        denom=jnp.float32(2.0 * 0.1 ** 2),
    )


if __name__ == "__main__":
    key = jax.random.PRNGKey(0)
    kp, kq, kd = jax.random.split(key, 3)
    params = init_params(kp)
    consts = build_score_constants(params)   # one-time, params-keyed precompute (hoisted)

    q_ids = jax.random.randint(kq, (B, LQ), 0, V)
    d_ids = jax.random.randint(kd, (B, NDOC, LD), 0, V)
    q_lens = jnp.array([LQ, 5])
    d_lens = jnp.array([[LD, 10], [12, 7]])
    mask_q = (jnp.arange(LQ)[None, :] < q_lens[:, None]).astype(jnp.float32)
    mask_d = (jnp.arange(LD)[None, None, :]
              < d_lens[:, :, None]).astype(jnp.float32)

    y = jax.jit(ndrm1_forward)(params, consts, q_ids, d_ids, mask_q, mask_d)
    y = jax.block_until_ready(y)

    y_ref = ndrm1_reference(params, q_ids, d_ids, mask_q, mask_d)
    assert y.shape == (B, NDOC), y.shape
    assert jnp.allclose(y, y_ref, rtol=2e-3, atol=2e-3), (y, y_ref)
    print("KERNEL_OK")
</pallas_src>

<mosaic_0001>
module attributes {stable_mosaic.version = 11 : i64} {
  func.func @_score_kernel(%arg0: i32, %arg1: memref<2x8x32xf32, #tpu.memory_space<vmem>>, %arg2: memref<2x32x32xf32, #tpu.memory_space<vmem>>, %arg3: memref<64x1xf32, #tpu.memory_space<vmem>>, %arg4: memref<2x1x8xf32, #tpu.memory_space<vmem>>, %arg5: memref<32x32xf32, #tpu.memory_space<vmem>>, %arg6: memref<1x32xf32, #tpu.memory_space<vmem>>, %arg7: memref<32x64xf32, #tpu.memory_space<vmem>>, %arg8: memref<64x256xf32, #tpu.memory_space<vmem>>, %arg9: memref<1x256xf32, #tpu.memory_space<vmem>>, %arg10: memref<256x8xf32, #tpu.memory_space<vmem>>, %arg11: memref<32x1xf32, #tpu.memory_space<vmem>>, %arg12: memref<1x64xf32, #tpu.memory_space<vmem>>, %arg13: memref<2xf32, #tpu.memory_space<smem>>, %arg14: memref<2x2xf32, #tpu.memory_space<vmem>>) attributes {dimension_semantics = [#tpu.dimension_semantics<arbitrary>], iteration_bounds = array<i64: 1>, scalar_prefetch = 0 : i64, scratch_operands = 0 : i64, tpu.core_type = #tpu.core_type<tc>, window_params = [{pipeline_mode = #tpu.pipeline_mode<synchronous>, transform_indices = @transform_0, window_bounds = array<i64: 2, 8, 32>}, {pipeline_mode = #tpu.pipeline_mode<synchronous>, transform_indices = @transform_1, window_bounds = array<i64: 2, 32, 32>}, {pipeline_mode = #tpu.pipeline_mode<synchronous>, transform_indices = @transform_2, window_bounds = array<i64: 64, 1>}, {pipeline_mode = #tpu.pipeline_mode<synchronous>, transform_indices = @transform_3, window_bounds = array<i64: 2, 1, 8>}, {pipeline_mode = #tpu.pipeline_mode<synchronous>, transform_indices = @transform_4, window_bounds = array<i64: 32, 32>}, {pipeline_mode = #tpu.pipeline_mode<synchronous>, transform_indices = @transform_5, window_bounds = array<i64: 1, 32>}, {pipeline_mode = #tpu.pipeline_mode<synchronous>, transform_indices = @transform_6, window_bounds = array<i64: 32, 64>}, {pipeline_mode = #tpu.pipeline_mode<synchronous>, transform_indices = @transform_7, window_bounds = array<i64: 64, 256>}, {pipeline_mode = #tpu.pipeline_mode<synchronous>, transform_indices = @transform_8, window_bounds = array<i64: 1, 256>}, {pipeline_mode = #tpu.pipeline_mode<synchronous>, transform_indices = @transform_9, window_bounds = array<i64: 256, 8>}, {pipeline_mode = #tpu.pipeline_mode<synchronous>, transform_indices = @transform_10, window_bounds = array<i64: 32, 1>}, {pipeline_mode = #tpu.pipeline_mode<synchronous>, transform_indices = @transform_11, window_bounds = array<i64: 1, 64>}, {transform_indices = @transform_12, window_bounds = array<i64: 2>}, {pipeline_mode = #tpu.pipeline_mode<synchronous>, transform_indices = @transform_13, window_bounds = array<i64: 2, 2>}]} {
    %c0 = arith.constant 0 : index
    %0 = memref.load %arg13[%c0] : memref<2xf32, #tpu.memory_space<smem>>
    %c1 = arith.constant 1 : index
    %1 = memref.load %arg13[%c1] : memref<2xf32, #tpu.memory_space<smem>>
    %c0_0 = arith.constant 0 : index
    %c0_1 = arith.constant 0 : index
    %c0_2 = arith.constant 0 : index
    %2 = vector.load %arg1[%c0_0, %c0_1, %c0_2] : memref<2x8x32xf32, #tpu.memory_space<vmem>>, vector<2x8x32xf32>
    %c0_3 = arith.constant 0 : index
    %c0_4 = arith.constant 0 : index
    %3 = vector.load %arg5[%c0_3, %c0_4] : memref<32x32xf32, #tpu.memory_space<vmem>>, vector<32x32xf32>
    "tpu.trace_start"() <{level = 10 : i32, message = "blh,hm->blm"}> : () -> ()
    %cst = arith.constant dense<0.000000e+00> : vector<2x8x32xf32>
    %4 = tpu.matmul %2, %3, %cst {dimension_numbers = #tpu.dot_dimension_numbers<[2], [0], [0, 1], [1], [0, 0, 0, 1, 1, 1], [], []>, precision = #tpu.contract_precision<fp32>} : vector<2x8x32xf32>, vector<32x32xf32>, vector<2x8x32xf32> -> vector<2x8x32xf32>
    "tpu.trace_stop"() : () -> ()
    %c0_5 = arith.constant 0 : index
    %c0_6 = arith.constant 0 : index
    %5 = vector.load %arg6[%c0_5, %c0_6] : memref<1x32xf32, #tpu.memory_space<vmem>>, vector<1x32xf32>
    %6 = vector.shape_cast %5 : vector<1x32xf32> to vector<1x1x32xf32>
    %7 = vector.broadcast %6 : vector<1x1x32xf32> to vector<2x8x32xf32>
    %8 = arith.addf %4, %7 : vector<2x8x32xf32>
    %9 = arith.mulf %8, %8 : vector<2x8x32xf32>
    %cst_7 = arith.constant dense<0.000000e+00> : vector<2x8xf32>
    %10 = vector.multi_reduction <add>, %9, %cst_7 [2] : vector<2x8x32xf32> to vector<2x8xf32>
    %11 = vector.shape_cast %10 : vector<2x8xf32> to vector<2x8x1xf32>
    %cst_8 = arith.constant 1.000000e-16 : f32
    %12 = vector.broadcast %cst_8 : f32 to vector<2x8x1xf32>
    %13 = arith.maximumf %11, %12 : vector<2x8x1xf32>
    %14 = math.rsqrt %13 : vector<2x8x1xf32>
    %15 = vector.broadcast %14 : vector<2x8x1xf32> to vector<2x8x32xf32>
    %16 = arith.mulf %8, %15 : vector<2x8x32xf32>
    %c0_9 = arith.constant 0 : index
    %c0_10 = arith.constant 0 : index
    %c0_11 = arith.constant 0 : index
    %17 = vector.load %arg2[%c0_9, %c0_10, %c0_11] : memref<2x32x32xf32, #tpu.memory_space<vmem>>, vector<2x32x32xf32>
    %18 = arith.mulf %17, %17 : vector<2x32x32xf32>
    %cst_12 = arith.constant dense<0.000000e+00> : vector<2x32xf32>
    %19 = vector.multi_reduction <add>, %18, %cst_12 [2] : vector<2x32x32xf32> to vector<2x32xf32>
    %20 = vector.shape_cast %19 : vector<2x32xf32> to vector<2x32x1xf32>
    %cst_13 = arith.constant 1.000000e-16 : f32
    %21 = vector.broadcast %cst_13 : f32 to vector<2x32x1xf32>
    %22 = arith.maximumf %20, %21 : vector<2x32x1xf32>
    %23 = math.rsqrt %22 : vector<2x32x1xf32>
    %24 = vector.broadcast %23 : vector<2x32x1xf32> to vector<2x32x32xf32>
    %25 = arith.mulf %17, %24 : vector<2x32x32xf32>
    "tpu.trace_start"() <{level = 10 : i32, message = "bdh,bqh->bdq"}> : () -> ()
    %cst_14 = arith.constant dense<0.000000e+00> : vector<2x32x8xf32>
    %26 = tpu.matmul %25, %16, %cst_14 {dimension_numbers = #tpu.dot_dimension_numbers<[2], [2], [1], [1], [0, 0, 0, 1, 1, 1], [0], [0]>, precision = #tpu.contract_precision<fp32>} : vector<2x32x32xf32>, vector<2x8x32xf32>, vector<2x32x8xf32> -> vector<2x32x8xf32>
    "tpu.trace_stop"() : () -> ()
    %27 = vector.shape_cast %26 : vector<2x32x8xf32> to vector<2x32x1x8xf32>
    %28 = vector.shape_cast %27 : vector<2x32x1x8xf32> to vector<2x32x1x8xf32>
    %29 = vector.broadcast %28 : vector<2x32x1x8xf32> to vector<2x32x8x8xf32>
    %30 = vector.shape_cast %29 : vector<2x32x8x8xf32> to vector<64x64xf32>
    %c0_15 = arith.constant 0 : index
    %c0_16 = arith.constant 0 : index
    %31 = vector.load %arg12[%c0_15, %c0_16] : memref<1x64xf32, #tpu.memory_space<vmem>>, vector<1x64xf32>
    %32 = vector.broadcast %31 : vector<1x64xf32> to vector<64x64xf32>
    %33 = arith.subf %30, %32 : vector<64x64xf32>
    %34 = arith.mulf %33, %33 : vector<64x64xf32>
    %cst_17 = arith.constant 0.000000e+00 : f32
    %35 = vector.broadcast %cst_17 : f32 to vector<64x64xf32>
    %36 = arith.subf %35, %34 : vector<64x64xf32>
    %37 = vector.broadcast %0 : f32 to vector<64x64xf32>
    %38 = arith.mulf %36, %37 : vector<64x64xf32>
    %39 = math.exp %38 : vector<64x64xf32>
    %c0_18 = arith.constant 0 : index
    %c0_19 = arith.constant 0 : index
    %40 = vector.load %arg3[%c0_18, %c0_19] : memref<64x1xf32, #tpu.memory_space<vmem>>, vector<64x1xf32>
    %41 = vector.broadcast %40 : vector<64x1xf32> to vector<64x64xf32>
    %42 = arith.mulf %39, %41 : vector<64x64xf32>
    %c0_20 = arith.constant 0 : index
    %c0_21 = arith.constant 0 : index
    %43 = vector.load %arg7[%c0_20, %c0_21] : memref<32x64xf32, #tpu.memory_space<vmem>>, vector<32x64xf32>
    %cst_22 = arith.constant dense<0.000000e+00> : vector<32x64xf32>
    %44 = tpu.matmul %43, %42, %cst_22 {dimension_numbers = #tpu.dot_dimension_numbers<[1], [0], [0], [1], [0, 0, 1, 1], [], []>, precision = #tpu.contract_precision<fp32>} : vector<32x64xf32>, vector<64x64xf32>, vector<32x64xf32> -> vector<32x64xf32>
    %cst_23 = arith.constant 9.99999997E-7 : f32
    %45 = vector.broadcast %cst_23 : f32 to vector<32x64xf32>
    %46 = arith.addf %44, %45 : vector<32x64xf32>
    %47 = math.log %46 : vector<32x64xf32>
    %c0_24 = arith.constant 0 : index
    %c0_25 = arith.constant 0 : index
    %48 = vector.load %arg8[%c0_24, %c0_25] : memref<64x256xf32, #tpu.memory_space<vmem>>, vector<64x256xf32>
    %cst_26 = arith.constant dense<0.000000e+00> : vector<32x256xf32>
    %49 = tpu.matmul %47, %48, %cst_26 {dimension_numbers = #tpu.dot_dimension_numbers<[1], [0], [0], [1], [0, 0, 1, 1], [], []>} : vector<32x64xf32>, vector<64x256xf32>, vector<32x256xf32> -> vector<32x256xf32>
    %c0_27 = arith.constant 0 : index
    %c0_28 = arith.constant 0 : index
    %50 = vector.load %arg9[%c0_27, %c0_28] : memref<1x256xf32, #tpu.memory_space<vmem>>, vector<1x256xf32>
    %51 = vector.broadcast %50 : vector<1x256xf32> to vector<32x256xf32>
    %52 = arith.addf %49, %51 : vector<32x256xf32>
    %cst_29 = arith.constant 0.000000e+00 : f32
    %53 = vector.broadcast %cst_29 : f32 to vector<32x256xf32>
    %54 = arith.maximumf %52, %53 : vector<32x256xf32>
    %c0_30 = arith.constant 0 : index
    %c0_31 = arith.constant 0 : index
    %55 = vector.load %arg10[%c0_30, %c0_31] : memref<256x8xf32, #tpu.memory_space<vmem>>, vector<256x8xf32>
    %cst_32 = arith.constant dense<0.000000e+00> : vector<32x8xf32>
    %56 = tpu.matmul %54, %55, %cst_32 {dimension_numbers = #tpu.dot_dimension_numbers<[1], [0], [0], [1], [0, 0, 1, 1], [], []>} : vector<32x256xf32>, vector<256x8xf32>, vector<32x8xf32> -> vector<32x8xf32>
    %57 = vector.broadcast %1 : f32 to vector<32x8xf32>
    %58 = arith.addf %56, %57 : vector<32x8xf32>
    %c0_33 = arith.constant 0 : index
    %c0_34 = arith.constant 0 : index
    %59 = vector.load %arg11[%c0_33, %c0_34] : memref<32x1xf32, #tpu.memory_space<vmem>>, vector<32x1xf32>
    %60 = vector.broadcast %59 : vector<32x1xf32> to vector<32x8xf32>
    %61 = arith.addf %58, %60 : vector<32x8xf32>
    %62 = vector.shape_cast %61 : vector<32x8xf32> to vector<2x2x8x8xf32>
    %cst_35 = arith.constant dense<0xFF800000> : vector<2x2x8xf32>
    %63 = vector.multi_reduction <maximumf>, %62, %cst_35 [2] : vector<2x2x8x8xf32> to vector<2x2x8xf32>
    %c0_36 = arith.constant 0 : index
    %c0_37 = arith.constant 0 : index
    %c0_38 = arith.constant 0 : index
    %64 = vector.load %arg4[%c0_36, %c0_37, %c0_38] : memref<2x1x8xf32, #tpu.memory_space<vmem>>, vector<2x1x8xf32>
    %65 = vector.broadcast %64 : vector<2x1x8xf32> to vector<2x2x8xf32>
    %66 = arith.mulf %63, %65 : vector<2x2x8xf32>
    %cst_39 = arith.constant dense<0.000000e+00> : vector<2x2xf32>
    %67 = vector.multi_reduction <add>, %66, %cst_39 [2] : vector<2x2x8xf32> to vector<2x2xf32>
    %c0_40 = arith.constant 0 : index
    %c0_41 = arith.constant 0 : index
    %68 = vector.load %arg14[%c0_40, %c0_41] : memref<2x2xf32, #tpu.memory_space<vmem>>, vector<2x2xf32>
    tpu.vector_store %arg14[%c0_40, %c0_41], %67 {strides = array<i32>} : memref<2x2xf32, #tpu.memory_space<vmem>>, vector<2x2xf32>,
    return
  }
  func.func @transform_0(%arg0: i32) -> (i32, i32, i32) {
    %c0_i32 = arith.constant 0 : i32
    %c0_i32_0 = arith.constant 0 : i32
    %c0_i32_1 = arith.constant 0 : i32
    %c0_i32_2 = arith.constant 0 : i32
    return %c0_i32, %c0_i32_0, %c0_i32_1 : i32, i32, i32
  }
  func.func @transform_1(%arg0: i32) -> (i32, i32, i32) {
    %c0_i32 = arith.constant 0 : i32
    %c0_i32_0 = arith.constant 0 : i32
    %c0_i32_1 = arith.constant 0 : i32
    %c0_i32_2 = arith.constant 0 : i32
    return %c0_i32, %c0_i32_0, %c0_i32_1 : i32, i32, i32
  }
  func.func @transform_2(%arg0: i32) -> (i32, i32) {
    %c0_i32 = arith.constant 0 : i32
    %c0_i32_0 = arith.constant 0 : i32
    %c0_i32_1 = arith.constant 0 : i32
    return %c0_i32, %c0_i32_0 : i32, i32
  }
  func.func @transform_3(%arg0: i32) -> (i32, i32, i32) {
    %c0_i32 = arith.constant 0 : i32
    %c0_i32_0 = arith.constant 0 : i32
    %c0_i32_1 = arith.constant 0 : i32
    %c0_i32_2 = arith.constant 0 : i32
    return %c0_i32, %c0_i32_0, %c0_i32_1 : i32, i32, i32
  }
  func.func @transform_4(%arg0: i32) -> (i32, i32) {
    %c0_i32 = arith.constant 0 : i32
    %c0_i32_0 = arith.constant 0 : i32
    %c0_i32_1 = arith.constant 0 : i32
    return %c0_i32, %c0_i32_0 : i32, i32
  }
  func.func @transform_5(%arg0: i32) -> (i32, i32) {
    %c0_i32 = arith.constant 0 : i32
    %c0_i32_0 = arith.constant 0 : i32
    %c0_i32_1 = arith.constant 0 : i32
    return %c0_i32, %c0_i32_0 : i32, i32
  }
  func.func @transform_6(%arg0: i32) -> (i32, i32) {
    %c0_i32 = arith.constant 0 : i32
    %c0_i32_0 = arith.constant 0 : i32
    %c0_i32_1 = arith.constant 0 : i32
    return %c0_i32, %c0_i32_0 : i32, i32
  }
  func.func @transform_7(%arg0: i32) -> (i32, i32) {
    %c0_i32 = arith.constant 0 : i32
    %c0_i32_0 = arith.constant 0 : i32
    %c0_i32_1 = arith.constant 0 : i32
    return %c0_i32, %c0_i32_0 : i32, i32
  }
  func.func @transform_8(%arg0: i32) -> (i32, i32) {
    %c0_i32 = arith.constant 0 : i32
    %c0_i32_0 = arith.constant 0 : i32
    %c0_i32_1 = arith.constant 0 : i32
    return %c0_i32, %c0_i32_0 : i32, i32
  }
  func.func @transform_9(%arg0: i32) -> (i32, i32) {
    %c0_i32 = arith.constant 0 : i32
    %c0_i32_0 = arith.constant 0 : i32
    %c0_i32_1 = arith.constant 0 : i32
    return %c0_i32, %c0_i32_0 : i32, i32
  }
  func.func @transform_10(%arg0: i32) -> (i32, i32) {
    %c0_i32 = arith.constant 0 : i32
    %c0_i32_0 = arith.constant 0 : i32
    %c0_i32_1 = arith.constant 0 : i32
    return %c0_i32, %c0_i32_0 : i32, i32
  }
  func.func @transform_11(%arg0: i32) -> (i32, i32) {
    %c0_i32 = arith.constant 0 : i32
    %c0_i32_0 = arith.constant 0 : i32
    %c0_i32_1 = arith.constant 0 : i32
    return %c0_i32, %c0_i32_0 : i32, i32
  }
  func.func @transform_12(%arg0: i32) -> i32 {
    %c0_i32 = arith.constant 0 : i32
    %c0_i32_0 = arith.constant 0 : i32
    return %c0_i32 : i32
  }
  func.func @transform_13(%arg0: i32) -> (i32, i32) {
    %c0_i32 = arith.constant 0 : i32
    %c0_i32_0 = arith.constant 0 : i32
    %c0_i32_1 = arith.constant 0 : i32
    return %c0_i32, %c0_i32_0 : i32, i32
  }
}

</mosaic_0001>

<llo_original>
// kernel: ndrm1_forward.1
$region0: #{ndrm1_forward.1}
  #allocation0 [shape = 'u32[]', space=smem, size = 0x4, offset = 0x4, fixed_abs, tag = 'smem constant byte address 0x4 - core index']
  #allocation1 [shape = 'u32[144,128]{1,0:T(1,128)}', space=vmem, size = 0x12000, scoped, tag = 'internal scratch']
  %s0 = inlined_call_operand.vmem [shape: f32[2,8,32], index: 0, kind: input, shape index: {}]
  %s1 = inlined_call_operand.vmem [shape: f32[2,32,32], index: 1, kind: input, shape index: {}]
  %s2 = inlined_call_operand.vmem [shape: f32[64,1], index: 2, kind: input, shape index: {}]
  %s3 = inlined_call_operand.vmem [shape: f32[2,1,8], index: 3, kind: input, shape index: {}]
  %s4 = inlined_call_operand.vmem [shape: f32[32,32], index: 4, kind: input, shape index: {}]
  %s5 = inlined_call_operand.vmem [shape: f32[1,32], index: 5, kind: input, shape index: {}]
  %s6 = inlined_call_operand.vmem [shape: f32[32,64], index: 6, kind: input, shape index: {}]
  %s7 = inlined_call_operand.vmem [shape: f32[64,256], index: 7, kind: input, shape index: {}]
  %s8 = inlined_call_operand.vmem [shape: f32[1,256], index: 8, kind: input, shape index: {}]
  %s9 = inlined_call_operand.vmem [shape: f32[256,8], index: 9, kind: input, shape index: {}]
  %s10 = inlined_call_operand.vmem [shape: f32[32,1], index: 10, kind: input, shape index: {}]
  %s11 = inlined_call_operand.vmem [shape: f32[1,64], index: 11, kind: input, shape index: {}]
  %s12 = inlined_call_operand.vmem [shape: f32[2], index: 12, kind: input, shape index: {}]
  %s13 = inlined_call_operand.hbm [shape: f32[2,2], index: 13, kind: output, shape index: {}]
  %s14 = sld [smem:[#allocation0]]
  $region66: #{ndrm1_forward.1} parent=0
    _
  %s16 = ssub.s32 1, %s14
  %s17 = scalar_select 0, %s16, %s14
  $region1: #{ndrm1_forward.1} parent=0
    #allocation2 [shape = 'u8[512]{0}', space=smem, size = 0x200, scoped, tag = 'input window, operand 12, single buffered']
    #allocation3 [shape = 's32[1]{0}', space=sflag, size = 0x4, scoped, tag = 'scoped memory for ndrm1_forward.1']
    #allocation4 [shape = 's32[1]{0}', space=sflag, size = 0x4, scoped, tag = 'scoped memory for ndrm1_forward.1']
    #allocation5 [shape = 'u8[1024]{0}', space=vmem, size = 0x400, scoped, tag = 'output window, operand 0, single buffered']
    %18 = vsyncpa [#allocation4], 0
    %19 = vsyncpa [#allocation3], 0
    // Predicated region
    $region2: #{ndrm1_forward.1} parent=1 // pred_check
      _
    $region3: #{ndrm1_forward.1} parent=1 // pred_check_branch
      %21 = sbr.rel (0) target = $region5
    $region4: #{ndrm1_forward.1} parent=1 // pred_region
      _
    $region5: #{ndrm1_forward.1} parent=1 // pred_fallthru
      _
    // Predicated region
    $region6: #{ndrm1_forward.1} parent=1 // pred_check
      _
    $region7: #{ndrm1_forward.1} parent=1 // pred_check_branch
      %23 = sbr.rel (0) target = $region9
    $region8: #{ndrm1_forward.1} parent=1 // pred_region
      _
    $region9: #{ndrm1_forward.1} parent=1 // pred_fallthru
      _
    // Predicated region
    $region10: #{ndrm1_forward.1} parent=1 // pred_check
      _
    $region11: #{ndrm1_forward.1} parent=1 // pred_check_branch
      %25 = sbr.rel (0) target = $region13
    $region12: #{ndrm1_forward.1} parent=1 // pred_region
      _
    $region13: #{ndrm1_forward.1} parent=1 // pred_fallthru
      _
    // Predicated region
    $region14: #{ndrm1_forward.1} parent=1 // pred_check
      _
    $region15: #{ndrm1_forward.1} parent=1 // pred_check_branch
      %27 = sbr.rel (0) target = $region17
    $region16: #{ndrm1_forward.1} parent=1 // pred_region
      _
    $region17: #{ndrm1_forward.1} parent=1 // pred_fallthru
      _
    // Predicated region
    $region18: #{ndrm1_forward.1} parent=1 // pred_check
      _
    $region19: #{ndrm1_forward.1} parent=1 // pred_check_branch
      %29 = sbr.rel (0) target = $region21
    $region20: #{ndrm1_forward.1} parent=1 // pred_region
      _
    $region21: #{ndrm1_forward.1} parent=1 // pred_fallthru
      _
    // Predicated region
    $region22: #{ndrm1_forward.1} parent=1 // pred_check
      _
    $region23: #{ndrm1_forward.1} parent=1 // pred_check_branch
      %31 = sbr.rel (0) target = $region25
    $region24: #{ndrm1_forward.1} parent=1 // pred_region
      _
    $region25: #{ndrm1_forward.1} parent=1 // pred_fallthru
      _
    // Predicated region
    $region26: #{ndrm1_forward.1} parent=1 // pred_check
      _
    $region27: #{ndrm1_forward.1} parent=1 // pred_check_branch
      %33 = sbr.rel (0) target = $region29
    $region28: #{ndrm1_forward.1} parent=1 // pred_region
      _
    $region29: #{ndrm1_forward.1} parent=1 // pred_fallthru
      _
    // Predicated region
    $region30: #{ndrm1_forward.1} parent=1 // pred_check
      _
    $region31: #{ndrm1_forward.1} parent=1 // pred_check_branch
      %35 = sbr.rel (0) target = $region33
    $region32: #{ndrm1_forward.1} parent=1 // pred_region
      _
    $region33: #{ndrm1_forward.1} parent=1 // pred_fallthru
      _
    // Predicated region
    $region34: #{ndrm1_forward.1} parent=1 // pred_check
      _
    $region35: #{ndrm1_forward.1} parent=1 // pred_check_branch
      %37 = sbr.rel (0) target = $region37
    $region36: #{ndrm1_forward.1} parent=1 // pred_region
      _
    $region37: #{ndrm1_forward.1} parent=1 // pred_fallthru
      _
    // Predicated region
    $region38: #{ndrm1_forward.1} parent=1 // pred_check
      _
    $region39: #{ndrm1_forward.1} parent=1 // pred_check_branch
      %39 = sbr.rel (0) target = $region41
    $region40: #{ndrm1_forward.1} parent=1 // pred_region
      _
    $region41: #{ndrm1_forward.1} parent=1 // pred_fallthru
      _
    // Predicated region
    $region42: #{ndrm1_forward.1} parent=1 // pred_check
      _
    $region43: #{ndrm1_forward.1} parent=1 // pred_check_branch
      %41 = sbr.rel (0) target = $region45
    $region44: #{ndrm1_forward.1} parent=1 // pred_region
      _
    $region45: #{ndrm1_forward.1} parent=1 // pred_fallthru
      _
    // Predicated region
    $region46: #{ndrm1_forward.1} parent=1 // pred_check
      _
    $region47: #{ndrm1_forward.1} parent=1 // pred_check_branch
      %43 = sbr.rel (0) target = $region49
    $region48: #{ndrm1_forward.1} parent=1 // pred_region
      _
    $region49: #{ndrm1_forward.1} parent=1 // pred_fallthru
      _
    // Predicated region
    $region50: #{ndrm1_forward.1} parent=1 // pred_check
      _
    $region51: #{ndrm1_forward.1} parent=1 // pred_check_branch
      %45 = sbr.rel (0) target = $region53
    $region52: #{ndrm1_forward.1} parent=1 // pred_region
      %s47 = ssub.s32 16, 16
      %48 = vsyncadd [#allocation4], %s47
      %s50 = sshll.u32 %s12, 4
      %s51 = int_to_ptr.vmem [resolvable:$true] %s50
      %53 = dma.vmem_to_smem %s51, 16, [#allocation2], [#allocation4]
    $region53: #{ndrm1_forward.1} parent=1 // pred_fallthru
      _
    // Predicated region
    $region54: #{ndrm1_forward.1} parent=1 // pred_check
      _
    $region55: #{ndrm1_forward.1} parent=1 // pred_check_branch
      %55 = sbr.rel (0) target = $region57
    $region56: #{ndrm1_forward.1} parent=1 // pred_region
      %56 = dma.done [#allocation4], 16
    $region57: #{ndrm1_forward.1} parent=1 // pred_fallthru
      _
    %57 = sfence
    %s58 = sld [smem:[#allocation2]]
    %s59 = sld [smem:[#allocation2 + $0x1]]
    %v60 = vld [vmem:[%s0] sm:$0xff]
    %v61 = vld [vmem:[%s0 + $0x8] sm:$0xff]
    %v62 = vld [vmem:[%s4] sm:$0xff]
    %v63 = vld [vmem:[%s4 + $0x8] sm:$0xff]
    %v64 = vld [vmem:[%s4 + $0x10] sm:$0xff]
    %v65 = vld [vmem:[%s4 + $0x18] sm:$0xff]
    %v66 = vld [vmem:[%s5] sm:$0x1]
    %v68 = vlaneseq
    %v69 = vshrl.u32 %v68, 7
    %v70 = vsub.s32 0, %v69
    %v71 = vrot.slane %v66, %v70
    %vm73 = vcmask 261120
    %v75 = vsel %vm73, %v60, 0
    %v78 = vsel %vm73, %v61, 0
    %80 = vmatprep.subr.mxu0 0.0
    %v81 = vand.u32 %v62, 4294901760
    %82 = vmatpush1.msra.mxu0 %v81
    %83 = vmatprep.subr.mxu0 0.0
    %v84 = vand.u32 %v63, 4294901760
    %85 = vmatpush1.msra.mxu0 %v84
    %86 = vmatprep.subr.mxu0 0.0
    %v87 = vand.u32 %v64, 4294901760
    %88 = vmatpush1.msra.mxu0 %v87
    %89 = vmatprep.subr.mxu0 0.0
    %v90 = vand.u32 %v65, 4294901760
    %91 = vmatpush1.msra.mxu0 %v90
    %92 = vmatprep.subr.mxu0 0.0
    %93 = vmatpush1.msra.mxu0 0.0
    %94 = vmatprep.subr.mxu0 0.0
    %95 = vmatpush1.msra.mxu0 0.0
    %96 = vmatprep.subr.mxu0 0.0
    %97 = vmatpush1.msra.mxu0 0.0
    %98 = vmatprep.subr.mxu0 0.0
    %99 = vmatpush1.msra.mxu0 0.0
    %100 = vmatprep.subr.mxu0 0.0
    %101 = vmatpush1.msra.mxu0 0.0
    %102 = vmatprep.subr.mxu0 0.0
    %103 = vmatpush1.msra.mxu0 0.0
    %104 = vmatprep.subr.mxu0 0.0
    %105 = vmatpush1.msra.mxu0 0.0
    %106 = vmatprep.subr.mxu0 0.0
    %107 = vmatpush1.msra.mxu0 0.0
    %108 = vmatprep.subr.mxu0 0.0
    %109 = vmatpush1.msra.mxu0 0.0
    %110 = vmatprep.subr.mxu0 0.0
    %111 = vmatpush1.msra.mxu0 0.0
    %112 = vmatprep.subr.mxu0 0.0
    %113 = vmatpush1.msra.mxu0 0.0
    %114 = vmatprep.subr.mxu0 0.0
    %115 = vmatpush1.msra.mxu0 0.0
    %116 = vmatprep.subr.mxu0 0.0
    %117 = vmatpush1.msra.mxu0 0.0
    %118 = vmatprep.subr.mxu0 0.0
    %119 = vmatpush1.msra.mxu0 0.0
    %120 = vmatprep.subr.mxu0 0.0
    %121 = vmatpush1.msra.mxu0 0.0
    %122 = vmatprep.subr.mxu0 0.0
    %123 = vmatpush1.msra.mxu0 0.0
    %124 = vmatprep.subr.mxu0 0.0
    %125 = vmatpush1.msra.mxu0 0.0
    %126 = vmatprep.subr.mxu0 0.0
    %127 = vmatpush1.msra.mxu0 0.0
    %128 = vmatprep.subr.mxu0 0.0
    %129 = vmatpush1.msra.mxu0 0.0
    %130 = vmatprep.subr.mxu0 0.0
    %131 = vmatpush1.msra.mxu0 0.0
    %132 = vmatprep.subr.mxu0 0.0
    %133 = vmatpush1.msra.mxu0 0.0
    %134 = vmatprep.subr.mxu0 0.0
    %135 = vmatpush1.msra.mxu0 0.0
    %136 = vmatprep.subr.mxu0 0.0
    %137 = vmatpush1.msra.mxu0 0.0
    %138 = vmatprep.subr.mxu0 0.0
    %139 = vmatpush1.msra.mxu0 0.0
    %140 = vmatprep.subr.mxu0 0.0
    %141 = vmatpush1.msra.mxu0 0.0
    %142 = vmatprep.subr.mxu0 0.0
    %143 = vmatpush1.msra.mxu0 0.0
    %144 = vmatprep.subr.mxu0 0.0
    %145 = vmatpush1.msra.mxu0 0.0
    %146 = vmatprep.subr.mxu0 0.0
    %147 = vmatpush1.msra.mxu0 0.0
    %148 = vmatprep.mubr.f32.mxu0 0.0
    %v149 = vand.u32 %v75, 4294901760
    %v150 = vsub.f32 %v75, %v149
    %v151 = vand.u32 %v150, 4294901760
    %v152 = vsub.f32 %v150, %v151
    %v153 = vand.u32 %v152, 4294901760
    %154 = vmatmul.mubr.f32.gmra.mrb[0].mxu0 %v153
    %v155 = vpop.f32.mrb[0].mxu0
    %v156 = vadd.f32 %v71, %v155
    %v157 = vpop.f32.mrb[0].mxu0
    %158 = vmatprep.mubr.f32.mxu0 0.0
    %v159 = vand.u32 %v78, 4294901760
    %v160 = vsub.f32 %v78, %v159
    %v161 = vand.u32 %v160, 4294901760
    %v162 = vsub.f32 %v160, %v161
    %v163 = vand.u32 %v162, 4294901760
    %164 = vmatmul.mubr.f32.gmra.mrb[0].mxu0 %v163
    %v165 = vpop.f32.mrb[0].mxu0
    %v166 = vadd.f32 %v71, %v165
    %v167 = vpop.f32.mrb[0].mxu0
    %168 = vdwg.mxu0
    %169 = vmatprep.subr.mxu0 0.0
    %v170 = vand.u32 %v62, 4294901760
    %v171 = vsub.f32 %v62, %v170
    %v172 = vand.u32 %v171, 4294901760
    %v173 = vsub.f32 %v171, %v172
    %v174 = vand.u32 %v173, 4294901760
    %175 = vmatpush1.msra.mxu0 %v174
    %176 = vmatprep.subr.mxu0 0.0
    %v177 = vand.u32 %v63, 4294901760
    %v178 = vsub.f32 %v63, %v177
    %v179 = vand.u32 %v178, 4294901760
    %v180 = vsub.f32 %v178, %v179
    %v181 = vand.u32 %v180, 4294901760
    %182 = vmatpush1.msra.mxu0 %v181
    %183 = vmatprep.subr.mxu0 0.0
    %v184 = vand.u32 %v64, 4294901760
    %v185 = vsub.f32 %v64, %v184
    %v186 = vand.u32 %v185, 4294901760
    %v187 = vsub.f32 %v185, %v186
    %v188 = vand.u32 %v187, 4294901760
    %189 = vmatpush1.msra.mxu0 %v188
    %190 = vmatprep.subr.mxu0 0.0
    %v191 = vand.u32 %v65, 4294901760
    %v192 = vsub.f32 %v65, %v191
    %v193 = vand.u32 %v192, 4294901760
    %v194 = vsub.f32 %v192, %v193
    %v195 = vand.u32 %v194, 4294901760
    %196 = vmatpush1.msra.mxu0 %v195
    %197 = vmatprep.subr.mxu0 0.0
    %198 = vmatpush1.msra.mxu0 0.0
    %199 = vmatprep.subr.mxu0 0.0
    %200 = vmatpush1.msra.mxu0 0.0
    %201 = vmatprep.subr.mxu0 0.0
    %202 = vmatpush1.msra.mxu0 0.0
    %203 = vmatprep.subr.mxu0 0.0
    %204 = vmatpush1.msra.mxu0 0.0
    %205 = vmatprep.subr.mxu0 0.0
    %206 = vmatpush1.msra.mxu0 0.0
    %207 = vmatprep.subr.mxu0 0.0
    %208 = vmatpush1.msra.mxu0 0.0
    %209 = vmatprep.subr.mxu0 0.0
    %210 = vmatpush1.msra.mxu0 0.0
    %211 = vmatprep.subr.mxu0 0.0
    %212 = vmatpush1.msra.mxu0 0.0
    %213 = vmatprep.subr.mxu0 0.0
    %214 = vmatpush1.msra.mxu0 0.0
    %215 = vmatprep.subr.mxu0 0.0
    %216 = vmatpush1.msra.mxu0 0.0
    %217 = vmatprep.subr.mxu0 0.0
    %218 = vmatpush1.msra.mxu0 0.0
    %219 = vmatprep.subr.mxu0 0.0
    %220 = vmatpush1.msra.mxu0 0.0
    %221 = vmatprep.subr.mxu0 0.0
    %222 = vmatpush1.msra.mxu0 0.0
    %223 = vmatprep.subr.mxu0 0.0
    %224 = vmatpush1.msra.mxu0 0.0
    %225 = vmatprep.subr.mxu0 0.0
    %226 = vmatpush1.msra.mxu0 0.0
    %227 = vmatprep.subr.mxu0 0.0
    %228 = vmatpush1.msra.mxu0 0.0
    %229 = vmatprep.subr.mxu0 0.0
    %230 = vmatpush1.msra.mxu0 0.0
    %231 = vmatprep.subr.mxu0 0.0
    %232 = vmatpush1.msra.mxu0 0.0
    %233 = vmatprep.subr.mxu0 0.0
    %234 = vmatpush1.msra.mxu0 0.0
    %235 = vmatprep.subr.mxu0 0.0
    %236 = vmatpush1.msra.mxu0 0.0
    %237 = vmatprep.subr.mxu0 0.0
    %238 = vmatpush1.msra.mxu0 0.0
    %239 = vmatprep.subr.mxu0 0.0
    %240 = vmatpush1.msra.mxu0 0.0
    %241 = vmatprep.subr.mxu0 0.0
    %242 = vmatpush1.msra.mxu0 0.0
    %243 = vmatprep.subr.mxu0 0.0
    %244 = vmatpush1.msra.mxu0 0.0
    %245 = vmatprep.subr.mxu0 0.0
    %246 = vmatpush1.msra.mxu0 0.0
    %247 = vmatprep.subr.mxu0 0.0
    %248 = vmatpush1.msra.mxu0 0.0
    %249 = vmatprep.subr.mxu0 0.0
    %250 = vmatpush1.msra.mxu0 0.0
    %251 = vmatprep.subr.mxu0 0.0
    %252 = vmatpush1.msra.mxu0 0.0
    %253 = vmatprep.mubr.f32.mxu0 0.0
    %v254 = vand.u32 %v75, 4294901760
    %255 = vmatmul.mubr.f32.gmra.mrb[0].mxu0 %v254
    %v256 = vpop.f32.mrb[0].mxu0
    %v257 = vadd.f32 %v156, %v256
    %v258 = vpop.f32.mrb[0].mxu0
    %259 = vmatprep.mubr.f32.mxu0 0.0
    %v260 = vand.u32 %v78, 4294901760
    %261 = vmatmul.mubr.f32.gmra.mrb[0].mxu0 %v260
    %v262 = vpop.f32.mrb[0].mxu0
    %v263 = vadd.f32 %v166, %v262
    %v264 = vpop.f32.mrb[0].mxu0
    %265 = vdwg.mxu0
    %266 = vmatprep.subr.mxu0 0.0
    %v267 = vand.u32 %v62, 4294901760
    %v268 = vsub.f32 %v62, %v267
    %269 = vmatpush1.msra.mxu0 %v268
    %270 = vmatprep.subr.mxu0 0.0
    %v271 = vand.u32 %v63, 4294901760
    %v272 = vsub.f32 %v63, %v271
    %273 = vmatpush1.msra.mxu0 %v272
    %274 = vmatprep.subr.mxu0 0.0
    %v275 = vand.u32 %v64, 4294901760
    %v276 = vsub.f32 %v64, %v275
    %277 = vmatpush1.msra.mxu0 %v276
    %278 = vmatprep.subr.mxu0 0.0
    %v279 = vand.u32 %v65, 4294901760
    %v280 = vsub.f32 %v65, %v279
    %281 = vmatpush1.msra.mxu0 %v280
    %282 = vmatprep.subr.mxu0 0.0
    %283 = vmatpush1.msra.mxu0 0.0
    %284 = vmatprep.subr.mxu0 0.0
    %285 = vmatpush1.msra.mxu0 0.0
    %286 = vmatprep.subr.mxu0 0.0
    %287 = vmatpush1.msra.mxu0 0.0
    %288 = vmatprep.subr.mxu0 0.0
    %289 = vmatpush1.msra.mxu0 0.0
    %290 = vmatprep.subr.mxu0 0.0
    %291 = vmatpush1.msra.mxu0 0.0
    %292 = vmatprep.subr.mxu0 0.0
    %293 = vmatpush1.msra.mxu0 0.0
    %294 = vmatprep.subr.mxu0 0.0
    %295 = vmatpush1.msra.mxu0 0.0
    %296 = vmatprep.subr.mxu0 0.0
    %297 = vmatpush1.msra.mxu0 0.0
    %298 = vmatprep.subr.mxu0 0.0
    %299 = vmatpush1.msra.mxu0 0.0
    %300 = vmatprep.subr.mxu0 0.0
    %301 = vmatpush1.msra.mxu0 0.0
    %302 = vmatprep.subr.mxu0 0.0
    %303 = vmatpush1.msra.mxu0 0.0
    %304 = vmatprep.subr.mxu0 0.0
    %305 = vmatpush1.msra.mxu0 0.0
    %306 = vmatprep.subr.mxu0 0.0
    %307 = vmatpush1.msra.mxu0 0.0
    %308 = vmatprep.subr.mxu0 0.0
    %309 = vmatpush1.msra.mxu0 0.0
    %310 = vmatprep.subr.mxu0 0.0
    %311 = vmatpush1.msra.mxu0 0.0
    %312 = vmatprep.subr.mxu0 0.0
    %313 = vmatpush1.msra.mxu0 0.0
    %314 = vmatprep.subr.mxu0 0.0
    %315 = vmatpush1.msra.mxu0 0.0
    %316 = vmatprep.subr.mxu0 0.0
    %317 = vmatpush1.msra.mxu0 0.0
    %318 = vmatprep.subr.mxu0 0.0
    %319 = vmatpush1.msra.mxu0 0.0
    %320 = vmatprep.subr.mxu0 0.0
    %321 = vmatpush1.msra.mxu0 0.0
    %322 = vmatprep.subr.mxu0 0.0
    %323 = vmatpush1.msra.mxu0 0.0
    %324 = vmatprep.subr.mxu0 0.0
    %325 = vmatpush1.msra.mxu0 0.0
    %326 = vmatprep.subr.mxu0 0.0
    %327 = vmatpush1.msra.mxu0 0.0
    %328 = vmatprep.subr.mxu0 0.0
    %329 = vmatpush1.msra.mxu0 0.0
    %330 = vmatprep.subr.mxu0 0.0
    %331 = vmatpush1.msra.mxu0 0.0
    %332 = vmatprep.subr.mxu0 0.0
    %333 = vmatpush1.msra.mxu0 0.0
    %334 = vmatprep.subr.mxu0 0.0
    %335 = vmatpush1.msra.mxu0 0.0
    %336 = vmatprep.subr.mxu0 0.0
    %337 = vmatpush1.msra.mxu0 0.0
    %338 = vmatprep.mubr.f32.mxu0 0.0
    %v339 = vand.u32 %v75, 4294901760
    %v340 = vsub.f32 %v75, %v339
    %341 = vmatmul.mubr.f32.gmra.mrb[0].mxu0 %v340
    %v342 = vpop.f32.mrb[0].mxu0
    %v343 = vadd.f32 %v257, %v342
    %v344 = vpop.f32.mrb[0].mxu0
    %345 = vmatprep.mubr.f32.mxu0 0.0
    %v346 = vand.u32 %v78, 4294901760
    %v347 = vsub.f32 %v78, %v346
    %348 = vmatmul.mubr.f32.gmra.mrb[0].mxu0 %v347
    %v349 = vpop.f32.mrb[0].mxu0
    %v350 = vadd.f32 %v263, %v349
    %v351 = vpop.f32.mrb[0].mxu0
    %352 = vdwg.mxu0
    %353 = vmatprep.subr.mxu0 0.0
    %v354 = vand.u32 %v62, 4294901760
    %355 = vmatpush1.msra.mxu0 %v354
    %356 = vmatprep.subr.mxu0 0.0
    %v357 = vand.u32 %v63, 4294901760
    %358 = vmatpush1.msra.mxu0 %v357
    %359 = vmatprep.subr.mxu0 0.0
    %v360 = vand.u32 %v64, 4294901760
    %361 = vmatpush1.msra.mxu0 %v360
    %362 = vmatprep.subr.mxu0 0.0
    %v363 = vand.u32 %v65, 4294901760
    %364 = vmatpush1.msra.mxu0 %v363
    %365 = vmatprep.subr.mxu0 0.0
    %366 = vmatpush1.msra.mxu0 0.0
    %367 = vmatprep.subr.mxu0 0.0
    %368 = vmatpush1.msra.mxu0 0.0
    %369 = vmatprep.subr.mxu0 0.0
    %370 = vmatpush1.msra.mxu0 0.0
    %371 = vmatprep.subr.mxu0 0.0
    %372 = vmatpush1.msra.mxu0 0.0
    %373 = vmatprep.subr.mxu0 0.0
    %374 = vmatpush1.msra.mxu0 0.0
    %375 = vmatprep.subr.mxu0 0.0
    %376 = vmatpush1.msra.mxu0 0.0
    %377 = vmatprep.subr.mxu0 0.0
    %378 = vmatpush1.msra.mxu0 0.0
    %379 = vmatprep.subr.mxu0 0.0
    %380 = vmatpush1.msra.mxu0 0.0
    %381 = vmatprep.subr.mxu0 0.0
    %382 = vmatpush1.msra.mxu0 0.0
    %383 = vmatprep.subr.mxu0 0.0
    %384 = vmatpush1.msra.mxu0 0.0
    %385 = vmatprep.subr.mxu0 0.0
    %386 = vmatpush1.msra.mxu0 0.0
    %387 = vmatprep.subr.mxu0 0.0
    %388 = vmatpush1.msra.mxu0 0.0
    %389 = vmatprep.subr.mxu0 0.0
    %390 = vmatpush1.msra.mxu0 0.0
    %391 = vmatprep.subr.mxu0 0.0
    %392 = vmatpush1.msra.mxu0 0.0
    %393 = vmatprep.subr.mxu0 0.0
    %394 = vmatpush1.msra.mxu0 0.0
    %395 = vmatprep.subr.mxu0 0.0
    %396 = vmatpush1.msra.mxu0 0.0
    %397 = vmatprep.subr.mxu0 0.0
    %398 = vmatpush1.msra.mxu0 0.0
    %399 = vmatprep.subr.mxu0 0.0
    %400 = vmatpush1.msra.mxu0 0.0
    %401 = vmatprep.subr.mxu0 0.0
    %402 = vmatpush1.msra.mxu0 0.0
    %403 = vmatprep.subr.mxu0 0.0
    %404 = vmatpush1.msra.mxu0 0.0
    %405 = vmatprep.subr.mxu0 0.0
    %406 = vmatpush1.msra.mxu0 0.0
    %407 = vmatprep.subr.mxu0 0.0
    %408 = vmatpush1.msra.mxu0 0.0
    %409 = vmatprep.subr.mxu0 0.0
    %410 = vmatpush1.msra.mxu0 0.0
    %411 = vmatprep.subr.mxu0 0.0
    %412 = vmatpush1.msra.mxu0 0.0
    %413 = vmatprep.subr.mxu0 0.0
    %414 = vmatpush1.msra.mxu0 0.0
    %415 = vmatprep.subr.mxu0 0.0
    %416 = vmatpush1.msra.mxu0 0.0
    %417 = vmatprep.subr.mxu0 0.0
    %418 = vmatpush1.msra.mxu0 0.0
    %419 = vmatprep.subr.mxu0 0.0
    %420 = vmatpush1.msra.mxu0 0.0
    %421 = vmatprep.mubr.f32.mxu0 0.0
    %v422 = vand.u32 %v75, 4294901760
    %v423 = vsub.f32 %v75, %v422
    %v424 = vand.u32 %v423, 4294901760
    %425 = vmatmul.mubr.f32.gmra.mrb[0].mxu0 %v424
    %v426 = vpop.f32.mrb[0].mxu0
    %v427 = vadd.f32 %v343, %v426
    %v428 = vpop.f32.mrb[0].mxu0
    %429 = vmatprep.mubr.f32.mxu0 0.0
    %v430 = vand.u32 %v78, 4294901760
    %v431 = vsub.f32 %v78, %v430
    %v432 = vand.u32 %v431, 4294901760
    %433 = vmatmul.mubr.f32.gmra.mrb[0].mxu0 %v432
    %v434 = vpop.f32.mrb[0].mxu0
    %v435 = vadd.f32 %v350, %v434
    %v436 = vpop.f32.mrb[0].mxu0
    %437 = vdwg.mxu0
    %438 = vmatprep.subr.mxu0 0.0
    %v439 = vand.u32 %v62, 4294901760
    %v440 = vsub.f32 %v62, %v439
    %v441 = vand.u32 %v440, 4294901760
    %442 = vmatpush1.msra.mxu0 %v441
    %443 = vmatprep.subr.mxu0 0.0
    %v444 = vand.u32 %v63, 4294901760
    %v445 = vsub.f32 %v63, %v444
    %v446 = vand.u32 %v445, 4294901760
    %447 = vmatpush1.msra.mxu0 %v446
    %448 = vmatprep.subr.mxu0 0.0
    %v449 = vand.u32 %v64, 4294901760
    %v450 = vsub.f32 %v64, %v449
    %v451 = vand.u32 %v450, 4294901760
    %452 = vmatpush1.msra.mxu0 %v451
    %453 = vmatprep.subr.mxu0 0.0
    %v454 = vand.u32 %v65, 4294901760
    %v455 = vsub.f32 %v65, %v454
    %v456 = vand.u32 %v455, 4294901760
    %457 = vmatpush1.msra.mxu0 %v456
    %458 = vmatprep.subr.mxu0 0.0
    %459 = vmatpush1.msra.mxu0 0.0
    %460 = vmatprep.subr.mxu0 0.0
    %461 = vmatpush1.msra.mxu0 0.0
    %462 = vmatprep.subr.mxu0 0.0
    %463 = vmatpush1.msra.mxu0 0.0
    %464 = vmatprep.subr.mxu0 0.0
    %465 = vmatpush1.msra.mxu0 0.0
    %466 = vmatprep.subr.mxu0 0.0
    %467 = vmatpush1.msra.mxu0 0.0
    %468 = vmatprep.subr.mxu0 0.0
    %469 = vmatpush1.msra.mxu0 0.0
    %470 = vmatprep.subr.mxu0 0.0
    %471 = vmatpush1.msra.mxu0 0.0
    %472 = vmatprep.subr.mxu0 0.0
    %473 = vmatpush1.msra.mxu0 0.0
    %474 = vmatprep.subr.mxu0 0.0
    %475 = vmatpush1.msra.mxu0 0.0
    %476 = vmatprep.subr.mxu0 0.0
    %477 = vmatpush1.msra.mxu0 0.0
    %478 = vmatprep.subr.mxu0 0.0
    %479 = vmatpush1.msra.mxu0 0.0
    %480 = vmatprep.subr.mxu0 0.0
    %481 = vmatpush1.msra.mxu0 0.0
    %482 = vmatprep.subr.mxu0 0.0
    %483 = vmatpush1.msra.mxu0 0.0
    %484 = vmatprep.subr.mxu0 0.0
    %485 = vmatpush1.msra.mxu0 0.0
    %486 = vmatprep.subr.mxu0 0.0
    %487 = vmatpush1.msra.mxu0 0.0
    %488 = vmatprep.subr.mxu0 0.0
    %489 = vmatpush1.msra.mxu0 0.0
    %490 = vmatprep.subr.mxu0 0.0
    %491 = vmatpush1.msra.mxu0 0.0
    %492 = vmatprep.subr.mxu0 0.0
    %493 = vmatpush1.msra.mxu0 0.0
    %494 = vmatprep.subr.mxu0 0.0
    %495 = vmatpush1.msra.mxu0 0.0
    %496 = vmatprep.subr.mxu0 0.0
    %497 = vmatpush1.msra.mxu0 0.0
    %498 = vmatprep.subr.mxu0 0.0
    %499 = vmatpush1.msra.mxu0 0.0
    %500 = vmatprep.subr.mxu0 0.0
    %501 = vmatpush1.msra.mxu0 0.0
    %502 = vmatprep.subr.mxu0 0.0
    %503 = vmatpush1.msra.mxu0 0.0
    %504 = vmatprep.subr.mxu0 0.0
    %505 = vmatpush1.msra.mxu0 0.0
    %506 = vmatprep.subr.mxu0 0.0
    %507 = vmatpush1.msra.mxu0 0.0
    %508 = vmatprep.subr.mxu0 0.0
    %509 = vmatpush1.msra.mxu0 0.0
    %510 = vmatprep.subr.mxu0 0.0
    %511 = vmatpush1.msra.mxu0 0.0
    %512 = vmatprep.subr.mxu0 0.0
    %513 = vmatpush1.msra.mxu0 0.0
    %514 = vmatprep.mubr.f32.mxu0 0.0
    %v515 = vand.u32 %v75, 4294901760
    %516 = vmatmul.mubr.f32.gmra.mrb[0].mxu0 %v515
    %v517 = vpop.f32.mrb[0].mxu0
    %v518 = vadd.f32 %v427, %v517
    %v519 = vpop.f32.mrb[0].mxu0
    %520 = vmatprep.mubr.f32.mxu0 0.0
    %v521 = vand.u32 %v78, 4294901760
    %522 = vmatmul.mubr.f32.gmra.mrb[0].mxu0 %v521
    %v523 = vpop.f32.mrb[0].mxu0
    %v524 = vadd.f32 %v435, %v523
    %v525 = vpop.f32.mrb[0].mxu0
    %526 = vdwg.mxu0
    %527 = vmatprep.subr.mxu0 0.0
    %v528 = vand.u32 %v62, 4294901760
    %529 = vmatpush1.msra.mxu0 %v528
    %530 = vmatprep.subr.mxu0 0.0
    %v531 = vand.u32 %v63, 4294901760
    %532 = vmatpush1.msra.mxu0 %v531
    %533 = vmatprep.subr.mxu0 0.0
    %v534 = vand.u32 %v64, 4294901760
    %535 = vmatpush1.msra.mxu0 %v534
    %536 = vmatprep.subr.mxu0 0.0
    %v537 = vand.u32 %v65, 4294901760
    %538 = vmatpush1.msra.mxu0 %v537
    %539 = vmatprep.subr.mxu0 0.0
    %540 = vmatpush1.msra.mxu0 0.0
    %541 = vmatprep.subr.mxu0 0.0
    %542 = vmatpush1.msra.mxu0 0.0
    %543 = vmatprep.subr.mxu0 0.0
    %544 = vmatpush1.msra.mxu0 0.0
    %545 = vmatprep.subr.mxu0 0.0
    %546 = vmatpush1.msra.mxu0 0.0
    %547 = vmatprep.subr.mxu0 0.0
    %548 = vmatpush1.msra.mxu0 0.0
    %549 = vmatprep.subr.mxu0 0.0
    %550 = vmatpush1.msra.mxu0 0.0
    %551 = vmatprep.subr.mxu0 0.0
    %552 = vmatpush1.msra.mxu0 0.0
    %553 = vmatprep.subr.mxu0 0.0
    %554 = vmatpush1.msra.mxu0 0.0
    %555 = vmatprep.subr.mxu0 0.0
    %556 = vmatpush1.msra.mxu0 0.0
    %557 = vmatprep.subr.mxu0 0.0
    %558 = vmatpush1.msra.mxu0 0.0
    %559 = vmatprep.subr.mxu0 0.0
    %560 = vmatpush1.msra.mxu0 0.0
    %561 = vmatprep.subr.mxu0 0.0
    %562 = vmatpush1.msra.mxu0 0.0
    %563 = vmatprep.subr.mxu0 0.0
    %564 = vmatpush1.msra.mxu0 0.0
    %565 = vmatprep.subr.mxu0 0.0
    %566 = vmatpush1.msra.mxu0 0.0
    %567 = vmatprep.subr.mxu0 0.0
    %568 = vmatpush1.msra.mxu0 0.0
    %569 = vmatprep.subr.mxu0 0.0
    %570 = vmatpush1.msra.mxu0 0.0
    %571 = vmatprep.subr.mxu0 0.0
    %572 = vmatpush1.msra.mxu0 0.0
    %573 = vmatprep.subr.mxu0 0.0
    %574 = vmatpush1.msra.mxu0 0.0
    %575 = vmatprep.subr.mxu0 0.0
    %576 = vmatpush1.msra.mxu0 0.0
    %577 = vmatprep.subr.mxu0 0.0
    %578 = vmatpush1.msra.mxu0 0.0
    %579 = vmatprep.subr.mxu0 0.0
    %580 = vmatpush1.msra.mxu0 0.0
    %581 = vmatprep.subr.mxu0 0.0
    %582 = vmatpush1.msra.mxu0 0.0
    %583 = vmatprep.subr.mxu0 0.0
    %584 = vmatpush1.msra.mxu0 0.0
    %585 = vmatprep.subr.mxu0 0.0
    %586 = vmatpush1.msra.mxu0 0.0
    %587 = vmatprep.subr.mxu0 0.0
    %588 = vmatpush1.msra.mxu0 0.0
    %589 = vmatprep.subr.mxu0 0.0
    %590 = vmatpush1.msra.mxu0 0.0
    %591 = vmatprep.subr.mxu0 0.0
    %592 = vmatpush1.msra.mxu0 0.0
    %593 = vmatprep.subr.mxu0 0.0
    %594 = vmatpush1.msra.mxu0 0.0
    %595 = vmatprep.mubr.f32.mxu0 0.0
    %v596 = vand.u32 %v75, 4294901760
    %597 = vmatmul.mubr.f32.gmra.mrb[0].mxu0 %v596
    %v598 = vpop.f32.mrb[0].mxu0
    %v599 = vadd.f32 %v518, %v598
    %v600 = vpop.f32.mrb[0].mxu0
    %601 = vmatprep.mubr.f32.mxu0 0.0
    %v602 = vand.u32 %v78, 4294901760
    %603 = vmatmul.mubr.f32.gmra.mrb[0].mxu0 %v602
    %v604 = vpop.f32.mrb[0].mxu0
    %v605 = vadd.f32 %v524, %v604
    %v606 = vpop.f32.mrb[0].mxu0
    %607 = vdwg.mxu0
    %v608 = vmul.f32 %v599, %v599
    %v609 = vmul.f32 %v605, %v605
    %v610 = vsel %vm73, %v608, 0.0
    %611 = vadd.xlane.f32.xlu0 %v610
    %v612 = vpop.xlane.xlu0 %611
    %v613 = vsel %vm73, %v609, 0.0
    %614 = vadd.xlane.f32.xlu0 %v613
    %v615 = vpop.xlane.xlu0 %614
    %v616 = vmax.f32 %v612, 1e-16
    %v617 = vmax.f32 %v615, 1e-16
    %v618 = vrsqrt.pop %v616
    %v619 = vrsqrt.pop %v617
    %v620 = vmul.f32 %v599, %v618
    %v621 = vmul.f32 %v605, %v619
    %v622 = vld [vmem:[%s1] sm:$0xff]
    %v623 = vld [vmem:[%s1 + $0x8] sm:$0xff]
    %v624 = vld [vmem:[%s1 + $0x10] sm:$0xff]
    %v625 = vld [vmem:[%s1 + $0x18] sm:$0xff]
    %v626 = vld [vmem:[%s1 + $0x20] sm:$0xff]
    %v627 = vld [vmem:[%s1 + $0x28] sm:$0xff]
    %v628 = vld [vmem:[%s1 + $0x30] sm:$0xff]
    %v629 = vld [vmem:[%s1 + $0x38] sm:$0xff]
    %v630 = vmul.f32 %v622, %v622
    %v631 = vmul.f32 %v623, %v623
    %v632 = vmul.f32 %v624, %v624
    %v633 = vmul.f32 %v625, %v625
    %v634 = vmul.f32 %v626, %v626
    %v635 = vmul.f32 %v627, %v627
    %v636 = vmul.f32 %v628, %v628
    %v637 = vmul.f32 %v629, %v629
    %v638 = vsel %vm73, %v630, 0.0
    %639 = vadd.xlane.f32.xlu0 %v638
    %v640 = vpop.xlane.xlu0 %639
    %v641 = vsel %vm73, %v631, 0.0
    %642 = vadd.xlane.f32.xlu0 %v641
    %v643 = vpop.xlane.xlu0 %642
    %v644 = vsel %vm73, %v632, 0.0
    %645 = vadd.xlane.f32.xlu0 %v644
    %v646 = vpop.xlane.xlu0 %645
    %v647 = vsel %vm73, %v633, 0.0
    %648 = vadd.xlane.f32.xlu0 %v647
    %v649 = vpop.xlane.xlu0 %648
    %v650 = vsel %vm73, %v634, 0.0
    %651 = vadd.xlane.f32.xlu0 %v650
    %v652 = vpop.xlane.xlu0 %651
    %v653 = vsel %vm73, %v635, 0.0
    %654 = vadd.xlane.f32.xlu0 %v653
    %v655 = vpop.xlane.xlu0 %654
    %v656 = vsel %vm73, %v636, 0.0
    %657 = vadd.xlane.f32.xlu0 %v656
    %v658 = vpop.xlane.xlu0 %657
    %v659 = vsel %vm73, %v637, 0.0
    %660 = vadd.xlane.f32.xlu0 %v659
    %v661 = vpop.xlane.xlu0 %660
    %v662 = vmax.f32 %v640, 1e-16
    %v663 = vmax.f32 %v643, 1e-16
    %v664 = vmax.f32 %v646, 1e-16
    %v665 = vmax.f32 %v649, 1e-16
    %v666 = vmax.f32 %v652, 1e-16
    %v667 = vmax.f32 %v655, 1e-16
    %v668 = vmax.f32 %v658, 1e-16
    %v669 = vmax.f32 %v661, 1e-16
    %v670 = vrsqrt.pop %v662
    %v671 = vrsqrt.pop %v663
    %v672 = vrsqrt.pop %v664
    %v673 = vrsqrt.pop %v665
    %v674 = vrsqrt.pop %v666
    %v675 = vrsqrt.pop %v667
    %v676 = vrsqrt.pop %v668
    %v677 = vrsqrt.pop %v669
    %v678 = vmul.f32 %v622, %v670
    %v679 = vmul.f32 %v623, %v671
    %v680 = vmul.f32 %v624, %v672
    %v681 = vmul.f32 %v625, %v673
    %v682 = vmul.f32 %v626, %v674
    %v683 = vmul.f32 %v627, %v675
    %v684 = vmul.f32 %v628, %v676
    %v685 = vmul.f32 %v629, %v677
    %v687 = vsel %vm73, %v678, 0
    %v690 = vsel %vm73, %v679, 0
    %v693 = vsel %vm73, %v680, 0
    %v696 = vsel %vm73, %v681, 0
    %v699 = vsel %vm73, %v620, 0
    %701 = vmatprep.subr.mxu0 0.0
    %v702 = vand.u32 %v699, 4294901760
    %703 = vmatpush1.xpose.msra.mxu0 %v702
    %704 = vmatprep.subr.mxu0 0.0
    %705 = vmatpush1.xpose.msra.mxu0 0.0
    %706 = vmatprep.subr.mxu0 0.0
    %707 = vmatpush1.xpose.msra.mxu0 0.0
    %708 = vmatprep.subr.mxu0 0.0
    %709 = vmatpush1.xpose.msra.mxu0 0.0
    %710 = vmatprep.subr.mxu0 0.0
    %711 = vmatpush1.xpose.msra.mxu0 0.0
    %712 = vmatprep.subr.mxu0 0.0
    %713 = vmatpush1.xpose.msra.mxu0 0.0
    %714 = vmatprep.subr.mxu0 0.0
    %715 = vmatpush1.xpose.msra.mxu0 0.0
    %716 = vmatprep.subr.mxu0 0.0
    %717 = vmatpush1.xpose.msra.mxu0 0.0
    %718 = vmatprep.subr.mxu0 0.0
    %719 = vmatpush1.xpose.msra.mxu0 0.0
    %720 = vmatprep.subr.mxu0 0.0
    %721 = vmatpush1.xpose.msra.mxu0 0.0
    %722 = vmatprep.subr.mxu0 0.0
    %723 = vmatpush1.xpose.msra.mxu0 0.0
    %724 = vmatprep.subr.mxu0 0.0
    %725 = vmatpush1.xpose.msra.mxu0 0.0
    %726 = vmatprep.subr.mxu0 0.0
    %727 = vmatpush1.xpose.msra.mxu0 0.0
    %728 = vmatprep.subr.mxu0 0.0
    %729 = vmatpush1.xpose.msra.mxu0 0.0
    %730 = vmatprep.subr.mxu0 0.0
    %731 = vmatpush1.xpose.msra.mxu0 0.0
    %732 = vmatprep.subr.mxu0 0.0
    %733 = vmatpush1.xpose.msra.mxu0 0.0
    %734 = vmatprep.subr.mxu0 0.0
    %735 = vmatpush1.xpose.msra.mxu0 0.0
    %736 = vmatprep.subr.mxu0 0.0
    %737 = vmatpush1.xpose.msra.mxu0 0.0
    %738 = vmatprep.subr.mxu0 0.0
    %739 = vmatpush1.xpose.msra.mxu0 0.0
    %740 = vmatprep.subr.mxu0 0.0
    %741 = vmatpush1.xpose.msra.mxu0 0.0
    %742 = vmatprep.subr.mxu0 0.0
    %743 = vmatpush1.xpose.msra.mxu0 0.0
    %744 = vmatprep.subr.mxu0 0.0
    %745 = vmatpush1.xpose.msra.mxu0 0.0
    %746 = vmatprep.subr.mxu0 0.0
    %747 = vmatpush1.xpose.msra.mxu0 0.0
    %748 = vmatprep.subr.mxu0 0.0
    %749 = vmatpush1.xpose.msra.mxu0 0.0
    %750 = vmatprep.subr.mxu0 0.0
    %751 = vmatpush1.xpose.msra.mxu0 0.0
    %752 = vmatprep.subr.mxu0 0.0
    %753 = vmatpush1.xpose.msra.mxu0 0.0
    %754 = vmatprep.subr.mxu0 0.0
    %755 = vmatpush1.xpose.msra.mxu0 0.0
    %756 = vmatprep.subr.mxu0 0.0
    %757 = vmatpush1.xpose.msra.mxu0 0.0
    %758 = vmatprep.subr.mxu0 0.0
    %759 = vmatpush1.xpose.msra.mxu0 0.0
    %760 = vmatprep.subr.mxu0 0.0
    %761 = vmatpush1.xpose.msra.mxu0 0.0
    %762 = vmatprep.subr.mxu0 0.0
    %763 = vmatpush1.xpose.msra.mxu0 0.0
    %764 = vmatprep.subr.mxu0 0.0
    %765 = vmatpush1.xpose.msra.mxu0 0.0
    %766 = vmatprep.mubr.f32.mxu0 0.0
    %v767 = vand.u32 %v687, 4294901760
    %v768 = vsub.f32 %v687, %v767
    %v769 = vand.u32 %v768, 4294901760
    %v770 = vsub.f32 %v768, %v769
    %v771 = vand.u32 %v770, 4294901760
    %772 = vmatmul.mubr.f32.gmra.mrb[0].mxu0 %v771
    %v773 = vpop.f32.mrb[0].mxu0
    %v774 = vadd.f32 0.0, %v773
    %v775 = vpop.f32.mrb[0].mxu0
    %776 = vmatprep.mubr.f32.mxu0 0.0
    %v777 = vand.u32 %v690, 4294901760
    %v778 = vsub.f32 %v690, %v777
    %v779 = vand.u32 %v778, 4294901760
    %v780 = vsub.f32 %v778, %v779
    %v781 = vand.u32 %v780, 4294901760
    %782 = vmatmul.mubr.f32.gmra.mrb[0].mxu0 %v781
    %v783 = vpop.f32.mrb[0].mxu0
    %v784 = vadd.f32 0.0, %v783
    %v785 = vpop.f32.mrb[0].mxu0
    %786 = vmatprep.mubr.f32.mxu0 0.0
    %v787 = vand.u32 %v693, 4294901760
    %v788 = vsub.f32 %v693, %v787
    %v789 = vand.u32 %v788, 4294901760
    %v790 = vsub.f32 %v788, %v789
    %v791 = vand.u32 %v790, 4294901760
    %792 = vmatmul.mubr.f32.gmra.mrb[0].mxu0 %v791
    %v793 = vpop.f32.mrb[0].mxu0
    %v794 = vadd.f32 0.0, %v793
    %v795 = vpop.f32.mrb[0].mxu0
    %796 = vmatprep.mubr.f32.mxu0 0.0
    %v797 = vand.u32 %v696, 4294901760
    %v798 = vsub.f32 %v696, %v797
    %v799 = vand.u32 %v798, 4294901760
    %v800 = vsub.f32 %v798, %v799
    %v801 = vand.u32 %v800, 4294901760
    %802 = vmatmul.mubr.f32.gmra.mrb[0].mxu0 %v801
    %v803 = vpop.f32.mrb[0].mxu0
    %v804 = vadd.f32 0.0, %v803
    %v805 = vpop.f32.mrb[0].mxu0
    %806 = vdwg.mxu0
    %807 = vmatprep.subr.mxu0 0.0
    %v808 = vand.u32 %v699, 4294901760
    %v809 = vsub.f32 %v699, %v808
    %v810 = vand.u32 %v809, 4294901760
    %v811 = vsub.f32 %v809, %v810
    %v812 = vand.u32 %v811, 4294901760
    %813 = vmatpush1.xpose.msra.mxu0 %v812
    %814 = vmatprep.subr.mxu0 0.0
    %815 = vmatpush1.xpose.msra.mxu0 0.0
    %816 = vmatprep.subr.mxu0 0.0
    %817 = vmatpush1.xpose.msra.mxu0 0.0
    %818 = vmatprep.subr.mxu0 0.0
    %819 = vmatpush1.xpose.msra.mxu0 0.0
    %820 = vmatprep.subr.mxu0 0.0
    %821 = vmatpush1.xpose.msra.mxu0 0.0
    %822 = vmatprep.subr.mxu0 0.0
    %823 = vmatpush1.xpose.msra.mxu0 0.0
    %824 = vmatprep.subr.mxu0 0.0
    %825 = vmatpush1.xpose.msra.mxu0 0.0
    %826 = vmatprep.subr.mxu0 0.0
    %827 = vmatpush1.xpose.msra.mxu0 0.0
    %828 = vmatprep.subr.mxu0 0.0
    %829 = vmatpush1.xpose.msra.mxu0 0.0
    %830 = vmatprep.subr.mxu0 0.0
    %831 = vmatpush1.xpose.msra.mxu0 0.0
    %832 = vmatprep.subr.mxu0 0.0
    %833 = vmatpush1.xpose.msra.mxu0 0.0
    %834 = vmatprep.subr.mxu0 0.0
    %835 = vmatpush1.xpose.msra.mxu0 0.0
    %836 = vmatprep.subr.mxu0 0.0
    %837 = vmatpush1.xpose.msra.mxu0 0.0
    %838 = vmatprep.subr.mxu0 0.0
    %839 = vmatpush1.xpose.msra.mxu0 0.0
    %840 = vmatprep.subr.mxu0 0.0
    %841 = vmatpush1.xpose.msra.mxu0 0.0
    %842 = vmatprep.subr.mxu0 0.0
    %843 = vmatpush1.xpose.msra.mxu0 0.0
    %844 = vmatprep.subr.mxu0 0.0
    %845 = vmatpush1.xpose.msra.mxu0 0.0
    %846 = vmatprep.subr.mxu0 0.0
    %847 = vmatpush1.xpose.msra.mxu0 0.0
    %848 = vmatprep.subr.mxu0 0.0
    %849 = vmatpush1.xpose.msra.mxu0 0.0
    %850 = vmatprep.subr.mxu0 0.0
    %851 = vmatpush1.xpose.msra.mxu0 0.0
    %852 = vmatprep.subr.mxu0 0.0
    %853 = vmatpush1.xpose.msra.mxu0 0.0
    %854 = vmatprep.subr.mxu0 0.0
    %855 = vmatpush1.xpose.msra.mxu0 0.0
    %856 = vmatprep.subr.mxu0 0.0
    %857 = vmatpush1.xpose.msra.mxu0 0.0
    %858 = vmatprep.subr.mxu0 0.0
    %859 = vmatpush1.xpose.msra.mxu0 0.0
    %860 = vmatprep.subr.mxu0 0.0
    %861 = vmatpush1.xpose.msra.mxu0 0.0
    %862 = vmatprep.subr.mxu0 0.0
    %863 = vmatpush1.xpose.msra.mxu0 0.0
    %864 = vmatprep.subr.mxu0 0.0
    %865 = vmatpush1.xpose.msra.mxu0 0.0
    %866 = vmatprep.subr.mxu0 0.0
    %867 = vmatpush1.xpose.msra.mxu0 0.0
    %868 = vmatprep.subr.mxu0 0.0
    %869 = vmatpush1.xpose.msra.mxu0 0.0
    %870 = vmatprep.subr.mxu0 0.0
    %871 = vmatpush1.xpose.msra.mxu0 0.0
    %872 = vmatprep.subr.mxu0 0.0
    %873 = vmatpush1.xpose.msra.mxu0 0.0
    %874 = vmatprep.subr.mxu0 0.0
    %875 = vmatpush1.xpose.msra.mxu0 0.0
    %876 = vmatprep.mubr.f32.mxu0 0.0
    %v877 = vand.u32 %v687, 4294901760
    %878 = vmatmul.mubr.f32.gmra.mrb[0].mxu0 %v877
    %v879 = vpop.f32.mrb[0].mxu0
    %v880 = vadd.f32 %v774, %v879
    %v881 = vpop.f32.mrb[0].mxu0
    %882 = vmatprep.mubr.f32.mxu0 0.0
    %v883 = vand.u32 %v690, 4294901760
    %884 = vmatmul.mubr.f32.gmra.mrb[0].mxu0 %v883
    %v885 = vpop.f32.mrb[0].mxu0
    %v886 = vadd.f32 %v784, %v885
    %v887 = vpop.f32.mrb[0].mxu0
    %888 = vmatprep.mubr.f32.mxu0 0.0
    %v889 = vand.u32 %v693, 4294901760
    %890 = vmatmul.mubr.f32.gmra.mrb[0].mxu0 %v889
    %v891 = vpop.f32.mrb[0].mxu0
    %v892 = vadd.f32 %v794, %v891
    %v893 = vpop.f32.mrb[0].mxu0
    %894 = vmatprep.mubr.f32.mxu0 0.0
    %v895 = vand.u32 %v696, 4294901760
    %896 = vmatmul.mubr.f32.gmra.mrb[0].mxu0 %v895
    %v897 = vpop.f32.mrb[0].mxu0
    %v898 = vadd.f32 %v804, %v897
    %v899 = vpop.f32.mrb[0].mxu0
    %900 = vdwg.mxu0
    %901 = vmatprep.subr.mxu0 0.0
    %v902 = vand.u32 %v699, 4294901760
    %v903 = vsub.f32 %v699, %v902
    %904 = vmatpush1.xpose.msra.mxu0 %v903
    %905 = vmatprep.subr.mxu0 0.0
    %906 = vmatpush1.xpose.msra.mxu0 0.0
    %907 = vmatprep.subr.mxu0 0.0
    %908 = vmatpush1.xpose.msra.mxu0 0.0
    %909 = vmatprep.subr.mxu0 0.0
    %910 = vmatpush1.xpose.msra.mxu0 0.0
    %911 = vmatprep.subr.mxu0 0.0
    %912 = vmatpush1.xpose.msra.mxu0 0.0
    %913 = vmatprep.subr.mxu0 0.0
    %914 = vmatpush1.xpose.msra.mxu0 0.0
    %915 = vmatprep.subr.mxu0 0.0
    %916 = vmatpush1.xpose.msra.mxu0 0.0
    %917 = vmatprep.subr.mxu0 0.0
    %918 = vmatpush1.xpose.msra.mxu0 0.0
    %919 = vmatprep.subr.mxu0 0.0
    %920 = vmatpush1.xpose.msra.mxu0 0.0
    %921 = vmatprep.subr.mxu0 0.0
    %922 = vmatpush1.xpose.msra.mxu0 0.0
    %923 = vmatprep.subr.mxu0 0.0
    %924 = vmatpush1.xpose.msra.mxu0 0.0
    %925 = vmatprep.subr.mxu0 0.0
    %926 = vmatpush1.xpose.msra.mxu0 0.0
    %927 = vmatprep.subr.mxu0 0.0
    %928 = vmatpush1.xpose.msra.mxu0 0.0
    %929 = vmatprep.subr.mxu0 0.0
    %930 = vmatpush1.xpose.msra.mxu0 0.0
    %931 = vmatprep.subr.mxu0 0.0
    %932 = vmatpush1.xpose.msra.mxu0 0.0
    %933 = vmatprep.subr.mxu0 0.0
    %934 = vmatpush1.xpose.msra.mxu0 0.0
    %935 = vmatprep.subr.mxu0 0.0
    %936 = vmatpush1.xpose.msra.mxu0 0.0
    %937 = vmatprep.subr.mxu0 0.0
    %938 = vmatpush1.xpose.msra.mxu0 0.0
    %939 = vmatprep.subr.mxu0 0.0
    %940 = vmatpush1.xpose.msra.mxu0 0.0
    %941 = vmatprep.subr.mxu0 0.0
    %942 = vmatpush1.xpose.msra.mxu0 0.0
    %943 = vmatprep.subr.mxu0 0.0
    %944 = vmatpush1.xpose.msra.mxu0 0.0
    %945 = vmatprep.subr.mxu0 0.0
    %946 = vmatpush1.xpose.msra.mxu0 0.0
    %947 = vmatprep.subr.mxu0 0.0
    %948 = vmatpush1.xpose.msra.mxu0 0.0
    %949 = vmatprep.subr.mxu0 0.0
    %950 = vmatpush1.xpose.msra.mxu0 0.0
    %951 = vmatprep.subr.mxu0 0.0
    %952 = vmatpush1.xpose.msra.mxu0 0.0
    %953 = vmatprep.subr.mxu0 0.0
    %954 = vmatpush1.xpose.msra.mxu0 0.0
    %955 = vmatprep.subr.mxu0 0.0
    %956 = vmatpush1.xpose.msra.mxu0 0.0
    %957 = vmatprep.subr.mxu0 0.0
    %958 = vmatpush1.xpose.msra.mxu0 0.0
    %959 = vmatprep.subr.mxu0 0.0
    %960 = vmatpush1.xpose.msra.mxu0 0.0
    %961 = vmatprep.subr.mxu0 0.0
    %962 = vmatpush1.xpose.msra.mxu0 0.0
    %963 = vmatprep.subr.mxu0 0.0
    %964 = vmatpush1.xpose.msra.mxu0 0.0
    %965 = vmatprep.subr.mxu0 0.0
    %966 = vmatpush1.xpose.msra.mxu0 0.0
    %967 = vmatprep.mubr.f32.mxu0 0.0
    %v968 = vand.u32 %v687, 4294901760
    %v969 = vsub.f32 %v687, %v968
    %970 = vmatmul.mubr.f32.gmra.mrb[0].mxu0 %v969
    %v971 = vpop.f32.mrb[0].mxu0
    %v972 = vadd.f32 %v880, %v971
    %v973 = vpop.f32.mrb[0].mxu0
    %974 = vmatprep.mubr.f32.mxu0 0.0
    %v975 = vand.u32 %v690, 4294901760
    %v976 = vsub.f32 %v690, %v975
    %977 = vmatmul.mubr.f32.gmra.mrb[0].mxu0 %v976
    %v978 = vpop.f32.mrb[0].mxu0
    %v979 = vadd.f32 %v886, %v978
    %v980 = vpop.f32.mrb[0].mxu0
    %981 = vmatprep.mubr.f32.mxu0 0.0
    %v982 = vand.u32 %v693, 4294901760
    %v983 = vsub.f32 %v693, %v982
    %984 = vmatmul.mubr.f32.gmra.mrb[0].mxu0 %v983
    %v985 = vpop.f32.mrb[0].mxu0
    %v986 = vadd.f32 %v892, %v985
    %v987 = vpop.f32.mrb[0].mxu0
    %988 = vmatprep.mubr.f32.mxu0 0.0
    %v989 = vand.u32 %v696, 4294901760
    %v990 = vsub.f32 %v696, %v989
    %991 = vmatmul.mubr.f32.gmra.mrb[0].mxu0 %v990
    %v992 = vpop.f32.mrb[0].mxu0
    %v993 = vadd.f32 %v898, %v992
    %v994 = vpop.f32.mrb[0].mxu0
    %995 = vdwg.mxu0
    %996 = vmatprep.subr.mxu0 0.0
    %v997 = vand.u32 %v699, 4294901760
    %998 = vmatpush1.xpose.msra.mxu0 %v997
    %999 = vmatprep.subr.mxu0 0.0
    %1000 = vmatpush1.xpose.msra.mxu0 0.0
    %1001 = vmatprep.subr.mxu0 0.0
    %1002 = vmatpush1.xpose.msra.mxu0 0.0
    %1003 = vmatprep.subr.mxu0 0.0
    %1004 = vmatpush1.xpose.msra.mxu0 0.0
    %1005 = vmatprep.subr.mxu0 0.0
    %1006 = vmatpush1.xpose.msra.mxu0 0.0
    %1007 = vmatprep.subr.mxu0 0.0
    %1008 = vmatpush1.xpose.msra.mxu0 0.0
    %1009 = vmatprep.subr.mxu0 0.0
    %1010 = vmatpush1.xpose.msra.mxu0 0.0
    %1011 = vmatprep.subr.mxu0 0.0
    %1012 = vmatpush1.xpose.msra.mxu0 0.0
    %1013 = vmatprep.subr.mxu0 0.0
    %1014 = vmatpush1.xpose.msra.mxu0 0.0
    %1015 = vmatprep.subr.mxu0 0.0
    %1016 = vmatpush1.xpose.msra.mxu0 0.0
    %1017 = vmatprep.subr.mxu0 0.0
    %1018 = vmatpush1.xpose.msra.mxu0 0.0
    %1019 = vmatprep.subr.mxu0 0.0
    %1020 = vmatpush1.xpose.msra.mxu0 0.0
    %1021 = vmatprep.subr.mxu0 0.0
    %1022 = vmatpush1.xpose.msra.mxu0 0.0
    %1023 = vmatprep.subr.mxu0 0.0
    %1024 = vmatpush1.xpose.msra.mxu0 0.0
    %1025 = vmatprep.subr.mxu0 0.0
    %1026 = vmatpush1.xpose.msra.mxu0 0.0
    %1027 = vmatprep.subr.mxu0 0.0
    %1028 = vmatpush1.xpose.msra.mxu0 0.0
    %1029 = vmatprep.subr.mxu0 0.0
    %1030 = vmatpush1.xpose.msra.mxu0 0.0
    %1031 = vmatprep.subr.mxu0 0.0
    %1032 = vmatpush1.xpose.msra.mxu0 0.0
    %1033 = vmatprep.subr.mxu0 0.0
    %1034 = vmatpush1.xpose.msra.mxu0 0.0
    %1035 = vmatprep.subr.mxu0 0.0
    %1036 = vmatpush1.xpose.msra.mxu0 0.0
    %1037 = vmatprep.subr.mxu0 0.0
    %1038 = vmatpush1.xpose.msra.mxu0 0.0
    %1039 = vmatprep.subr.mxu0 0.0
    %1040 = vmatpush1.xpose.msra.mxu0 0.0
    %1041 = vmatprep.subr.mxu0 0.0
    %1042 = vmatpush1.xpose.msra.mxu0 0.0
    %1043 = vmatprep.subr.mxu0 0.0
    %1044 = vmatpush1.xpose.msra.mxu0 0.0
    %1045 = vmatprep.subr.mxu0 0.0
    %1046 = vmatpush1.xpose.msra.mxu0 0.0
    %1047 = vmatprep.subr.mxu0 0.0
    %1048 = vmatpush1.xpose.msra.mxu0 0.0
    %1049 = vmatprep.subr.mxu0 0.0
    %1050 = vmatpush1.xpose.msra.mxu0 0.0
    %1051 = vmatprep.subr.mxu0 0.0
    %1052 = vmatpush1.xpose.msra.mxu0 0.0
    %1053 = vmatprep.subr.mxu0 0.0
    %1054 = vmatpush1.xpose.msra.mxu0 0.0
    %1055 = vmatprep.subr.mxu0 0.0
    %1056 = vmatpush1.xpose.msra.mxu0 0.0
    %1057 = vmatprep.subr.mxu0 0.0
    %1058 = vmatpush1.xpose.msra.mxu0 0.0
    %1059 = vmatprep.subr.mxu0 0.0
    %1060 = vmatpush1.xpose.msra.mxu0 0.0
    %1061 = vmatprep.mubr.f32.mxu0 0.0
    %v1062 = vand.u32 %v687, 4294901760
    %v1063 = vsub.f32 %v687, %v1062
    %v1064 = vand.u32 %v1063, 4294901760
    %1065 = vmatmul.mubr.f32.gmra.mrb[0].mxu0 %v1064
    %v1066 = vpop.f32.mrb[0].mxu0
    %v1067 = vadd.f32 %v972, %v1066
    %v1068 = vpop.f32.mrb[0].mxu0
    %1069 = vmatprep.mubr.f32.mxu0 0.0
    %v1070 = vand.u32 %v690, 4294901760
    %v1071 = vsub.f32 %v690, %v1070
    %v1072 = vand.u32 %v1071, 4294901760
    %1073 = vmatmul.mubr.f32.gmra.mrb[0].mxu0 %v1072
    %v1074 = vpop.f32.mrb[0].mxu0
    %v1075 = vadd.f32 %v979, %v1074
    %v1076 = vpop.f32.mrb[0].mxu0
    %1077 = vmatprep.mubr.f32.mxu0 0.0
    %v1078 = vand.u32 %v693, 4294901760
    %v1079 = vsub.f32 %v693, %v1078
    %v1080 = vand.u32 %v1079, 4294901760
    %1081 = vmatmul.mubr.f32.gmra.mrb[0].mxu0 %v1080
    %v1082 = vpop.f32.mrb[0].mxu0
    %v1083 = vadd.f32 %v986, %v1082
    %v1084 = vpop.f32.mrb[0].mxu0
    %1085 = vmatprep.mubr.f32.mxu0 0.0
    %v1086 = vand.u32 %v696, 4294901760
    %v1087 = vsub.f32 %v696, %v1086
    %v1088 = vand.u32 %v1087, 4294901760
    %1089 = vmatmul.mubr.f32.gmra.mrb[0].mxu0 %v1088
    %v1090 = vpop.f32.mrb[0].mxu0
    %v1091 = vadd.f32 %v993, %v1090
    %v1092 = vpop.f32.mrb[0].mxu0
    %1093 = vdwg.mxu0
    %1094 = vmatprep.subr.mxu0 0.0
    %v1095 = vand.u32 %v699, 4294901760
    %v1096 = vsub.f32 %v699, %v1095
    %v1097 = vand.u32 %v1096, 4294901760
    %1098 = vmatpush1.xpose.msra.mxu0 %v1097
    %1099 = vmatprep.subr.mxu0 0.0
    %1100 = vmatpush1.xpose.msra.mxu0 0.0
    %1101 = vmatprep.subr.mxu0 0.0
    %1102 = vmatpush1.xpose.msra.mxu0 0.0
    %1103 = vmatprep.subr.mxu0 0.0
    %1104 = vmatpush1.xpose.msra.mxu0 0.0
    %1105 = vmatprep.subr.mxu0 0.0
    %1106 = vmatpush1.xpose.msra.mxu0 0.0
    %1107 = vmatprep.subr.mxu0 0.0
    %1108 = vmatpush1.xpose.msra.mxu0 0.0
    %1109 = vmatprep.subr.mxu0 0.0
    %1110 = vmatpush1.xpose.msra.mxu0 0.0
    %1111 = vmatprep.subr.mxu0 0.0
    %1112 = vmatpush1.xpose.msra.mxu0 0.0
    %1113 = vmatprep.subr.mxu0 0.0
    %1114 = vmatpush1.xpose.msra.mxu0 0.0
    %1115 = vmatprep.subr.mxu0 0.0
    %1116 = vmatpush1.xpose.msra.mxu0 0.0
    %1117 = vmatprep.subr.mxu0 0.0
    %1118 = vmatpush1.xpose.msra.mxu0 0.0
    %1119 = vmatprep.subr.mxu0 0.0
    %1120 = vmatpush1.xpose.msra.mxu0 0.0
    %1121 = vmatprep.subr.mxu0 0.0
    %1122 = vmatpush1.xpose.msra.mxu0 0.0
    %1123 = vmatprep.subr.mxu0 0.0
    %1124 = vmatpush1.xpose.msra.mxu0 0.0
    %1125 = vmatprep.subr.mxu0 0.0
    %1126 = vmatpush1.xpose.msra.mxu0 0.0
    %1127 = vmatprep.subr.mxu0 0.0
    %1128 = vmatpush1.xpose.msra.mxu0 0.0
    %1129 = vmatprep.subr.mxu0 0.0
    %1130 = vmatpush1.xpose.msra.mxu0 0.0
    %1131 = vmatprep.subr.mxu0 0.0
    %1132 = vmatpush1.xpose.msra.mxu0 0.0
    %1133 = vmatprep.subr.mxu0 0.0
    %1134 = vmatpush1.xpose.msra.mxu0 0.0
    %1135 = vmatprep.subr.mxu0 0.0
    %1136 = vmatpush1.xpose.msra.mxu0 0.0
    %1137 = vmatprep.subr.mxu0 0.0
    %1138 = vmatpush1.xpose.msra.mxu0 0.0
    %1139 = vmatprep.subr.mxu0 0.0
    %1140 = vmatpush1.xpose.msra.mxu0 0.0
    %1141 = vmatprep.subr.mxu0 0.0
    %1142 = vmatpush1.xpose.msra.mxu0 0.0
    %1143 = vmatprep.subr.mxu0 0.0
    %1144 = vmatpush1.xpose.msra.mxu0 0.0
    %1145 = vmatprep.subr.mxu0 0.0
    %1146 = vmatpush1.xpose.msra.mxu0 0.0
    %1147 = vmatprep.subr.mxu0 0.0
    %1148 = vmatpush1.xpose.msra.mxu0 0.0
    %1149 = vmatprep.subr.mxu0 0.0
    %1150 = vmatpush1.xpose.msra.mxu0 0.0
    %1151 = vmatprep.subr.mxu0 0.0
    %1152 = vmatpush1.xpose.msra.mxu0 0.0
    %1153 = vmatprep.subr.mxu0 0.0
    %1154 = vmatpush1.xpose.msra.mxu0 0.0
    %1155 = vmatprep.subr.mxu0 0.0
    %1156 = vmatpush1.xpose.msra.mxu0 0.0
    %1157 = vmatprep.subr.mxu0 0.0
    %1158 = vmatpush1.xpose.msra.mxu0 0.0
    %1159 = vmatprep.subr.mxu0 0.0
    %1160 = vmatpush1.xpose.msra.mxu0 0.0
    %1161 = vmatprep.mubr.f32.mxu0 0.0
    %v1162 = vand.u32 %v687, 4294901760
    %1163 = vmatmul.mubr.f32.gmra.mrb[0].mxu0 %v1162
    %v1164 = vpop.f32.mrb[0].mxu0
    %v1165 = vadd.f32 %v1067, %v1164
    %v1166 = vpop.f32.mrb[0].mxu0
    %1167 = vmatprep.mubr.f32.mxu0 0.0
    %v1168 = vand.u32 %v690, 4294901760
    %1169 = vmatmul.mubr.f32.gmra.mrb[0].mxu0 %v1168
    %v1170 = vpop.f32.mrb[0].mxu0
    %v1171 = vadd.f32 %v1075, %v1170
    %v1172 = vpop.f32.mrb[0].mxu0
    %1173 = vmatprep.mubr.f32.mxu0 0.0
    %v1174 = vand.u32 %v693, 4294901760
    %1175 = vmatmul.mubr.f32.gmra.mrb[0].mxu0 %v1174
    %v1176 = vpop.f32.mrb[0].mxu0
    %v1177 = vadd.f32 %v1083, %v1176
    %v1178 = vpop.f32.mrb[0].mxu0
    %1179 = vmatprep.mubr.f32.mxu0 0.0
    %v1180 = vand.u32 %v696, 4294901760
    %1181 = vmatmul.mubr.f32.gmra.mrb[0].mxu0 %v1180
    %v1182 = vpop.f32.mrb[0].mxu0
    %v1183 = vadd.f32 %v1091, %v1182
    %v1184 = vpop.f32.mrb[0].mxu0
    %1185 = vdwg.mxu0
    %1186 = vmatprep.subr.mxu0 0.0
    %v1187 = vand.u32 %v699, 4294901760
    %1188 = vmatpush1.xpose.msra.mxu0 %v1187
    %1189 = vmatprep.subr.mxu0 0.0
    %1190 = vmatpush1.xpose.msra.mxu0 0.0
    %1191 = vmatprep.subr.mxu0 0.0
    %1192 = vmatpush1.xpose.msra.mxu0 0.0
    %1193 = vmatprep.subr.mxu0 0.0
    %1194 = vmatpush1.xpose.msra.mxu0 0.0
    %1195 = vmatprep.subr.mxu0 0.0
    %1196 = vmatpush1.xpose.msra.mxu0 0.0
    %1197 = vmatprep.subr.mxu0 0.0
    %1198 = vmatpush1.xpose.msra.mxu0 0.0
    %1199 = vmatprep.subr.mxu0 0.0
    %1200 = vmatpush1.xpose.msra.mxu0 0.0
    %1201 = vmatprep.subr.mxu0 0.0
    %1202 = vmatpush1.xpose.msra.mxu0 0.0
    %1203 = vmatprep.subr.mxu0 0.0
    %1204 = vmatpush1.xpose.msra.mxu0 0.0
    %1205 = vmatprep.subr.mxu0 0.0
    %1206 = vmatpush1.xpose.msra.mxu0 0.0
    %1207 = vmatprep.subr.mxu0 0.0
    %1208 = vmatpush1.xpose.msra.mxu0 0.0
    %1209 = vmatprep.subr.mxu0 0.0
    %1210 = vmatpush1.xpose.msra.mxu0 0.0
    %1211 = vmatprep.subr.mxu0 0.0
    %1212 = vmatpush1.xpose.msra.mxu0 0.0
    %1213 = vmatprep.subr.mxu0 0.0
    %1214 = vmatpush1.xpose.msra.mxu0 0.0
    %1215 = vmatprep.subr.mxu0 0.0
    %1216 = vmatpush1.xpose.msra.mxu0 0.0
    %1217 = vmatprep.subr.mxu0 0.0
    %1218 = vmatpush1.xpose.msra.mxu0 0.0
    %1219 = vmatprep.subr.mxu0 0.0
    %1220 = vmatpush1.xpose.msra.mxu0 0.0
    %1221 = vmatprep.subr.mxu0 0.0
    %1222 = vmatpush1.xpose.msra.mxu0 0.0
    %1223 = vmatprep.subr.mxu0 0.0
    %1224 = vmatpush1.xpose.msra.mxu0 0.0
    %1225 = vmatprep.subr.mxu0 0.0
    %1226 = vmatpush1.xpose.msra.mxu0 0.0
    %1227 = vmatprep.subr.mxu0 0.0
    %1228 = vmatpush1.xpose.msra.mxu0 0.0
    %1229 = vmatprep.subr.mxu0 0.0
    %1230 = vmatpush1.xpose.msra.mxu0 0.0
    %1231 = vmatprep.subr.mxu0 0.0
    %1232 = vmatpush1.xpose.msra.mxu0 0.0
    %1233 = vmatprep.subr.mxu0 0.0
    %1234 = vmatpush1.xpose.msra.mxu0 0.0
    %1235 = vmatprep.subr.mxu0 0.0
    %1236 = vmatpush1.xpose.msra.mxu0 0.0
    %1237 = vmatprep.subr.mxu0 0.0
    %1238 = vmatpush1.xpose.msra.mxu0 0.0
    %1239 = vmatprep.subr.mxu0 0.0
    %1240 = vmatpush1.xpose.msra.mxu0 0.0
    %1241 = vmatprep.subr.mxu0 0.0
    %1242 = vmatpush1.xpose.msra.mxu0 0.0
    %1243 = vmatprep.subr.mxu0 0.0
    %1244 = vmatpush1.xpose.msra.mxu0 0.0
    %1245 = vmatprep.subr.mxu0 0.0
    %1246 = vmatpush1.xpose.msra.mxu0 0.0
    %1247 = vmatprep.subr.mxu0 0.0
    %1248 = vmatpush1.xpose.msra.mxu0 0.0
    %1249 = vmatprep.subr.mxu0 0.0
    %1250 = vmatpush1.xpose.msra.mxu0 0.0
    %1251 = vmatprep.mubr.f32.mxu0 0.0
    %v1252 = vand.u32 %v687, 4294901760
    %1253 = vmatmul.mubr.f32.gmra.mrb[0].mxu0 %v1252
    %v1254 = vpop.f32.mrb[0].mxu0
    %v1255 = vadd.f32 %v1165, %v1254
    %v1256 = vpop.f32.mrb[0].mxu0
    %1257 = vmatprep.mubr.f32.mxu0 0.0
    %v1258 = vand.u32 %v690, 4294901760
    %1259 = vmatmul.mubr.f32.gmra.mrb[0].mxu0 %v1258
    %v1260 = vpop.f32.mrb[0].mxu0
    %v1261 = vadd.f32 %v1171, %v1260
    %v1262 = vpop.f32.mrb[0].mxu0
    %1263 = vmatprep.mubr.f32.mxu0 0.0
    %v1264 = vand.u32 %v693, 4294901760
    %1265 = vmatmul.mubr.f32.gmra.mrb[0].mxu0 %v1264
    %v1266 = vpop.f32.mrb[0].mxu0
    %v1267 = vadd.f32 %v1177, %v1266
    %v1268 = vpop.f32.mrb[0].mxu0
    %1269 = vmatprep.mubr.f32.mxu0 0.0
    %v1270 = vand.u32 %v696, 4294901760
    %1271 = vmatmul.mubr.f32.gmra.mrb[0].mxu0 %v1270
    %v1272 = vpop.f32.mrb[0].mxu0
    %v1273 = vadd.f32 %v1183, %v1272
    %v1274 = vpop.f32.mrb[0].mxu0
    %1275 = vdwg.mxu0
    %v1277 = vsel %vm73, %v682, 0
    %v1280 = vsel %vm73, %v683, 0
    %v1283 = vsel %vm73, %v684, 0
    %v1286 = vsel %vm73, %v685, 0
    %v1289 = vsel %vm73, %v621, 0
    %1291 = vmatprep.subr.mxu0 0.0
    %v1292 = vand.u32 %v1289, 4294901760
    %1293 = vmatpush1.xpose.msra.mxu0 %v1292
    %1294 = vmatprep.subr.mxu0 0.0
    %1295 = vmatpush1.xpose.msra.mxu0 0.0
    %1296 = vmatprep.subr.mxu0 0.0
    %1297 = vmatpush1.xpose.msra.mxu0 0.0
    %1298 = vmatprep.subr.mxu0 0.0
    %1299 = vmatpush1.xpose.msra.mxu0 0.0
    %1300 = vmatprep.subr.mxu0 0.0
    %1301 = vmatpush1.xpose.msra.mxu0 0.0
    %1302 = vmatprep.subr.mxu0 0.0
    %1303 = vmatpush1.xpose.msra.mxu0 0.0
    %1304 = vmatprep.subr.mxu0 0.0
    %1305 = vmatpush1.xpose.msra.mxu0 0.0
    %1306 = vmatprep.subr.mxu0 0.0
    %1307 = vmatpush1.xpose.msra.mxu0 0.0
    %1308 = vmatprep.subr.mxu0 0.0
    %1309 = vmatpush1.xpose.msra.mxu0 0.0
    %1310 = vmatprep.subr.mxu0 0.0
    %1311 = vmatpush1.xpose.msra.mxu0 0.0
    %1312 = vmatprep.subr.mxu0 0.0
    %1313 = vmatpush1.xpose.msra.mxu0 0.0
    %1314 = vmatprep.subr.mxu0 0.0
    %1315 = vmatpush1.xpose.msra.mxu0 0.0
    %1316 = vmatprep.subr.mxu0 0.0
    %1317 = vmatpush1.xpose.msra.mxu0 0.0
    %1318 = vmatprep.subr.mxu0 0.0
    %1319 = vmatpush1.xpose.msra.mxu0 0.0
    %1320 = vmatprep.subr.mxu0 0.0
    %1321 = vmatpush1.xpose.msra.mxu0 0.0
    %1322 = vmatprep.subr.mxu0 0.0
    %1323 = vmatpush1.xpose.msra.mxu0 0.0
    %1324 = vmatprep.subr.mxu0 0.0
    %1325 = vmatpush1.xpose.msra.mxu0 0.0
    %1326 = vmatprep.subr.mxu0 0.0
    %1327 = vmatpush1.xpose.msra.mxu0 0.0
    %1328 = vmatprep.subr.mxu0 0.0
    %1329 = vmatpush1.xpose.msra.mxu0 0.0
    %1330 = vmatprep.subr.mxu0 0.0
    %1331 = vmatpush1.xpose.msra.mxu0 0.0
    %1332 = vmatprep.subr.mxu0 0.0
    %1333 = vmatpush1.xpose.msra.mxu0 0.0
    %1334 = vmatprep.subr.mxu0 0.0
    %1335 = vmatpush1.xpose.msra.mxu0 0.0
    %1336 = vmatprep.subr.mxu0 0.0
    %1337 = vmatpush1.xpose.msra.mxu0 0.0
    %1338 = vmatprep.subr.mxu0 0.0
    %1339 = vmatpush1.xpose.msra.mxu0 0.0
    %1340 = vmatprep.subr.mxu0 0.0
    %1341 = vmatpush1.xpose.msra.mxu0 0.0
    %1342 = vmatprep.subr.mxu0 0.0
    %1343 = vmatpush1.xpose.msra.mxu0 0.0
    %1344 = vmatprep.subr.mxu0 0.0
    %1345 = vmatpush1.xpose.msra.mxu0 0.0
    %1346 = vmatprep.subr.mxu0 0.0
    %1347 = vmatpush1.xpose.msra.mxu0 0.0
    %1348 = vmatprep.subr.mxu0 0.0
    %1349 = vmatpush1.xpose.msra.mxu0 0.0
    %1350 = vmatprep.subr.mxu0 0.0
    %1351 = vmatpush1.xpose.msra.mxu0 0.0
    %1352 = vmatprep.subr.mxu0 0.0
    %1353 = vmatpush1.xpose.msra.mxu0 0.0
    %1354 = vmatprep.subr.mxu0 0.0
    %1355 = vmatpush1.xpose.msra.mxu0 0.0
    %1356 = vmatprep.mubr.f32.mxu0 0.0
    %v1357 = vand.u32 %v1277, 4294901760
    %v1358 = vsub.f32 %v1277, %v1357
    %v1359 = vand.u32 %v1358, 4294901760
    %v1360 = vsub.f32 %v1358, %v1359
    %v1361 = vand.u32 %v1360, 4294901760
    %1362 = vmatmul.mubr.f32.gmra.mrb[0].mxu0 %v1361
    %v1363 = vpop.f32.mrb[0].mxu0
    %v1364 = vadd.f32 0.0, %v1363
    %v1365 = vpop.f32.mrb[0].mxu0
    %1366 = vmatprep.mubr.f32.mxu0 0.0
    %v1367 = vand.u32 %v1280, 4294901760
    %v1368 = vsub.f32 %v1280, %v1367
    %v1369 = vand.u32 %v1368, 4294901760
    %v1370 = vsub.f32 %v1368, %v1369
    %v1371 = vand.u32 %v1370, 4294901760
    %1372 = vmatmul.mubr.f32.gmra.mrb[0].mxu0 %v1371
    %v1373 = vpop.f32.mrb[0].mxu0
    %v1374 = vadd.f32 0.0, %v1373
    %v1375 = vpop.f32.mrb[0].mxu0
    %1376 = vmatprep.mubr.f32.mxu0 0.0
    %v1377 = vand.u32 %v1283, 4294901760
    %v1378 = vsub.f32 %v1283, %v1377
    %v1379 = vand.u32 %v1378, 4294901760
    %v1380 = vsub.f32 %v1378, %v1379
    %v1381 = vand.u32 %v1380, 4294901760
    %1382 = vmatmul.mubr.f32.gmra.mrb[0].mxu0 %v1381
    %v1383 = vpop.f32.mrb[0].mxu0
    %v1384 = vadd.f32 0.0, %v1383
    %v1385 = vpop.f32.mrb[0].mxu0
    %1386 = vmatprep.mubr.f32.mxu0 0.0
    %v1387 = vand.u32 %v1286, 4294901760
    %v1388 = vsub.f32 %v1286, %v1387
    %v1389 = vand.u32 %v1388, 4294901760
    %v1390 = vsub.f32 %v1388, %v1389
    %v1391 = vand.u32 %v1390, 4294901760
    %1392 = vmatmul.mubr.f32.gmra.mrb[0].mxu0 %v1391
    %v1393 = vpop.f32.mrb[0].mxu0
    %v1394 = vadd.f32 0.0, %v1393
    %v1395 = vpop.f32.mrb[0].mxu0
    %1396 = vdwg.mxu0
    %1397 = vmatprep.subr.mxu0 0.0
    %v1398 = vand.u32 %v1289, 4294901760
    %v1399 = vsub.f32 %v1289, %v1398
    %v1400 = vand.u32 %v1399, 4294901760
    %v1401 = vsub.f32 %v1399, %v1400
    %v1402 = vand.u32 %v1401, 4294901760
    %1403 = vmatpush1.xpose.msra.mxu0 %v1402
    %1404 = vmatprep.subr.mxu0 0.0
    %1405 = vmatpush1.xpose.msra.mxu0 0.0
    %1406 = vmatprep.subr.mxu0 0.0
    %1407 = vmatpush1.xpose.msra.mxu0 0.0
    %1408 = vmatprep.subr.mxu0 0.0
    %1409 = vmatpush1.xpose.msra.mxu0 0.0
    %1410 = vmatprep.subr.mxu0 0.0
    %1411 = vmatpush1.xpose.msra.mxu0 0.0
    %1412 = vmatprep.subr.mxu0 0.0
    %1413 = vmatpush1.xpose.msra.mxu0 0.0
    %1414 = vmatprep.subr.mxu0 0.0
    %1415 = vmatpush1.xpose.msra.mxu0 0.0
    %1416 = vmatprep.subr.mxu0 0.0
    %1417 = vmatpush1.xpose.msra.mxu0 0.0
    %1418 = vmatprep.subr.mxu0 0.0
    %1419 = vmatpush1.xpose.msra.mxu0 0.0
    %1420 = vmatprep.subr.mxu0 0.0
    %1421 = vmatpush1.xpose.msra.mxu0 0.0
    %1422 = vmatprep.subr.mxu0 0.0
    %1423 = vmatpush1.xpose.msra.mxu0 0.0
    %1424 = vmatprep.subr.mxu0 0.0
    %1425 = vmatpush1.xpose.msra.mxu0 0.0
    %1426 = vmatprep.subr.mxu0 0.0
    %1427 = vmatpush1.xpose.msra.mxu0 0.0
    %1428 = vmatprep.subr.mxu0 0.0
    %1429 = vmatpush1.xpose.msra.mxu0 0.0
    %1430 = vmatprep.subr.mxu0 0.0
    %1431 = vmatpush1.xpose.msra.mxu0 0.0
    %1432 = vmatprep.subr.mxu0 0.0
    %1433 = vmatpush1.xpose.msra.mxu0 0.0
    %1434 = vmatprep.subr.mxu0 0.0
    %1435 = vmatpush1.xpose.msra.mxu0 0.0
    %1436 = vmatprep.subr.mxu0 0.0
    %1437 = vmatpush1.xpose.msra.mxu0 0.0
    %1438 = vmatprep.subr.mxu0 0.0
    %1439 = vmatpush1.xpose.msra.mxu0 0.0
    %1440 = vmatprep.subr.mxu0 0.0
    %1441 = vmatpush1.xpose.msra.mxu0 0.0
    %1442 = vmatprep.subr.mxu0 0.0
    %1443 = vmatpush1.xpose.msra.mxu0 0.0
    %1444 = vmatprep.subr.mxu0 0.0
    %1445 = vmatpush1.xpose.msra.mxu0 0.0
    %1446 = vmatprep.subr.mxu0 0.0
    %1447 = vmatpush1.xpose.msra.mxu0 0.0
    %1448 = vmatprep.subr.mxu0 0.0
    %1449 = vmatpush1.xpose.msra.mxu0 0.0
    %1450 = vmatprep.subr.mxu0 0.0
    %1451 = vmatpush1.xpose.msra.mxu0 0.0
    %1452 = vmatprep.subr.mxu0 0.0
    %1453 = vmatpush1.xpose.msra.mxu0 0.0
    %1454 = vmatprep.subr.mxu0 0.0
    %1455 = vmatpush1.xpose.msra.mxu0 0.0
    %1456 = vmatprep.subr.mxu0 0.0
    %1457 = vmatpush1.xpose.msra.mxu0 0.0
    %1458 = vmatprep.subr.mxu0 0.0
    %1459 = vmatpush1.xpose.msra.mxu0 0.0
    %1460 = vmatprep.subr.mxu0 0.0
    %1461 = vmatpush1.xpose.msra.mxu0 0.0
    %1462 = vmatprep.subr.mxu0 0.0
    %1463 = vmatpush1.xpose.msra.mxu0 0.0
    %1464 = vmatprep.subr.mxu0 0.0
    %1465 = vmatpush1.xpose.msra.mxu0 0.0
    %1466 = vmatprep.mubr.f32.mxu0 0.0
    %v1467 = vand.u32 %v1277, 4294901760
    %1468 = vmatmul.mubr.f32.gmra.mrb[0].mxu0 %v1467
    %v1469 = vpop.f32.mrb[0].mxu0
    %v1470 = vadd.f32 %v1364, %v1469
    %v1471 = vpop.f32.mrb[0].mxu0
    %1472 = vmatprep.mubr.f32.mxu0 0.0
    %v1473 = vand.u32 %v1280, 4294901760
    %1474 = vmatmul.mubr.f32.gmra.mrb[0].mxu0 %v1473
    %v1475 = vpop.f32.mrb[0].mxu0
    %v1476 = vadd.f32 %v1374, %v1475
    %v1477 = vpop.f32.mrb[0].mxu0
    %1478 = vmatprep.mubr.f32.mxu0 0.0
    %v1479 = vand.u32 %v1283, 4294901760
    %1480 = vmatmul.mubr.f32.gmra.mrb[0].mxu0 %v1479
    %v1481 = vpop.f32.mrb[0].mxu0
    %v1482 = vadd.f32 %v1384, %v1481
    %v1483 = vpop.f32.mrb[0].mxu0
    %1484 = vmatprep.mubr.f32.mxu0 0.0
    %v1485 = vand.u32 %v1286, 4294901760
    %1486 = vmatmul.mubr.f32.gmra.mrb[0].mxu0 %v1485
    %v1487 = vpop.f32.mrb[0].mxu0
    %v1488 = vadd.f32 %v1394, %v1487
    %v1489 = vpop.f32.mrb[0].mxu0
    %1490 = vdwg.mxu0
    %1491 = vmatprep.subr.mxu0 0.0
    %v1492 = vand.u32 %v1289, 4294901760
    %v1493 = vsub.f32 %v1289, %v1492
    %1494 = vmatpush1.xpose.msra.mxu0 %v1493
    %1495 = vmatprep.subr.mxu0 0.0
    %1496 = vmatpush1.xpose.msra.mxu0 0.0
    %1497 = vmatprep.subr.mxu0 0.0
    %1498 = vmatpush1.xpose.msra.mxu0 0.0
    %1499 = vmatprep.subr.mxu0 0.0
    %1500 = vmatpush1.xpose.msra.mxu0 0.0
    %1501 = vmatprep.subr.mxu0 0.0
    %1502 = vmatpush1.xpose.msra.mxu0 0.0
    %1503 = vmatprep.subr.mxu0 0.0
    %1504 = vmatpush1.xpose.msra.mxu0 0.0
    %1505 = vmatprep.subr.mxu0 0.0
    %1506 = vmatpush1.xpose.msra.mxu0 0.0
    %1507 = vmatprep.subr.mxu0 0.0
    %1508 = vmatpush1.xpose.msra.mxu0 0.0
    %1509 = vmatprep.subr.mxu0 0.0
    %1510 = vmatpush1.xpose.msra.mxu0 0.0
    %1511 = vmatprep.subr.mxu0 0.0
    %1512 = vmatpush1.xpose.msra.mxu0 0.0
    %1513 = vmatprep.subr.mxu0 0.0
    %1514 = vmatpush1.xpose.msra.mxu0 0.0
    %1515 = vmatprep.subr.mxu0 0.0
    %1516 = vmatpush1.xpose.msra.mxu0 0.0
    %1517 = vmatprep.subr.mxu0 0.0
    %1518 = vmatpush1.xpose.msra.mxu0 0.0
    %1519 = vmatprep.subr.mxu0 0.0
    %1520 = vmatpush1.xpose.msra.mxu0 0.0
    %1521 = vmatprep.subr.mxu0 0.0
    %1522 = vmatpush1.xpose.msra.mxu0 0.0
    %1523 = vmatprep.subr.mxu0 0.0
    %1524 = vmatpush1.xpose.msra.mxu0 0.0
    %1525 = vmatprep.subr.mxu0 0.0
    %1526 = vmatpush1.xpose.msra.mxu0 0.0
    %1527 = vmatprep.subr.mxu0 0.0
    %1528 = vmatpush1.xpose.msra.mxu0 0.0
    %1529 = vmatprep.subr.mxu0 0.0
    %1530 = vmatpush1.xpose.msra.mxu0 0.0
    %1531 = vmatprep.subr.mxu0 0.0
    %1532 = vmatpush1.xpose.msra.mxu0 0.0
    %1533 = vmatprep.subr.mxu0 0.0
    %1534 = vmatpush1.xpose.msra.mxu0 0.0
    %1535 = vmatprep.subr.mxu0 0.0
    %1536 = vmatpush1.xpose.msra.mxu0 0.0
    %1537 = vmatprep.subr.mxu0 0.0
    %1538 = vmatpush1.xpose.msra.mxu0 0.0
    %1539 = vmatprep.subr.mxu0 0.0
    %1540 = vmatpush1.xpose.msra.mxu0 0.0
    %1541 = vmatprep.subr.mxu0 0.0
    %1542 = vmatpush1.xpose.msra.mxu0 0.0
    %1543 = vmatprep.subr.mxu0 0.0
    %1544 = vmatpush1.xpose.msra.mxu0 0.0
    %1545 = vmatprep.subr.mxu0 0.0
    %1546 = vmatpush1.xpose.msra.mxu0 0.0
    %1547 = vmatprep.subr.mxu0 0.0
    %1548 = vmatpush1.xpose.msra.mxu0 0.0
    %1549 = vmatprep.subr.mxu0 0.0
    %1550 = vmatpush1.xpose.msra.mxu0 0.0
    %1551 = vmatprep.subr.mxu0 0.0
    %1552 = vmatpush1.xpose.msra.mxu0 0.0
    %1553 = vmatprep.subr.mxu0 0.0
    %1554 = vmatpush1.xpose.msra.mxu0 0.0
    %1555 = vmatprep.subr.mxu0 0.0
    %1556 = vmatpush1.xpose.msra.mxu0 0.0
    %1557 = vmatprep.mubr.f32.mxu0 0.0
    %v1558 = vand.u32 %v1277, 4294901760
    %v1559 = vsub.f32 %v1277, %v1558
    %1560 = vmatmul.mubr.f32.gmra.mrb[0].mxu0 %v1559
    %v1561 = vpop.f32.mrb[0].mxu0
    %v1562 = vadd.f32 %v1470, %v1561
    %v1563 = vpop.f32.mrb[0].mxu0
    %1564 = vmatprep.mubr.f32.mxu0 0.0
    %v1565 = vand.u32 %v1280, 4294901760
    %v1566 = vsub.f32 %v1280, %v1565
    %1567 = vmatmul.mubr.f32.gmra.mrb[0].mxu0 %v1566
    %v1568 = vpop.f32.mrb[0].mxu0
    %v1569 = vadd.f32 %v1476, %v1568
    %v1570 = vpop.f32.mrb[0].mxu0
    %1571 = vmatprep.mubr.f32.mxu0 0.0
    %v1572 = vand.u32 %v1283, 4294901760
    %v1573 = vsub.f32 %v1283, %v1572
    %1574 = vmatmul.mubr.f32.gmra.mrb[0].mxu0 %v1573
    %v1575 = vpop.f32.mrb[0].mxu0
    %v1576 = vadd.f32 %v1482, %v1575
    %v1577 = vpop.f32.mrb[0].mxu0
    %1578 = vmatprep.mubr.f32.mxu0 0.0
    %v1579 = vand.u32 %v1286, 4294901760
    %v1580 = vsub.f32 %v1286, %v1579
    %1581 = vmatmul.mubr.f32.gmra.mrb[0].mxu0 %v1580
    %v1582 = vpop.f32.mrb[0].mxu0
    %v1583 = vadd.f32 %v1488, %v1582
    %v1584 = vpop.f32.mrb[0].mxu0
    %1585 = vdwg.mxu0
    %1586 = vmatprep.subr.mxu0 0.0
    %v1587 = vand.u32 %v1289, 4294901760
    %1588 = vmatpush1.xpose.msra.mxu0 %v1587
    %1589 = vmatprep.subr.mxu0 0.0
    %1590 = vmatpush1.xpose.msra.mxu0 0.0
    %1591 = vmatprep.subr.mxu0 0.0
    %1592 = vmatpush1.xpose.msra.mxu0 0.0
    %1593 = vmatprep.subr.mxu0 0.0
    %1594 = vmatpush1.xpose.msra.mxu0 0.0
    %1595 = vmatprep.subr.mxu0 0.0
    %1596 = vmatpush1.xpose.msra.mxu0 0.0
    %1597 = vmatprep.subr.mxu0 0.0
    %1598 = vmatpush1.xpose.msra.mxu0 0.0
    %1599 = vmatprep.subr.mxu0 0.0
    %1600 = vmatpush1.xpose.msra.mxu0 0.0
    %1601 = vmatprep.subr.mxu0 0.0
    %1602 = vmatpush1.xpose.msra.mxu0 0.0
    %1603 = vmatprep.subr.mxu0 0.0
    %1604 = vmatpush1.xpose.msra.mxu0 0.0
    %1605 = vmatprep.subr.mxu0 0.0
    %1606 = vmatpush1.xpose.msra.mxu0 0.0
    %1607 = vmatprep.subr.mxu0 0.0
    %1608 = vmatpush1.xpose.msra.mxu0 0.0
    %1609 = vmatprep.subr.mxu0 0.0
    %1610 = vmatpush1.xpose.msra.mxu0 0.0
    %1611 = vmatprep.subr.mxu0 0.0
    %1612 = vmatpush1.xpose.msra.mxu0 0.0
    %1613 = vmatprep.subr.mxu0 0.0
    %1614 = vmatpush1.xpose.msra.mxu0 0.0
    %1615 = vmatprep.subr.mxu0 0.0
    %1616 = vmatpush1.xpose.msra.mxu0 0.0
    %1617 = vmatprep.subr.mxu0 0.0
    %1618 = vmatpush1.xpose.msra.mxu0 0.0
    %1619 = vmatprep.subr.mxu0 0.0
    %1620 = vmatpush1.xpose.msra.mxu0 0.0
    %1621 = vmatprep.subr.mxu0 0.0
    %1622 = vmatpush1.xpose.msra.mxu0 0.0
    %1623 = vmatprep.subr.mxu0 0.0
    %1624 = vmatpush1.xpose.msra.mxu0 0.0
    %1625 = vmatprep.subr.mxu0 0.0
    %1626 = vmatpush1.xpose.msra.mxu0 0.0
    %1627 = vmatprep.subr.mxu0 0.0
    %1628 = vmatpush1.xpose.msra.mxu0 0.0
    %1629 = vmatprep.subr.mxu0 0.0
    %1630 = vmatpush1.xpose.msra.mxu0 0.0
    %1631 = vmatprep.subr.mxu0 0.0
    %1632 = vmatpush1.xpose.msra.mxu0 0.0
    %1633 = vmatprep.subr.mxu0 0.0
    %1634 = vmatpush1.xpose.msra.mxu0 0.0
    %1635 = vmatprep.subr.mxu0 0.0
    %1636 = vmatpush1.xpose.msra.mxu0 0.0
    %1637 = vmatprep.subr.mxu0 0.0
    %1638 = vmatpush1.xpose.msra.mxu0 0.0
    %1639 = vmatprep.subr.mxu0 0.0
    %1640 = vmatpush1.xpose.msra.mxu0 0.0
    %1641 = vmatprep.subr.mxu0 0.0
    %1642 = vmatpush1.xpose.msra.mxu0 0.0
    %1643 = vmatprep.subr.mxu0 0.0
    %1644 = vmatpush1.xpose.msra.mxu0 0.0
    %1645 = vmatprep.subr.mxu0 0.0
    %1646 = vmatpush1.xpose.msra.mxu0 0.0
    %1647 = vmatprep.subr.mxu0 0.0
    %1648 = vmatpush1.xpose.msra.mxu0 0.0
    %1649 = vmatprep.subr.mxu0 0.0
    %1650 = vmatpush1.xpose.msra.mxu0 0.0
    %1651 = vmatprep.mubr.f32.mxu0 0.0
    %v1652 = vand.u32 %v1277, 4294901760
    %v1653 = vsub.f32 %v1277, %v1652
    %v1654 = vand.u32 %v1653, 4294901760
    %1655 = vmatmul.mubr.f32.gmra.mrb[0].mxu0 %v1654
    %v1656 = vpop.f32.mrb[0].mxu0
    %v1657 = vadd.f32 %v1562, %v1656
    %v1658 = vpop.f32.mrb[0].mxu0
    %1659 = vmatprep.mubr.f32.mxu0 0.0
    %v1660 = vand.u32 %v1280, 4294901760
    %v1661 = vsub.f32 %v1280, %v1660
    %v1662 = vand.u32 %v1661, 4294901760
    %1663 = vmatmul.mubr.f32.gmra.mrb[0].mxu0 %v1662
    %v1664 = vpop.f32.mrb[0].mxu0
    %v1665 = vadd.f32 %v1569, %v1664
    %v1666 = vpop.f32.mrb[0].mxu0
    %1667 = vmatprep.mubr.f32.mxu0 0.0
    %v1668 = vand.u32 %v1283, 4294901760
    %v1669 = vsub.f32 %v1283, %v1668
    %v1670 = vand.u32 %v1669, 4294901760
    %1671 = vmatmul.mubr.f32.gmra.mrb[0].mxu0 %v1670
    %v1672 = vpop.f32.mrb[0].mxu0
    %v1673 = vadd.f32 %v1576, %v1672
    %v1674 = vpop.f32.mrb[0].mxu0
    %1675 = vmatprep.mubr.f32.mxu0 0.0
    %v1676 = vand.u32 %v1286, 4294901760
    %v1677 = vsub.f32 %v1286, %v1676
    %v1678 = vand.u32 %v1677, 4294901760
    %1679 = vmatmul.mubr.f32.gmra.mrb[0].mxu0 %v1678
    %v1680 = vpop.f32.mrb[0].mxu0
    %v1681 = vadd.f32 %v1583, %v1680
    %v1682 = vpop.f32.mrb[0].mxu0
    %1683 = vdwg.mxu0
    %1684 = vmatprep.subr.mxu0 0.0
    %v1685 = vand.u32 %v1289, 4294901760
    %v1686 = vsub.f32 %v1289, %v1685
    %v1687 = vand.u32 %v1686, 4294901760
    %1688 = vmatpush1.xpose.msra.mxu0 %v1687
    %1689 = vmatprep.subr.mxu0 0.0
    %1690 = vmatpush1.xpose.msra.mxu0 0.0
    %1691 = vmatprep.subr.mxu0 0.0
    %1692 = vmatpush1.xpose.msra.mxu0 0.0
    %1693 = vmatprep.subr.mxu0 0.0
    %1694 = vmatpush1.xpose.msra.mxu0 0.0
    %1695 = vmatprep.subr.mxu0 0.0
    %1696 = vmatpush1.xpose.msra.mxu0 0.0
    %1697 = vmatprep.subr.mxu0 0.0
    %1698 = vmatpush1.xpose.msra.mxu0 0.0
    %1699 = vmatprep.subr.mxu0 0.0
    %1700 = vmatpush1.xpose.msra.mxu0 0.0
    %1701 = vmatprep.subr.mxu0 0.0
    %1702 = vmatpush1.xpose.msra.mxu0 0.0
    %1703 = vmatprep.subr.mxu0 0.0
    %1704 = vmatpush1.xpose.msra.mxu0 0.0
    %1705 = vmatprep.subr.mxu0 0.0
    %1706 = vmatpush1.xpose.msra.mxu0 0.0
    %1707 = vmatprep.subr.mxu0 0.0
    %1708 = vmatpush1.xpose.msra.mxu0 0.0
    %1709 = vmatprep.subr.mxu0 0.0
    %1710 = vmatpush1.xpose.msra.mxu0 0.0
    %1711 = vmatprep.subr.mxu0 0.0
    %1712 = vmatpush1.xpose.msra.mxu0 0.0
    %1713 = vmatprep.subr.mxu0 0.0
    %1714 = vmatpush1.xpose.msra.mxu0 0.0
    %1715 = vmatprep.subr.mxu0 0.0
    %1716 = vmatpush1.xpose.msra.mxu0 0.0
    %1717 = vmatprep.subr.mxu0 0.0
    %1718 = vmatpush1.xpose.msra.mxu0 0.0
    %1719 = vmatprep.subr.mxu0 0.0
    %1720 = vmatpush1.xpose.msra.mxu0 0.0
    %1721 = vmatprep.subr.mxu0 0.0
    %1722 = vmatpush1.xpose.msra.mxu0 0.0
    %1723 = vmatprep.subr.mxu0 0.0
    %1724 = vmatpush1.xpose.msra.mxu0 0.0
    %1725 = vmatprep.subr.mxu0 0.0
    %1726 = vmatpush1.xpose.msra.mxu0 0.0
    %1727 = vmatprep.subr.mxu0 0.0
    %1728 = vmatpush1.xpose.msra.mxu0 0.0
    %1729 = vmatprep.subr.mxu0 0.0
    %1730 = vmatpush1.xpose.msra.mxu0 0.0
    %1731 = vmatprep.subr.mxu0 0.0
    %1732 = vmatpush1.xpose.msra.mxu0 0.0
    %1733 = vmatprep.subr.mxu0 0.0
    %1734 = vmatpush1.xpose.msra.mxu0 0.0
    %1735 = vmatprep.subr.mxu0 0.0
    %1736 = vmatpush1.xpose.msra.mxu0 0.0
    %1737 = vmatprep.subr.mxu0 0.0
    %1738 = vmatpush1.xpose.msra.mxu0 0.0
    %1739 = vmatprep.subr.mxu0 0.0
    %1740 = vmatpush1.xpose.msra.mxu0 0.0
    %1741 = vmatprep.subr.mxu0 0.0
    %1742 = vmatpush1.xpose.msra.mxu0 0.0
    %1743 = vmatprep.subr.mxu0 0.0
    %1744 = vmatpush1.xpose.msra.mxu0 0.0
    %1745 = vmatprep.subr.mxu0 0.0
    %1746 = vmatpush1.xpose.msra.mxu0 0.0
    %1747 = vmatprep.subr.mxu0 0.0
    %1748 = vmatpush1.xpose.msra.mxu0 0.0
    %1749 = vmatprep.subr.mxu0 0.0
    %1750 = vmatpush1.xpose.msra.mxu0 0.0
    %1751 = vmatprep.mubr.f32.mxu0 0.0
    %v1752 = vand.u32 %v1277, 4294901760
    %1753 = vmatmul.mubr.f32.gmra.mrb[0].mxu0 %v1752
    %v1754 = vpop.f32.mrb[0].mxu0
    %v1755 = vadd.f32 %v1657, %v1754
    %v1756 = vpop.f32.mrb[0].mxu0
    %1757 = vmatprep.mubr.f32.mxu0 0.0
    %v1758 = vand.u32 %v1280, 4294901760
    %1759 = vmatmul.mubr.f32.gmra.mrb[0].mxu0 %v1758
    %v1760 = vpop.f32.mrb[0].mxu0
    %v1761 = vadd.f32 %v1665, %v1760
    %v1762 = vpop.f32.mrb[0].mxu0
    %1763 = vmatprep.mubr.f32.mxu0 0.0
    %v1764 = vand.u32 %v1283, 4294901760
    %1765 = vmatmul.mubr.f32.gmra.mrb[0].mxu0 %v1764
    %v1766 = vpop.f32.mrb[0].mxu0
    %v1767 = vadd.f32 %v1673, %v1766
    %v1768 = vpop.f32.mrb[0].mxu0
    %1769 = vmatprep.mubr.f32.mxu0 0.0
    %v1770 = vand.u32 %v1286, 4294901760
    %1771 = vmatmul.mubr.f32.gmra.mrb[0].mxu0 %v1770
    %v1772 = vpop.f32.mrb[0].mxu0
    %v1773 = vadd.f32 %v1681, %v1772
    %v1774 = vpop.f32.mrb[0].mxu0
    %1775 = vdwg.mxu0
    %1776 = vmatprep.subr.mxu0 0.0
    %v1777 = vand.u32 %v1289, 4294901760
    %1778 = vmatpush1.xpose.msra.mxu0 %v1777
    %1779 = vmatprep.subr.mxu0 0.0
    %1780 = vmatpush1.xpose.msra.mxu0 0.0
    %1781 = vmatprep.subr.mxu0 0.0
    %1782 = vmatpush1.xpose.msra.mxu0 0.0
    %1783 = vmatprep.subr.mxu0 0.0
    %1784 = vmatpush1.xpose.msra.mxu0 0.0
    %1785 = vmatprep.subr.mxu0 0.0
    %1786 = vmatpush1.xpose.msra.mxu0 0.0
    %1787 = vmatprep.subr.mxu0 0.0
    %1788 = vmatpush1.xpose.msra.mxu0 0.0
    %1789 = vmatprep.subr.mxu0 0.0
    %1790 = vmatpush1.xpose.msra.mxu0 0.0
    %1791 = vmatprep.subr.mxu0 0.0
    %1792 = vmatpush1.xpose.msra.mxu0 0.0
    %1793 = vmatprep.subr.mxu0 0.0
    %1794 = vmatpush1.xpose.msra.mxu0 0.0
    %1795 = vmatprep.subr.mxu0 0.0
    %1796 = vmatpush1.xpose.msra.mxu0 0.0
    %1797 = vmatprep.subr.mxu0 0.0
    %1798 = vmatpush1.xpose.msra.mxu0 0.0
    %1799 = vmatprep.subr.mxu0 0.0
    %1800 = vmatpush1.xpose.msra.mxu0 0.0
    %1801 = vmatprep.subr.mxu0 0.0
    %1802 = vmatpush1.xpose.msra.mxu0 0.0
    %1803 = vmatprep.subr.mxu0 0.0
    %1804 = vmatpush1.xpose.msra.mxu0 0.0
    %1805 = vmatprep.subr.mxu0 0.0
    %1806 = vmatpush1.xpose.msra.mxu0 0.0
    %1807 = vmatprep.subr.mxu0 0.0
    %1808 = vmatpush1.xpose.msra.mxu0 0.0
    %1809 = vmatprep.subr.mxu0 0.0
    %1810 = vmatpush1.xpose.msra.mxu0 0.0
    %1811 = vmatprep.subr.mxu0 0.0
    %1812 = vmatpush1.xpose.msra.mxu0 0.0
    %1813 = vmatprep.subr.mxu0 0.0
    %1814 = vmatpush1.xpose.msra.mxu0 0.0
    %1815 = vmatprep.subr.mxu0 0.0
    %1816 = vmatpush1.xpose.msra.mxu0 0.0
    %1817 = vmatprep.subr.mxu0 0.0
    %1818 = vmatpush1.xpose.msra.mxu0 0.0
    %1819 = vmatprep.subr.mxu0 0.0
    %1820 = vmatpush1.xpose.msra.mxu0 0.0
    %1821 = vmatprep.subr.mxu0 0.0
    %1822 = vmatpush1.xpose.msra.mxu0 0.0
    %1823 = vmatprep.subr.mxu0 0.0
    %1824 = vmatpush1.xpose.msra.mxu0 0.0
    %1825 = vmatprep.subr.mxu0 0.0
    %1826 = vmatpush1.xpose.msra.mxu0 0.0
    %1827 = vmatprep.subr.mxu0 0.0
    %1828 = vmatpush1.xpose.msra.mxu0 0.0
    %1829 = vmatprep.subr.mxu0 0.0
    %1830 = vmatpush1.xpose.msra.mxu0 0.0
    %1831 = vmatprep.subr.mxu0 0.0
    %1832 = vmatpush1.xpose.msra.mxu0 0.0
    %1833 = vmatprep.subr.mxu0 0.0
    %1834 = vmatpush1.xpose.msra.mxu0 0.0
    %1835 = vmatprep.subr.mxu0 0.0
    %1836 = vmatpush1.xpose.msra.mxu0 0.0
    %1837 = vmatprep.subr.mxu0 0.0
    %1838 = vmatpush1.xpose.msra.mxu0 0.0
    %1839 = vmatprep.subr.mxu0 0.0
    %1840 = vmatpush1.xpose.msra.mxu0 0.0
    %1841 = vmatprep.mubr.f32.mxu0 0.0
    %v1842 = vand.u32 %v1277, 4294901760
    %1843 = vmatmul.mubr.f32.gmra.mrb[0].mxu0 %v1842
    %v1844 = vpop.f32.mrb[0].mxu0
    %v1845 = vadd.f32 %v1755, %v1844
    %v1846 = vpop.f32.mrb[0].mxu0
    %1847 = vmatprep.mubr.f32.mxu0 0.0
    %v1848 = vand.u32 %v1280, 4294901760
    %1849 = vmatmul.mubr.f32.gmra.mrb[0].mxu0 %v1848
    %v1850 = vpop.f32.mrb[0].mxu0
    %v1851 = vadd.f32 %v1761, %v1850
    %v1852 = vpop.f32.mrb[0].mxu0
    %1853 = vmatprep.mubr.f32.mxu0 0.0
    %v1854 = vand.u32 %v1283, 4294901760
    %1855 = vmatmul.mubr.f32.gmra.mrb[0].mxu0 %v1854
    %v1856 = vpop.f32.mrb[0].mxu0
    %v1857 = vadd.f32 %v1767, %v1856
    %v1858 = vpop.f32.mrb[0].mxu0
    %1859 = vmatprep.mubr.f32.mxu0 0.0
    %v1860 = vand.u32 %v1286, 4294901760
    %1861 = vmatmul.mubr.f32.gmra.mrb[0].mxu0 %v1860
    %v1862 = vpop.f32.mrb[0].mxu0
    %v1863 = vadd.f32 %v1773, %v1862
    %v1864 = vpop.f32.mrb[0].mxu0
    %1865 = vdwg.mxu0
    %v1874 = vcombine.high %v1255, %v1255
    %v1876 = vunpack.c.l.s4 1966171168
    %v1877 = vunpack.c.0.s8 %v1876
    %v1878 = vlaneseq
    %v1879 = vshrl.u32 %v1878, 7
    %v1880 = vsub.s32 %v1877, %v1879
    %v1881 = vrot.slane %v1255, %v1880
    %v1883 = vunpack.c.l.s4 1966171168
    %v1884 = vunpack.c.0.s8 %v1883
    %v1885 = vlaneseq
    %v1886 = vshrl.u32 %v1885, 7
    %v1887 = vsub.s32 %v1884, %v1886
    %v1888 = vrot.slane %v1874, %v1887
    %v1889 = vcombine.high %v1881, %v1881
    %v1890 = vcombine.high %v1888, %v1888
    %v1892 = vunpack.c.l.s4 1966171168
    %v1893 = vunpack.c.0.s8 %v1892
    %v1894 = vlaneseq
    %v1895 = vshrl.u32 %v1894, 7
    %v1896 = vsub.s32 %v1893, %v1895
    %v1897 = vrot.slane %v1881, %v1896
    %v1899 = vunpack.c.l.s4 1966171168
    %v1900 = vunpack.c.0.s8 %v1899
    %v1901 = vlaneseq
    %v1902 = vshrl.u32 %v1901, 7
    %v1903 = vsub.s32 %v1900, %v1902
    %v1904 = vrot.slane %v1888, %v1903
    %v1906 = vunpack.c.l.s4 1966171168
    %v1907 = vunpack.c.0.s8 %v1906
    %v1908 = vlaneseq
    %v1909 = vshrl.u32 %v1908, 7
    %v1910 = vsub.s32 %v1907, %v1909
    %v1911 = vrot.slane %v1889, %v1910
    %v1913 = vunpack.c.l.s4 1966171168
    %v1914 = vunpack.c.0.s8 %v1913
    %v1915 = vlaneseq
    %v1916 = vshrl.u32 %v1915, 7
    %v1917 = vsub.s32 %v1914, %v1916
    %v1918 = vrot.slane %v1890, %v1917
    %v1919 = vcombine.high %v1897, %v1897
    %v1920 = vcombine.high %v1904, %v1904
    %v1921 = vcombine.high %v1911, %v1911
    %v1922 = vcombine.high %v1918, %v1918
    %v1923 = vcombine.high %v1261, %v1261
    %v1925 = vunpack.c.l.s4 1966171168
    %v1926 = vunpack.c.0.s8 %v1925
    %v1927 = vlaneseq
    %v1928 = vshrl.u32 %v1927, 7
    %v1929 = vsub.s32 %v1926, %v1928
    %v1930 = vrot.slane %v1261, %v1929
    %v1932 = vunpack.c.l.s4 1966171168
    %v1933 = vunpack.c.0.s8 %v1932
    %v1934 = vlaneseq
    %v1935 = vshrl.u32 %v1934, 7
    %v1936 = vsub.s32 %v1933, %v1935
    %v1937 = vrot.slane %v1923, %v1936
    %v1938 = vcombine.high %v1930, %v1930
    %v1939 = vcombine.high %v1937, %v1937
    %v1941 = vunpack.c.l.s4 1966171168
    %v1942 = vunpack.c.0.s8 %v1941
    %v1943 = vlaneseq
    %v1944 = vshrl.u32 %v1943, 7
    %v1945 = vsub.s32 %v1942, %v1944
    %v1946 = vrot.slane %v1930, %v1945
    %v1948 = vunpack.c.l.s4 1966171168
    %v1949 = vunpack.c.0.s8 %v1948
    %v1950 = vlaneseq
    %v1951 = vshrl.u32 %v1950, 7
    %v1952 = vsub.s32 %v1949, %v1951
    %v1953 = vrot.slane %v1937, %v1952
    %v1955 = vunpack.c.l.s4 1966171168
    %v1956 = vunpack.c.0.s8 %v1955
    %v1957 = vlaneseq
    %v1958 = vshrl.u32 %v1957, 7
    %v1959 = vsub.s32 %v1956, %v1958
    %v1960 = vrot.slane %v1938, %v1959
    %v1962 = vunpack.c.l.s4 1966171168
    %v1963 = vunpack.c.0.s8 %v1962
    %v1964 = vlaneseq
    %v1965 = vshrl.u32 %v1964, 7
    %v1966 = vsub.s32 %v1963, %v1965
    %v1967 = vrot.slane %v1939, %v1966
    %v1968 = vcombine.high %v1946, %v1946
    %v1969 = vcombine.high %v1953, %v1953
    %v1970 = vcombine.high %v1960, %v1960
    %v1971 = vcombine.high %v1967, %v1967
    %v1972 = vcombine.high %v1267, %v1267
    %v1974 = vunpack.c.l.s4 1966171168
    %v1975 = vunpack.c.0.s8 %v1974
    %v1976 = vlaneseq
    %v1977 = vshrl.u32 %v1976, 7
    %v1978 = vsub.s32 %v1975, %v1977
    %v1979 = vrot.slane %v1267, %v1978
    %v1981 = vunpack.c.l.s4 1966171168
    %v1982 = vunpack.c.0.s8 %v1981
    %v1983 = vlaneseq
    %v1984 = vshrl.u32 %v1983, 7
    %v1985 = vsub.s32 %v1982, %v1984
    %v1986 = vrot.slane %v1972, %v1985
    %v1987 = vcombine.high %v1979, %v1979
    %v1988 = vcombine.high %v1986, %v1986
    %v1990 = vunpack.c.l.s4 1966171168
    %v1991 = vunpack.c.0.s8 %v1990
    %v1992 = vlaneseq
    %v1993 = vshrl.u32 %v1992, 7
    %v1994 = vsub.s32 %v1991, %v1993
    %v1995 = vrot.slane %v1979, %v1994
    %v1997 = vunpack.c.l.s4 1966171168
    %v1998 = vunpack.c.0.s8 %v1997
    %v1999 = vlaneseq
    %v2000 = vshrl.u32 %v1999, 7
    %v2001 = vsub.s32 %v1998, %v2000
    %v2002 = vrot.slane %v1986, %v2001
    %v2004 = vunpack.c.l.s4 1966171168
    %v2005 = vunpack.c.0.s8 %v2004
    %v2006 = vlaneseq
    %v2007 = vshrl.u32 %v2006, 7
    %v2008 = vsub.s32 %v2005, %v2007
    %v2009 = vrot.slane %v1987, %v2008
    %v2011 = vunpack.c.l.s4 1966171168
    %v2012 = vunpack.c.0.s8 %v2011
    %v2013 = vlaneseq
    %v2014 = vshrl.u32 %v2013, 7
    %v2015 = vsub.s32 %v2012, %v2014
    %v2016 = vrot.slane %v1988, %v2015
    %v2017 = vcombine.high %v1995, %v1995
    %v2018 = vcombine.high %v2002, %v2002
    %v2019 = vcombine.high %v2009, %v2009
    %v2020 = vcombine.high %v2016, %v2016
    %v2021 = vcombine.high %v1273, %v1273
    %v2023 = vunpack.c.l.s4 1966171168
    %v2024 = vunpack.c.0.s8 %v2023
    %v2025 = vlaneseq
    %v2026 = vshrl.u32 %v2025, 7
    %v2027 = vsub.s32 %v2024, %v2026
    %v2028 = vrot.slane %v1273, %v2027
    %v2030 = vunpack.c.l.s4 1966171168
    %v2031 = vunpack.c.0.s8 %v2030
    %v2032 = vlaneseq
    %v2033 = vshrl.u32 %v2032, 7
    %v2034 = vsub.s32 %v2031, %v2033
    %v2035 = vrot.slane %v2021, %v2034
    %v2036 = vcombine.high %v2028, %v2028
    %v2037 = vcombine.high %v2035, %v2035
    %v2039 = vunpack.c.l.s4 1966171168
    %v2040 = vunpack.c.0.s8 %v2039
    %v2041 = vlaneseq
    %v2042 = vshrl.u32 %v2041, 7
    %v2043 = vsub.s32 %v2040, %v2042
    %v2044 = vrot.slane %v2028, %v2043
    %v2046 = vunpack.c.l.s4 1966171168
    %v2047 = vunpack.c.0.s8 %v2046
    %v2048 = vlaneseq
    %v2049 = vshrl.u32 %v2048, 7
    %v2050 = vsub.s32 %v2047, %v2049
    %v2051 = vrot.slane %v2035, %v2050
    %v2053 = vunpack.c.l.s4 1966171168
    %v2054 = vunpack.c.0.s8 %v2053
    %v2055 = vlaneseq
    %v2056 = vshrl.u32 %v2055, 7
    %v2057 = vsub.s32 %v2054, %v2056
    %v2058 = vrot.slane %v2036, %v2057
    %v2060 = vunpack.c.l.s4 1966171168
    %v2061 = vunpack.c.0.s8 %v2060
    %v2062 = vlaneseq
    %v2063 = vshrl.u32 %v2062, 7
    %v2064 = vsub.s32 %v2061, %v2063
    %v2065 = vrot.slane %v2037, %v2064
    %v2066 = vcombine.high %v2044, %v2044
    %v2067 = vcombine.high %v2051, %v2051
    %v2068 = vcombine.high %v2058, %v2058
    %v2069 = vcombine.high %v2065, %v2065
    %v2070 = vcombine.high %v1845, %v1845
    %v2072 = vunpack.c.l.s4 1966171168
    %v2073 = vunpack.c.0.s8 %v2072
    %v2074 = vlaneseq
    %v2075 = vshrl.u32 %v2074, 7
    %v2076 = vsub.s32 %v2073, %v2075
    %v2077 = vrot.slane %v1845, %v2076
    %v2079 = vunpack.c.l.s4 1966171168
    %v2080 = vunpack.c.0.s8 %v2079
    %v2081 = vlaneseq
    %v2082 = vshrl.u32 %v2081, 7
    %v2083 = vsub.s32 %v2080, %v2082
    %v2084 = vrot.slane %v2070, %v2083
    %v2085 = vcombine.high %v2077, %v2077
    %v2086 = vcombine.high %v2084, %v2084
    %v2088 = vunpack.c.l.s4 1966171168
    %v2089 = vunpack.c.0.s8 %v2088
    %v2090 = vlaneseq
    %v2091 = vshrl.u32 %v2090, 7
    %v2092 = vsub.s32 %v2089, %v2091
    %v2093 = vrot.slane %v2077, %v2092
    %v2095 = vunpack.c.l.s4 1966171168
    %v2096 = vunpack.c.0.s8 %v2095
    %v2097 = vlaneseq
    %v2098 = vshrl.u32 %v2097, 7
    %v2099 = vsub.s32 %v2096, %v2098
    %v2100 = vrot.slane %v2084, %v2099
    %v2102 = vunpack.c.l.s4 1966171168
    %v2103 = vunpack.c.0.s8 %v2102
    %v2104 = vlaneseq
    %v2105 = vshrl.u32 %v2104, 7
    %v2106 = vsub.s32 %v2103, %v2105
    %v2107 = vrot.slane %v2085, %v2106
    %v2109 = vunpack.c.l.s4 1966171168
    %v2110 = vunpack.c.0.s8 %v2109
    %v2111 = vlaneseq
    %v2112 = vshrl.u32 %v2111, 7
    %v2113 = vsub.s32 %v2110, %v2112
    %v2114 = vrot.slane %v2086, %v2113
    %v2115 = vcombine.high %v2093, %v2093
    %v2116 = vcombine.high %v2100, %v2100
    %v2117 = vcombine.high %v2107, %v2107
    %v2118 = vcombine.high %v2114, %v2114
    %v2119 = vcombine.high %v1851, %v1851
    %v2121 = vunpack.c.l.s4 1966171168
    %v2122 = vunpack.c.0.s8 %v2121
    %v2123 = vlaneseq
    %v2124 = vshrl.u32 %v2123, 7
    %v2125 = vsub.s32 %v2122, %v2124
    %v2126 = vrot.slane %v1851, %v2125
    %v2128 = vunpack.c.l.s4 1966171168
    %v2129 = vunpack.c.0.s8 %v2128
    %v2130 = vlaneseq
    %v2131 = vshrl.u32 %v2130, 7
    %v2132 = vsub.s32 %v2129, %v2131
    %v2133 = vrot.slane %v2119, %v2132
    %v2134 = vcombine.high %v2126, %v2126
    %v2135 = vcombine.high %v2133, %v2133
    %v2137 = vunpack.c.l.s4 1966171168
    %v2138 = vunpack.c.0.s8 %v2137
    %v2139 = vlaneseq
    %v2140 = vshrl.u32 %v2139, 7
    %v2141 = vsub.s32 %v2138, %v2140
    %v2142 = vrot.slane %v2126, %v2141
    %v2144 = vunpack.c.l.s4 1966171168
    %v2145 = vunpack.c.0.s8 %v2144
    %v2146 = vlaneseq
    %v2147 = vshrl.u32 %v2146, 7
    %v2148 = vsub.s32 %v2145, %v2147
    %v2149 = vrot.slane %v2133, %v2148
    %v2151 = vunpack.c.l.s4 1966171168
    %v2152 = vunpack.c.0.s8 %v2151
    %v2153 = vlaneseq
    %v2154 = vshrl.u32 %v2153, 7
    %v2155 = vsub.s32 %v2152, %v2154
    %v2156 = vrot.slane %v2134, %v2155
    %v2158 = vunpack.c.l.s4 1966171168
    %v2159 = vunpack.c.0.s8 %v2158
    %v2160 = vlaneseq
    %v2161 = vshrl.u32 %v2160, 7
    %v2162 = vsub.s32 %v2159, %v2161
    %v2163 = vrot.slane %v2135, %v2162
    %v2164 = vcombine.high %v2142, %v2142
    %v2165 = vcombine.high %v2149, %v2149
    %v2166 = vcombine.high %v2156, %v2156
    %v2167 = vcombine.high %v2163, %v2163
    %v2168 = vcombine.high %v1857, %v1857
    %v2170 = vunpack.c.l.s4 1966171168
    %v2171 = vunpack.c.0.s8 %v2170
    %v2172 = vlaneseq
    %v2173 = vshrl.u32 %v2172, 7
    %v2174 = vsub.s32 %v2171, %v2173
    %v2175 = vrot.slane %v1857, %v2174
    %v2177 = vunpack.c.l.s4 1966171168
    %v2178 = vunpack.c.0.s8 %v2177
    %v2179 = vlaneseq
    %v2180 = vshrl.u32 %v2179, 7
    %v2181 = vsub.s32 %v2178, %v2180
    %v2182 = vrot.slane %v2168, %v2181
    %v2183 = vcombine.high %v2175, %v2175
    %v2184 = vcombine.high %v2182, %v2182
    %v2186 = vunpack.c.l.s4 1966171168
    %v2187 = vunpack.c.0.s8 %v2186
    %v2188 = vlaneseq
    %v2189 = vshrl.u32 %v2188, 7
    %v2190 = vsub.s32 %v2187, %v2189
    %v2191 = vrot.slane %v2175, %v2190
    %v2193 = vunpack.c.l.s4 1966171168
    %v2194 = vunpack.c.0.s8 %v2193
    %v2195 = vlaneseq
    %v2196 = vshrl.u32 %v2195, 7
    %v2197 = vsub.s32 %v2194, %v2196
    %v2198 = vrot.slane %v2182, %v2197
    %v2200 = vunpack.c.l.s4 1966171168
    %v2201 = vunpack.c.0.s8 %v2200
    %v2202 = vlaneseq
    %v2203 = vshrl.u32 %v2202, 7
    %v2204 = vsub.s32 %v2201, %v2203
    %v2205 = vrot.slane %v2183, %v2204
    %v2207 = vunpack.c.l.s4 1966171168
    %v2208 = vunpack.c.0.s8 %v2207
    %v2209 = vlaneseq
    %v2210 = vshrl.u32 %v2209, 7
    %v2211 = vsub.s32 %v2208, %v2210
    %v2212 = vrot.slane %v2184, %v2211
    %v2213 = vcombine.high %v2191, %v2191
    %v2214 = vcombine.high %v2198, %v2198
    %v2215 = vcombine.high %v2205, %v2205
    %v2216 = vcombine.high %v2212, %v2212
    %v2217 = vcombine.high %v1863, %v1863
    %v2219 = vunpack.c.l.s4 1966171168
    %v2220 = vunpack.c.0.s8 %v2219
    %v2221 = vlaneseq
    %v2222 = vshrl.u32 %v2221, 7
    %v2223 = vsub.s32 %v2220, %v2222
    %v2224 = vrot.slane %v1863, %v2223
    %v2226 = vunpack.c.l.s4 1966171168
    %v2227 = vunpack.c.0.s8 %v2226
    %v2228 = vlaneseq
    %v2229 = vshrl.u32 %v2228, 7
    %v2230 = vsub.s32 %v2227, %v2229
    %v2231 = vrot.slane %v2217, %v2230
    %v2232 = vcombine.high %v2224, %v2224
    %v2233 = vcombine.high %v2231, %v2231
    %v2235 = vunpack.c.l.s4 1966171168
    %v2236 = vunpack.c.0.s8 %v2235
    %v2237 = vlaneseq
    %v2238 = vshrl.u32 %v2237, 7
    %v2239 = vsub.s32 %v2236, %v2238
    %v2240 = vrot.slane %v2224, %v2239
    %v2242 = vunpack.c.l.s4 1966171168
    %v2243 = vunpack.c.0.s8 %v2242
    %v2244 = vlaneseq
    %v2245 = vshrl.u32 %v2244, 7
    %v2246 = vsub.s32 %v2243, %v2245
    %v2247 = vrot.slane %v2231, %v2246
    %v2249 = vunpack.c.l.s4 1966171168
    %v2250 = vunpack.c.0.s8 %v2249
    %v2251 = vlaneseq
    %v2252 = vshrl.u32 %v2251, 7
    %v2253 = vsub.s32 %v2250, %v2252
    %v2254 = vrot.slane %v2232, %v2253
    %v2256 = vunpack.c.l.s4 1966171168
    %v2257 = vunpack.c.0.s8 %v2256
    %v2258 = vlaneseq
    %v2259 = vshrl.u32 %v2258, 7
    %v2260 = vsub.s32 %v2257, %v2259
    %v2261 = vrot.slane %v2233, %v2260
    %v2262 = vcombine.high %v2240, %v2240
    %v2263 = vcombine.high %v2247, %v2247
    %v2264 = vcombine.high %v2254, %v2254
    %v2265 = vcombine.high %v2261, %v2261
    %v2266 = vlaneseq
    %v2267 = vshrl.u32 %v2266, 7
    %v2268 = vsub.s32 0, %v2267
    %v2269 = vrot.slane %v1897, %v2268
    %v2270 = vlaneseq
    %v2271 = vshrl.u32 %v2270, 7
    %v2272 = vsub.s32 0, %v2271
    %v2273 = vrot.slane %v1911, %v2272
    %v2274 = vlaneseq
    %v2275 = vshrl.u32 %v2274, 7
    %v2276 = vsub.s32 0, %v2275
    %v2277 = vrot.slane %v1919, %v2276
    %v2278 = vlaneseq
    %v2279 = vshrl.u32 %v2278, 7
    %v2280 = vsub.s32 0, %v2279
    %v2281 = vrot.slane %v1921, %v2280
    %v2282 = vlaneseq
    %v2283 = vshrl.u32 %v2282, 7
    %v2284 = vsub.s32 0, %v2283
    %v2285 = vrot.slane %v1904, %v2284
    %v2286 = vlaneseq
    %v2287 = vshrl.u32 %v2286, 7
    %v2288 = vsub.s32 0, %v2287
    %v2289 = vrot.slane %v1918, %v2288
    %v2290 = vlaneseq
    %v2291 = vshrl.u32 %v2290, 7
    %v2292 = vsub.s32 0, %v2291
    %v2293 = vrot.slane %v1920, %v2292
    %v2294 = vlaneseq
    %v2295 = vshrl.u32 %v2294, 7
    %v2296 = vsub.s32 0, %v2295
    %v2297 = vrot.slane %v1922, %v2296
    %v2298 = vlaneseq
    %v2299 = vshrl.u32 %v2298, 7
    %v2300 = vsub.s32 0, %v2299
    %v2301 = vrot.slane %v1946, %v2300
    %v2302 = vlaneseq
    %v2303 = vshrl.u32 %v2302, 7
    %v2304 = vsub.s32 0, %v2303
    %v2305 = vrot.slane %v1960, %v2304
    %v2306 = vlaneseq
    %v2307 = vshrl.u32 %v2306, 7
    %v2308 = vsub.s32 0, %v2307
    %v2309 = vrot.slane %v1968, %v2308
    %v2310 = vlaneseq
    %v2311 = vshrl.u32 %v2310, 7
    %v2312 = vsub.s32 0, %v2311
    %v2313 = vrot.slane %v1970, %v2312
    %v2314 = vlaneseq
    %v2315 = vshrl.u32 %v2314, 7
    %v2316 = vsub.s32 0, %v2315
    %v2317 = vrot.slane %v1953, %v2316
    %v2318 = vlaneseq
    %v2319 = vshrl.u32 %v2318, 7
    %v2320 = vsub.s32 0, %v2319
    %v2321 = vrot.slane %v1967, %v2320
    %v2322 = vlaneseq
    %v2323 = vshrl.u32 %v2322, 7
    %v2324 = vsub.s32 0, %v2323
    %v2325 = vrot.slane %v1969, %v2324
    %v2326 = vlaneseq
    %v2327 = vshrl.u32 %v2326, 7
    %v2328 = vsub.s32 0, %v2327
    %v2329 = vrot.slane %v1971, %v2328
    %v2330 = vlaneseq
    %v2331 = vshrl.u32 %v2330, 7
    %v2332 = vsub.s32 0, %v2331
    %v2333 = vrot.slane %v1995, %v2332
    %v2334 = vlaneseq
    %v2335 = vshrl.u32 %v2334, 7
    %v2336 = vsub.s32 0, %v2335
    %v2337 = vrot.slane %v2009, %v2336
    %v2338 = vlaneseq
    %v2339 = vshrl.u32 %v2338, 7
    %v2340 = vsub.s32 0, %v2339
    %v2341 = vrot.slane %v2017, %v2340
    %v2342 = vlaneseq
    %v2343 = vshrl.u32 %v2342, 7
    %v2344 = vsub.s32 0, %v2343
    %v2345 = vrot.slane %v2019, %v2344
    %v2346 = vlaneseq
    %v2347 = vshrl.u32 %v2346, 7
    %v2348 = vsub.s32 0, %v2347
    %v2349 = vrot.slane %v2002, %v2348
    %v2350 = vlaneseq
    %v2351 = vshrl.u32 %v2350, 7
    %v2352 = vsub.s32 0, %v2351
    %v2353 = vrot.slane %v2016, %v2352
    %v2354 = vlaneseq
    %v2355 = vshrl.u32 %v2354, 7
    %v2356 = vsub.s32 0, %v2355
    %v2357 = vrot.slane %v2018, %v2356
    %v2358 = vlaneseq
    %v2359 = vshrl.u32 %v2358, 7
    %v2360 = vsub.s32 0, %v2359
    %v2361 = vrot.slane %v2020, %v2360
    %v2362 = vlaneseq
    %v2363 = vshrl.u32 %v2362, 7
    %v2364 = vsub.s32 0, %v2363
    %v2365 = vrot.slane %v2044, %v2364
    %v2366 = vlaneseq
    %v2367 = vshrl.u32 %v2366, 7
    %v2368 = vsub.s32 0, %v2367
    %v2369 = vrot.slane %v2058, %v2368
    %v2370 = vlaneseq
    %v2371 = vshrl.u32 %v2370, 7
    %v2372 = vsub.s32 0, %v2371
    %v2373 = vrot.slane %v2066, %v2372
    %v2374 = vlaneseq
    %v2375 = vshrl.u32 %v2374, 7
    %v2376 = vsub.s32 0, %v2375
    %v2377 = vrot.slane %v2068, %v2376
    %v2378 = vlaneseq
    %v2379 = vshrl.u32 %v2378, 7
    %v2380 = vsub.s32 0, %v2379
    %v2381 = vrot.slane %v2051, %v2380
    %v2382 = vlaneseq
    %v2383 = vshrl.u32 %v2382, 7
    %v2384 = vsub.s32 0, %v2383
    %v2385 = vrot.slane %v2065, %v2384
    %v2386 = vlaneseq
    %v2387 = vshrl.u32 %v2386, 7
    %v2388 = vsub.s32 0, %v2387
    %v2389 = vrot.slane %v2067, %v2388
    %v2390 = vlaneseq
    %v2391 = vshrl.u32 %v2390, 7
    %v2392 = vsub.s32 0, %v2391
    %v2393 = vrot.slane %v2069, %v2392
    %v2394 = vlaneseq
    %v2395 = vshrl.u32 %v2394, 7
    %v2396 = vsub.s32 0, %v2395
    %v2397 = vrot.slane %v2093, %v2396
    %v2398 = vlaneseq
    %v2399 = vshrl.u32 %v2398, 7
    %v2400 = vsub.s32 0, %v2399
    %v2401 = vrot.slane %v2107, %v2400
    %v2402 = vlaneseq
    %v2403 = vshrl.u32 %v2402, 7
    %v2404 = vsub.s32 0, %v2403
    %v2405 = vrot.slane %v2115, %v2404
    %v2406 = vlaneseq
    %v2407 = vshrl.u32 %v2406, 7
    %v2408 = vsub.s32 0, %v2407
    %v2409 = vrot.slane %v2117, %v2408
    %v2410 = vlaneseq
    %v2411 = vshrl.u32 %v2410, 7
    %v2412 = vsub.s32 0, %v2411
    %v2413 = vrot.slane %v2100, %v2412
    %v2414 = vlaneseq
    %v2415 = vshrl.u32 %v2414, 7
    %v2416 = vsub.s32 0, %v2415
    %v2417 = vrot.slane %v2114, %v2416
    %v2418 = vlaneseq
    %v2419 = vshrl.u32 %v2418, 7
    %v2420 = vsub.s32 0, %v2419
    %v2421 = vrot.slane %v2116, %v2420
    %v2422 = vlaneseq
    %v2423 = vshrl.u32 %v2422, 7
    %v2424 = vsub.s32 0, %v2423
    %v2425 = vrot.slane %v2118, %v2424
    %v2426 = vlaneseq
    %v2427 = vshrl.u32 %v2426, 7
    %v2428 = vsub.s32 0, %v2427
    %v2429 = vrot.slane %v2142, %v2428
    %v2430 = vlaneseq
    %v2431 = vshrl.u32 %v2430, 7
    %v2432 = vsub.s32 0, %v2431
    %v2433 = vrot.slane %v2156, %v2432
    %v2434 = vlaneseq
    %v2435 = vshrl.u32 %v2434, 7
    %v2436 = vsub.s32 0, %v2435
    %v2437 = vrot.slane %v2164, %v2436
    %v2438 = vlaneseq
    %v2439 = vshrl.u32 %v2438, 7
    %v2440 = vsub.s32 0, %v2439
    %v2441 = vrot.slane %v2166, %v2440
    %v2442 = vlaneseq
    %v2443 = vshrl.u32 %v2442, 7
    %v2444 = vsub.s32 0, %v2443
    %v2445 = vrot.slane %v2149, %v2444
    %v2446 = vlaneseq
    %v2447 = vshrl.u32 %v2446, 7
    %v2448 = vsub.s32 0, %v2447
    %v2449 = vrot.slane %v2163, %v2448
    %v2450 = vlaneseq
    %v2451 = vshrl.u32 %v2450, 7
    %v2452 = vsub.s32 0, %v2451
    %v2453 = vrot.slane %v2165, %v2452
    %v2454 = vlaneseq
    %v2455 = vshrl.u32 %v2454, 7
    %v2456 = vsub.s32 0, %v2455
    %v2457 = vrot.slane %v2167, %v2456
    %v2458 = vlaneseq
    %v2459 = vshrl.u32 %v2458, 7
    %v2460 = vsub.s32 0, %v2459
    %v2461 = vrot.slane %v2191, %v2460
    %v2462 = vlaneseq
    %v2463 = vshrl.u32 %v2462, 7
    %v2464 = vsub.s32 0, %v2463
    %v2465 = vrot.slane %v2205, %v2464
    %v2466 = vlaneseq
    %v2467 = vshrl.u32 %v2466, 7
    %v2468 = vsub.s32 0, %v2467
    %v2469 = vrot.slane %v2213, %v2468
    %v2470 = vlaneseq
    %v2471 = vshrl.u32 %v2470, 7
    %v2472 = vsub.s32 0, %v2471
    %v2473 = vrot.slane %v2215, %v2472
    %v2474 = vlaneseq
    %v2475 = vshrl.u32 %v2474, 7
    %v2476 = vsub.s32 0, %v2475
    %v2477 = vrot.slane %v2198, %v2476
    %v2478 = vlaneseq
    %v2479 = vshrl.u32 %v2478, 7
    %v2480 = vsub.s32 0, %v2479
    %v2481 = vrot.slane %v2212, %v2480
    %v2482 = vlaneseq
    %v2483 = vshrl.u32 %v2482, 7
    %v2484 = vsub.s32 0, %v2483
    %v2485 = vrot.slane %v2214, %v2484
    %v2486 = vlaneseq
    %v2487 = vshrl.u32 %v2486, 7
    %v2488 = vsub.s32 0, %v2487
    %v2489 = vrot.slane %v2216, %v2488
    %v2490 = vlaneseq
    %v2491 = vshrl.u32 %v2490, 7
    %v2492 = vsub.s32 0, %v2491
    %v2493 = vrot.slane %v2240, %v2492
    %v2494 = vlaneseq
    %v2495 = vshrl.u32 %v2494, 7
    %v2496 = vsub.s32 0, %v2495
    %v2497 = vrot.slane %v2254, %v2496
    %v2498 = vlaneseq
    %v2499 = vshrl.u32 %v2498, 7
    %v2500 = vsub.s32 0, %v2499
    %v2501 = vrot.slane %v2262, %v2500
    %v2502 = vlaneseq
    %v2503 = vshrl.u32 %v2502, 7
    %v2504 = vsub.s32 0, %v2503
    %v2505 = vrot.slane %v2264, %v2504
    %v2506 = vlaneseq
    %v2507 = vshrl.u32 %v2506, 7
    %v2508 = vsub.s32 0, %v2507
    %v2509 = vrot.slane %v2247, %v2508
    %v2510 = vlaneseq
    %v2511 = vshrl.u32 %v2510, 7
    %v2512 = vsub.s32 0, %v2511
    %v2513 = vrot.slane %v2261, %v2512
    %v2514 = vlaneseq
    %v2515 = vshrl.u32 %v2514, 7
    %v2516 = vsub.s32 0, %v2515
    %v2517 = vrot.slane %v2263, %v2516
    %v2518 = vlaneseq
    %v2519 = vshrl.u32 %v2518, 7
    %v2520 = vsub.s32 0, %v2519
    %v2521 = vrot.slane %v2265, %v2520
    %v2586 = vcombine.low %v2269, %v2277
    %v2587 = vcombine.high %v2269, %v2277
    %v2589 = vunpack.c.l.s4 1983009808
    %v2590 = vunpack.c.0.s8 %v2589
    %v2591 = vlaneseq
    %v2592 = vshrl.u32 %v2591, 7
    %v2593 = vsub.s32 %v2590, %v2592
    %v2594 = vrot.slane %v2586, %v2593
    %v2596 = vunpack.c.l.s4 1983009808
    %v2597 = vunpack.c.0.s8 %v2596
    %v2598 = vlaneseq
    %v2599 = vshrl.u32 %v2598, 7
    %v2600 = vsub.s32 %v2597, %v2599
    %v2601 = vrot.slane %v2587, %v2600
    %v2602 = vcombine.low %v2273, %v2281
    %v2603 = vcombine.high %v2273, %v2281
    %v2605 = vunpack.c.l.s4 1983009808
    %v2606 = vunpack.c.0.s8 %v2605
    %v2607 = vlaneseq
    %v2608 = vshrl.u32 %v2607, 7
    %v2609 = vsub.s32 %v2606, %v2608
    %v2610 = vrot.slane %v2602, %v2609
    %v2612 = vunpack.c.l.s4 1983009808
    %v2613 = vunpack.c.0.s8 %v2612
    %v2614 = vlaneseq
    %v2615 = vshrl.u32 %v2614, 7
    %v2616 = vsub.s32 %v2613, %v2615
    %v2617 = vrot.slane %v2603, %v2616
    %v2618 = vcombine.low %v2285, %v2293
    %v2619 = vcombine.high %v2285, %v2293
    %v2621 = vunpack.c.l.s4 1983009808
    %v2622 = vunpack.c.0.s8 %v2621
    %v2623 = vlaneseq
    %v2624 = vshrl.u32 %v2623, 7
    %v2625 = vsub.s32 %v2622, %v2624
    %v2626 = vrot.slane %v2618, %v2625
    %v2628 = vunpack.c.l.s4 1983009808
    %v2629 = vunpack.c.0.s8 %v2628
    %v2630 = vlaneseq
    %v2631 = vshrl.u32 %v2630, 7
    %v2632 = vsub.s32 %v2629, %v2631
    %v2633 = vrot.slane %v2619, %v2632
    %v2634 = vcombine.low %v2289, %v2297
    %v2635 = vcombine.high %v2289, %v2297
    %v2637 = vunpack.c.l.s4 1983009808
    %v2638 = vunpack.c.0.s8 %v2637
    %v2639 = vlaneseq
    %v2640 = vshrl.u32 %v2639, 7
    %v2641 = vsub.s32 %v2638, %v2640
    %v2642 = vrot.slane %v2634, %v2641
    %v2644 = vunpack.c.l.s4 1983009808
    %v2645 = vunpack.c.0.s8 %v2644
    %v2646 = vlaneseq
    %v2647 = vshrl.u32 %v2646, 7
    %v2648 = vsub.s32 %v2645, %v2647
    %v2649 = vrot.slane %v2635, %v2648
    %v2650 = vcombine.low %v2594, %v2610
    %v2651 = vcombine.high %v2594, %v2610
    %v2653 = vunpack.c.l.s4 1934713408
    %v2654 = vunpack.c.0.s8 %v2653
    %v2655 = vlaneseq
    %v2656 = vshrl.u32 %v2655, 7
    %v2657 = vsub.s32 %v2654, %v2656
    %v2658 = vrot.slane %v2650, %v2657
    %v2660 = vunpack.c.l.s4 1934713408
    %v2661 = vunpack.c.0.s8 %v2660
    %v2662 = vlaneseq
    %v2663 = vshrl.u32 %v2662, 7
    %v2664 = vsub.s32 %v2661, %v2663
    %v2665 = vrot.slane %v2651, %v2664
    %v2666 = vcombine.low %v2601, %v2617
    %v2667 = vcombine.high %v2601, %v2617
    %v2669 = vunpack.c.l.s4 1934713408
    %v2670 = vunpack.c.0.s8 %v2669
    %v2671 = vlaneseq
    %v2672 = vshrl.u32 %v2671, 7
    %v2673 = vsub.s32 %v2670, %v2672
    %v2674 = vrot.slane %v2666, %v2673
    %v2676 = vunpack.c.l.s4 1934713408
    %v2677 = vunpack.c.0.s8 %v2676
    %v2678 = vlaneseq
    %v2679 = vshrl.u32 %v2678, 7
    %v2680 = vsub.s32 %v2677, %v2679
    %v2681 = vrot.slane %v2667, %v2680
    %v2682 = vcombine.low %v2626, %v2642
    %v2683 = vcombine.high %v2626, %v2642
    %v2685 = vunpack.c.l.s4 1934713408
    %v2686 = vunpack.c.0.s8 %v2685
    %v2687 = vlaneseq
    %v2688 = vshrl.u32 %v2687, 7
    %v2689 = vsub.s32 %v2686, %v2688
    %v2690 = vrot.slane %v2682, %v2689
    %v2692 = vunpack.c.l.s4 1934713408
    %v2693 = vunpack.c.0.s8 %v2692
    %v2694 = vlaneseq
    %v2695 = vshrl.u32 %v2694, 7
    %v2696 = vsub.s32 %v2693, %v2695
    %v2697 = vrot.slane %v2683, %v2696
    %v2698 = vcombine.low %v2633, %v2649
    %v2699 = vcombine.high %v2633, %v2649
    %v2701 = vunpack.c.l.s4 1934713408
    %v2702 = vunpack.c.0.s8 %v2701
    %v2703 = vlaneseq
    %v2704 = vshrl.u32 %v2703, 7
    %v2705 = vsub.s32 %v2702, %v2704
    %v2706 = vrot.slane %v2698, %v2705
    %v2708 = vunpack.c.l.s4 1934713408
    %v2709 = vunpack.c.0.s8 %v2708
    %v2710 = vlaneseq
    %v2711 = vshrl.u32 %v2710, 7
    %v2712 = vsub.s32 %v2709, %v2711
    %v2713 = vrot.slane %v2699, %v2712
    %v2714 = vcombine.low %v2658, %v2690
    %v2715 = vcombine.high %v2658, %v2690
    %v2716 = vcombine.low %v2665, %v2697
    %v2717 = vcombine.high %v2665, %v2697
    %v2718 = vcombine.low %v2674, %v2706
    %v2719 = vcombine.high %v2674, %v2706
    %v2720 = vcombine.low %v2681, %v2713
    %v2721 = vcombine.high %v2681, %v2713
    %v2722 = vcombine.low %v2301, %v2309
    %v2723 = vcombine.high %v2301, %v2309
    %v2725 = vunpack.c.l.s4 1983009808
    %v2726 = vunpack.c.0.s8 %v2725
    %v2727 = vlaneseq
    %v2728 = vshrl.u32 %v2727, 7
    %v2729 = vsub.s32 %v2726, %v2728
    %v2730 = vrot.slane %v2722, %v2729
    %v2732 = vunpack.c.l.s4 1983009808
    %v2733 = vunpack.c.0.s8 %v2732
    %v2734 = vlaneseq
    %v2735 = vshrl.u32 %v2734, 7
    %v2736 = vsub.s32 %v2733, %v2735
    %v2737 = vrot.slane %v2723, %v2736
    %v2738 = vcombine.low %v2305, %v2313
    %v2739 = vcombine.high %v2305, %v2313
    %v2741 = vunpack.c.l.s4 1983009808
    %v2742 = vunpack.c.0.s8 %v2741
    %v2743 = vlaneseq
    %v2744 = vshrl.u32 %v2743, 7
    %v2745 = vsub.s32 %v2742, %v2744
    %v2746 = vrot.slane %v2738, %v2745
    %v2748 = vunpack.c.l.s4 1983009808
    %v2749 = vunpack.c.0.s8 %v2748
    %v2750 = vlaneseq
    %v2751 = vshrl.u32 %v2750, 7
    %v2752 = vsub.s32 %v2749, %v2751
    %v2753 = vrot.slane %v2739, %v2752
    %v2754 = vcombine.low %v2317, %v2325
    %v2755 = vcombine.high %v2317, %v2325
    %v2757 = vunpack.c.l.s4 1983009808
    %v2758 = vunpack.c.0.s8 %v2757
    %v2759 = vlaneseq
    %v2760 = vshrl.u32 %v2759, 7
    %v2761 = vsub.s32 %v2758, %v2760
    %v2762 = vrot.slane %v2754, %v2761
    %v2764 = vunpack.c.l.s4 1983009808
    %v2765 = vunpack.c.0.s8 %v2764
    %v2766 = vlaneseq
    %v2767 = vshrl.u32 %v2766, 7
    %v2768 = vsub.s32 %v2765, %v2767
    %v2769 = vrot.slane %v2755, %v2768
    %v2770 = vcombine.low %v2321, %v2329
    %v2771 = vcombine.high %v2321, %v2329
    %v2773 = vunpack.c.l.s4 1983009808
    %v2774 = vunpack.c.0.s8 %v2773
    %v2775 = vlaneseq
    %v2776 = vshrl.u32 %v2775, 7
    %v2777 = vsub.s32 %v2774, %v2776
    %v2778 = vrot.slane %v2770, %v2777
    %v2780 = vunpack.c.l.s4 1983009808
    %v2781 = vunpack.c.0.s8 %v2780
    %v2782 = vlaneseq
    %v2783 = vshrl.u32 %v2782, 7
    %v2784 = vsub.s32 %v2781, %v2783
    %v2785 = vrot.slane %v2771, %v2784
    %v2786 = vcombine.low %v2730, %v2746
    %v2787 = vcombine.high %v2730, %v2746
    %v2789 = vunpack.c.l.s4 1934713408
    %v2790 = vunpack.c.0.s8 %v2789
    %v2791 = vlaneseq
    %v2792 = vshrl.u32 %v2791, 7
    %v2793 = vsub.s32 %v2790, %v2792
    %v2794 = vrot.slane %v2786, %v2793
    %v2796 = vunpack.c.l.s4 1934713408
    %v2797 = vunpack.c.0.s8 %v2796
    %v2798 = vlaneseq
    %v2799 = vshrl.u32 %v2798, 7
    %v2800 = vsub.s32 %v2797, %v2799
    %v2801 = vrot.slane %v2787, %v2800
    %v2802 = vcombine.low %v2737, %v2753
    %v2803 = vcombine.high %v2737, %v2753
    %v2805 = vunpack.c.l.s4 1934713408
    %v2806 = vunpack.c.0.s8 %v2805
    %v2807 = vlaneseq
    %v2808 = vshrl.u32 %v2807, 7
    %v2809 = vsub.s32 %v2806, %v2808
    %v2810 = vrot.slane %v2802, %v2809
    %v2812 = vunpack.c.l.s4 1934713408
    %v2813 = vunpack.c.0.s8 %v2812
    %v2814 = vlaneseq
    %v2815 = vshrl.u32 %v2814, 7
    %v2816 = vsub.s32 %v2813, %v2815
    %v2817 = vrot.slane %v2803, %v2816
    %v2818 = vcombine.low %v2762, %v2778
    %v2819 = vcombine.high %v2762, %v2778
    %v2821 = vunpack.c.l.s4 1934713408
    %v2822 = vunpack.c.0.s8 %v2821
    %v2823 = vlaneseq
    %v2824 = vshrl.u32 %v2823, 7
    %v2825 = vsub.s32 %v2822, %v2824
    %v2826 = vrot.slane %v2818, %v2825
    %v2828 = vunpack.c.l.s4 1934713408
    %v2829 = vunpack.c.0.s8 %v2828
    %v2830 = vlaneseq
    %v2831 = vshrl.u32 %v2830, 7
    %v2832 = vsub.s32 %v2829, %v2831
    %v2833 = vrot.slane %v2819, %v2832
    %v2834 = vcombine.low %v2769, %v2785
    %v2835 = vcombine.high %v2769, %v2785
    %v2837 = vunpack.c.l.s4 1934713408
    %v2838 = vunpack.c.0.s8 %v2837
    %v2839 = vlaneseq
    %v2840 = vshrl.u32 %v2839, 7
    %v2841 = vsub.s32 %v2838, %v2840
    %v2842 = vrot.slane %v2834, %v2841
    %v2844 = vunpack.c.l.s4 1934713408
    %v2845 = vunpack.c.0.s8 %v2844
    %v2846 = vlaneseq
    %v2847 = vshrl.u32 %v2846, 7
    %v2848 = vsub.s32 %v2845, %v2847
    %v2849 = vrot.slane %v2835, %v2848
    %v2850 = vcombine.low %v2794, %v2826
    %v2851 = vcombine.high %v2794, %v2826
    %v2852 = vcombine.low %v2801, %v2833
    %v2853 = vcombine.high %v2801, %v2833
    %v2854 = vcombine.low %v2810, %v2842
    %v2855 = vcombine.high %v2810, %v2842
    %v2856 = vcombine.low %v2817, %v2849
    %v2857 = vcombine.high %v2817, %v2849
    %v2858 = vcombine.low %v2333, %v2341
    %v2859 = vcombine.high %v2333, %v2341
    %v2861 = vunpack.c.l.s4 1983009808
    %v2862 = vunpack.c.0.s8 %v2861
    %v2863 = vlaneseq
    %v2864 = vshrl.u32 %v2863, 7
    %v2865 = vsub.s32 %v2862, %v2864
    %v2866 = vrot.slane %v2858, %v2865
    %v2868 = vunpack.c.l.s4 1983009808
    %v2869 = vunpack.c.0.s8 %v2868
    %v2870 = vlaneseq
    %v2871 = vshrl.u32 %v2870, 7
    %v2872 = vsub.s32 %v2869, %v2871
    %v2873 = vrot.slane %v2859, %v2872
    %v2874 = vcombine.low %v2337, %v2345
    %v2875 = vcombine.high %v2337, %v2345
    %v2877 = vunpack.c.l.s4 1983009808
    %v2878 = vunpack.c.0.s8 %v2877
    %v2879 = vlaneseq
    %v2880 = vshrl.u32 %v2879, 7
    %v2881 = vsub.s32 %v2878, %v2880
    %v2882 = vrot.slane %v2874, %v2881
    %v2884 = vunpack.c.l.s4 1983009808
    %v2885 = vunpack.c.0.s8 %v2884
    %v2886 = vlaneseq
    %v2887 = vshrl.u32 %v2886, 7
    %v2888 = vsub.s32 %v2885, %v2887
    %v2889 = vrot.slane %v2875, %v2888
    %v2890 = vcombine.low %v2349, %v2357
    %v2891 = vcombine.high %v2349, %v2357
    %v2893 = vunpack.c.l.s4 1983009808
    %v2894 = vunpack.c.0.s8 %v2893
    %v2895 = vlaneseq
    %v2896 = vshrl.u32 %v2895, 7
    %v2897 = vsub.s32 %v2894, %v2896
    %v2898 = vrot.slane %v2890, %v2897
    %v2900 = vunpack.c.l.s4 1983009808
    %v2901 = vunpack.c.0.s8 %v2900
    %v2902 = vlaneseq
    %v2903 = vshrl.u32 %v2902, 7
    %v2904 = vsub.s32 %v2901, %v2903
    %v2905 = vrot.slane %v2891, %v2904
    %v2906 = vcombine.low %v2353, %v2361
    %v2907 = vcombine.high %v2353, %v2361
    %v2909 = vunpack.c.l.s4 1983009808
    %v2910 = vunpack.c.0.s8 %v2909
    %v2911 = vlaneseq
    %v2912 = vshrl.u32 %v2911, 7
    %v2913 = vsub.s32 %v2910, %v2912
    %v2914 = vrot.slane %v2906, %v2913
    %v2916 = vunpack.c.l.s4 1983009808
    %v2917 = vunpack.c.0.s8 %v2916
    %v2918 = vlaneseq
    %v2919 = vshrl.u32 %v2918, 7
    %v2920 = vsub.s32 %v2917, %v2919
    %v2921 = vrot.slane %v2907, %v2920
    %v2922 = vcombine.low %v2866, %v2882
    %v2923 = vcombine.high %v2866, %v2882
    %v2925 = vunpack.c.l.s4 1934713408
    %v2926 = vunpack.c.0.s8 %v2925
    %v2927 = vlaneseq
    %v2928 = vshrl.u32 %v2927, 7
    %v2929 = vsub.s32 %v2926, %v2928
    %v2930 = vrot.slane %v2922, %v2929
    %v2932 = vunpack.c.l.s4 1934713408
    %v2933 = vunpack.c.0.s8 %v2932
    %v2934 = vlaneseq
    %v2935 = vshrl.u32 %v2934, 7
    %v2936 = vsub.s32 %v2933, %v2935
    %v2937 = vrot.slane %v2923, %v2936
    %v2938 = vcombine.low %v2873, %v2889
    %v2939 = vcombine.high %v2873, %v2889
    %v2941 = vunpack.c.l.s4 1934713408
    %v2942 = vunpack.c.0.s8 %v2941
    %v2943 = vlaneseq
    %v2944 = vshrl.u32 %v2943, 7
    %v2945 = vsub.s32 %v2942, %v2944
    %v2946 = vrot.slane %v2938, %v2945
    %v2948 = vunpack.c.l.s4 1934713408
    %v2949 = vunpack.c.0.s8 %v2948
    %v2950 = vlaneseq
    %v2951 = vshrl.u32 %v2950, 7
    %v2952 = vsub.s32 %v2949, %v2951
    %v2953 = vrot.slane %v2939, %v2952
    %v2954 = vcombine.low %v2898, %v2914
    %v2955 = vcombine.high %v2898, %v2914
    %v2957 = vunpack.c.l.s4 1934713408
    %v2958 = vunpack.c.0.s8 %v2957
    %v2959 = vlaneseq
    %v2960 = vshrl.u32 %v2959, 7
    %v2961 = vsub.s32 %v2958, %v2960
    %v2962 = vrot.slane %v2954, %v2961
    %v2964 = vunpack.c.l.s4 1934713408
    %v2965 = vunpack.c.0.s8 %v2964
    %v2966 = vlaneseq
    %v2967 = vshrl.u32 %v2966, 7
    %v2968 = vsub.s32 %v2965, %v2967
    %v2969 = vrot.slane %v2955, %v2968
    %v2970 = vcombine.low %v2905, %v2921
    %v2971 = vcombine.high %v2905, %v2921
    %v2973 = vunpack.c.l.s4 1934713408
    %v2974 = vunpack.c.0.s8 %v2973
    %v2975 = vlaneseq
    %v2976 = vshrl.u32 %v2975, 7
    %v2977 = vsub.s32 %v2974, %v2976
    %v2978 = vrot.slane %v2970, %v2977
    %v2980 = vunpack.c.l.s4 1934713408
    %v2981 = vunpack.c.0.s8 %v2980
    %v2982 = vlaneseq
    %v2983 = vshrl.u32 %v2982, 7
    %v2984 = vsub.s32 %v2981, %v2983
    %v2985 = vrot.slane %v2971, %v2984
    %v2986 = vcombine.low %v2930, %v2962
    %v2987 = vcombine.high %v2930, %v2962
    %v2988 = vcombine.low %v2937, %v2969
    %v2989 = vcombine.high %v2937, %v2969
    %v2990 = vcombine.low %v2946, %v2978
    %v2991 = vcombine.high %v2946, %v2978
    %v2992 = vcombine.low %v2953, %v2985
    %v2993 = vcombine.high %v2953, %v2985
    %v2994 = vcombine.low %v2365, %v2373
    %v2995 = vcombine.high %v2365, %v2373
    %v2997 = vunpack.c.l.s4 1983009808
    %v2998 = vunpack.c.0.s8 %v2997
    %v2999 = vlaneseq
    %v3000 = vshrl.u32 %v2999, 7
    %v3001 = vsub.s32 %v2998, %v3000
    %v3002 = vrot.slane %v2994, %v3001
    %v3004 = vunpack.c.l.s4 1983009808
    %v3005 = vunpack.c.0.s8 %v3004
    %v3006 = vlaneseq
    %v3007 = vshrl.u32 %v3006, 7
    %v3008 = vsub.s32 %v3005, %v3007
    %v3009 = vrot.slane %v2995, %v3008
    %v3010 = vcombine.low %v2369, %v2377
    %v3011 = vcombine.high %v2369, %v2377
    %v3013 = vunpack.c.l.s4 1983009808
    %v3014 = vunpack.c.0.s8 %v3013
    %v3015 = vlaneseq
    %v3016 = vshrl.u32 %v3015, 7
    %v3017 = vsub.s32 %v3014, %v3016
    %v3018 = vrot.slane %v3010, %v3017
    %v3020 = vunpack.c.l.s4 1983009808
    %v3021 = vunpack.c.0.s8 %v3020
    %v3022 = vlaneseq
    %v3023 = vshrl.u32 %v3022, 7
    %v3024 = vsub.s32 %v3021, %v3023
    %v3025 = vrot.slane %v3011, %v3024
    %v3026 = vcombine.low %v2381, %v2389
    %v3027 = vcombine.high %v2381, %v2389
    %v3029 = vunpack.c.l.s4 1983009808
    %v3030 = vunpack.c.0.s8 %v3029
    %v3031 = vlaneseq
    %v3032 = vshrl.u32 %v3031, 7
    %v3033 = vsub.s32 %v3030, %v3032
    %v3034 = vrot.slane %v3026, %v3033
    %v3036 = vunpack.c.l.s4 1983009808
    %v3037 = vunpack.c.0.s8 %v3036
    %v3038 = vlaneseq
    %v3039 = vshrl.u32 %v3038, 7
    %v3040 = vsub.s32 %v3037, %v3039
    %v3041 = vrot.slane %v3027, %v3040
    %v3042 = vcombine.low %v2385, %v2393
    %v3043 = vcombine.high %v2385, %v2393
    %v3045 = vunpack.c.l.s4 1983009808
    %v3046 = vunpack.c.0.s8 %v3045
    %v3047 = vlaneseq
    %v3048 = vshrl.u32 %v3047, 7
    %v3049 = vsub.s32 %v3046, %v3048
    %v3050 = vrot.slane %v3042, %v3049
    %v3052 = vunpack.c.l.s4 1983009808
    %v3053 = vunpack.c.0.s8 %v3052
    %v3054 = vlaneseq
    %v3055 = vshrl.u32 %v3054, 7
    %v3056 = vsub.s32 %v3053, %v3055
    %v3057 = vrot.slane %v3043, %v3056
    %v3058 = vcombine.low %v3002, %v3018
    %v3059 = vcombine.high %v3002, %v3018
    %v3061 = vunpack.c.l.s4 1934713408
    %v3062 = vunpack.c.0.s8 %v3061
    %v3063 = vlaneseq
    %v3064 = vshrl.u32 %v3063, 7
    %v3065 = vsub.s32 %v3062, %v3064
    %v3066 = vrot.slane %v3058, %v3065
    %v3068 = vunpack.c.l.s4 1934713408
    %v3069 = vunpack.c.0.s8 %v3068
    %v3070 = vlaneseq
    %v3071 = vshrl.u32 %v3070, 7
    %v3072 = vsub.s32 %v3069, %v3071
    %v3073 = vrot.slane %v3059, %v3072
    %v3074 = vcombine.low %v3009, %v3025
    %v3075 = vcombine.high %v3009, %v3025
    %v3077 = vunpack.c.l.s4 1934713408
    %v3078 = vunpack.c.0.s8 %v3077
    %v3079 = vlaneseq
    %v3080 = vshrl.u32 %v3079, 7
    %v3081 = vsub.s32 %v3078, %v3080
    %v3082 = vrot.slane %v3074, %v3081
    %v3084 = vunpack.c.l.s4 1934713408
    %v3085 = vunpack.c.0.s8 %v3084
    %v3086 = vlaneseq
    %v3087 = vshrl.u32 %v3086, 7
    %v3088 = vsub.s32 %v3085, %v3087
    %v3089 = vrot.slane %v3075, %v3088
    %v3090 = vcombine.low %v3034, %v3050
    %v3091 = vcombine.high %v3034, %v3050
    %v3093 = vunpack.c.l.s4 1934713408
    %v3094 = vunpack.c.0.s8 %v3093
    %v3095 = vlaneseq
    %v3096 = vshrl.u32 %v3095, 7
    %v3097 = vsub.s32 %v3094, %v3096
    %v3098 = vrot.slane %v3090, %v3097
    %v3100 = vunpack.c.l.s4 1934713408
    %v3101 = vunpack.c.0.s8 %v3100
    %v3102 = vlaneseq
    %v3103 = vshrl.u32 %v3102, 7
    %v3104 = vsub.s32 %v3101, %v3103
    %v3105 = vrot.slane %v3091, %v3104
    %v3106 = vcombine.low %v3041, %v3057
    %v3107 = vcombine.high %v3041, %v3057
    %v3109 = vunpack.c.l.s4 1934713408
    %v3110 = vunpack.c.0.s8 %v3109
    %v3111 = vlaneseq
    %v3112 = vshrl.u32 %v3111, 7
    %v3113 = vsub.s32 %v3110, %v3112
    %v3114 = vrot.slane %v3106, %v3113
    %v3116 = vunpack.c.l.s4 1934713408
    %v3117 = vunpack.c.0.s8 %v3116
    %v3118 = vlaneseq
    %v3119 = vshrl.u32 %v3118, 7
    %v3120 = vsub.s32 %v3117, %v3119
    %v3121 = vrot.slane %v3107, %v3120
    %v3122 = vcombine.low %v3066, %v3098
    %v3123 = vcombine.high %v3066, %v3098
    %v3124 = vcombine.low %v3073, %v3105
    %v3125 = vcombine.high %v3073, %v3105
    %v3126 = vcombine.low %v3082, %v3114
    %v3127 = vcombine.high %v3082, %v3114
    %v3128 = vcombine.low %v3089, %v3121
    %v3129 = vcombine.high %v3089, %v3121
    %v3130 = vcombine.low %v2397, %v2405
    %v3131 = vcombine.high %v2397, %v2405
    %v3133 = vunpack.c.l.s4 1983009808
    %v3134 = vunpack.c.0.s8 %v3133
    %v3135 = vlaneseq
    %v3136 = vshrl.u32 %v3135, 7
    %v3137 = vsub.s32 %v3134, %v3136
    %v3138 = vrot.slane %v3130, %v3137
    %v3140 = vunpack.c.l.s4 1983009808
    %v3141 = vunpack.c.0.s8 %v3140
    %v3142 = vlaneseq
    %v3143 = vshrl.u32 %v3142, 7
    %v3144 = vsub.s32 %v3141, %v3143
    %v3145 = vrot.slane %v3131, %v3144
    %v3146 = vcombine.low %v2401, %v2409
    %v3147 = vcombine.high %v2401, %v2409
    %v3149 = vunpack.c.l.s4 1983009808
    %v3150 = vunpack.c.0.s8 %v3149
    %v3151 = vlaneseq
    %v3152 = vshrl.u32 %v3151, 7
    %v3153 = vsub.s32 %v3150, %v3152
    %v3154 = vrot.slane %v3146, %v3153
    %v3156 = vunpack.c.l.s4 1983009808
    %v3157 = vunpack.c.0.s8 %v3156
    %v3158 = vlaneseq
    %v3159 = vshrl.u32 %v3158, 7
    %v3160 = vsub.s32 %v3157, %v3159
    %v3161 = vrot.slane %v3147, %v3160
    %v3162 = vcombine.low %v2413, %v2421
    %v3163 = vcombine.high %v2413, %v2421
    %v3165 = vunpack.c.l.s4 1983009808
    %v3166 = vunpack.c.0.s8 %v3165
    %v3167 = vlaneseq
    %v3168 = vshrl.u32 %v3167, 7
    %v3169 = vsub.s32 %v3166, %v3168
    %v3170 = vrot.slane %v3162, %v3169
    %v3172 = vunpack.c.l.s4 1983009808
    %v3173 = vunpack.c.0.s8 %v3172
    %v3174 = vlaneseq
    %v3175 = vshrl.u32 %v3174, 7
    %v3176 = vsub.s32 %v3173, %v3175
    %v3177 = vrot.slane %v3163, %v3176
    %v3178 = vcombine.low %v2417, %v2425
    %v3179 = vcombine.high %v2417, %v2425
    %v3181 = vunpack.c.l.s4 1983009808
    %v3182 = vunpack.c.0.s8 %v3181
    %v3183 = vlaneseq
    %v3184 = vshrl.u32 %v3183, 7
    %v3185 = vsub.s32 %v3182, %v3184
    %v3186 = vrot.slane %v3178, %v3185
    %v3188 = vunpack.c.l.s4 1983009808
    %v3189 = vunpack.c.0.s8 %v3188
    %v3190 = vlaneseq
    %v3191 = vshrl.u32 %v3190, 7
    %v3192 = vsub.s32 %v3189, %v3191
    %v3193 = vrot.slane %v3179, %v3192
    %v3194 = vcombine.low %v3138, %v3154
    %v3195 = vcombine.high %v3138, %v3154
    %v3197 = vunpack.c.l.s4 1934713408
    %v3198 = vunpack.c.0.s8 %v3197
    %v3199 = vlaneseq
    %v3200 = vshrl.u32 %v3199, 7
    %v3201 = vsub.s32 %v3198, %v3200
    %v3202 = vrot.slane %v3194, %v3201
    %v3204 = vunpack.c.l.s4 1934713408
    %v3205 = vunpack.c.0.s8 %v3204
    %v3206 = vlaneseq
    %v3207 = vshrl.u32 %v3206, 7
    %v3208 = vsub.s32 %v3205, %v3207
    %v3209 = vrot.slane %v3195, %v3208
    %v3210 = vcombine.low %v3145, %v3161
    %v3211 = vcombine.high %v3145, %v3161
    %v3213 = vunpack.c.l.s4 1934713408
    %v3214 = vunpack.c.0.s8 %v3213
    %v3215 = vlaneseq
    %v3216 = vshrl.u32 %v3215, 7
    %v3217 = vsub.s32 %v3214, %v3216
    %v3218 = vrot.slane %v3210, %v3217
    %v3220 = vunpack.c.l.s4 1934713408
    %v3221 = vunpack.c.0.s8 %v3220
    %v3222 = vlaneseq
    %v3223 = vshrl.u32 %v3222, 7
    %v3224 = vsub.s32 %v3221, %v3223
    %v3225 = vrot.slane %v3211, %v3224
    %v3226 = vcombine.low %v3170, %v3186
    %v3227 = vcombine.high %v3170, %v3186
    %v3229 = vunpack.c.l.s4 1934713408
    %v3230 = vunpack.c.0.s8 %v3229
    %v3231 = vlaneseq
    %v3232 = vshrl.u32 %v3231, 7
    %v3233 = vsub.s32 %v3230, %v3232
    %v3234 = vrot.slane %v3226, %v3233
    %v3236 = vunpack.c.l.s4 1934713408
    %v3237 = vunpack.c.0.s8 %v3236
    %v3238 = vlaneseq
    %v3239 = vshrl.u32 %v3238, 7
    %v3240 = vsub.s32 %v3237, %v3239
    %v3241 = vrot.slane %v3227, %v3240
    %v3242 = vcombine.low %v3177, %v3193
    %v3243 = vcombine.high %v3177, %v3193
    %v3245 = vunpack.c.l.s4 1934713408
    %v3246 = vunpack.c.0.s8 %v3245
    %v3247 = vlaneseq
    %v3248 = vshrl.u32 %v3247, 7
    %v3249 = vsub.s32 %v3246, %v3248
    %v3250 = vrot.slane %v3242, %v3249
    %v3252 = vunpack.c.l.s4 1934713408
    %v3253 = vunpack.c.0.s8 %v3252
    %v3254 = vlaneseq
    %v3255 = vshrl.u32 %v3254, 7
    %v3256 = vsub.s32 %v3253, %v3255
    %v3257 = vrot.slane %v3243, %v3256
    %v3258 = vcombine.low %v3202, %v3234
    %v3259 = vcombine.high %v3202, %v3234
    %v3260 = vcombine.low %v3209, %v3241
    %v3261 = vcombine.high %v3209, %v3241
    %v3262 = vcombine.low %v3218, %v3250
    %v3263 = vcombine.high %v3218, %v3250
    %v3264 = vcombine.low %v3225, %v3257
    %v3265 = vcombine.high %v3225, %v3257
    %v3266 = vcombine.low %v2429, %v2437
    %v3267 = vcombine.high %v2429, %v2437
    %v3269 = vunpack.c.l.s4 1983009808
    %v3270 = vunpack.c.0.s8 %v3269
    %v3271 = vlaneseq
    %v3272 = vshrl.u32 %v3271, 7
    %v3273 = vsub.s32 %v3270, %v3272
    %v3274 = vrot.slane %v3266, %v3273
    %v3276 = vunpack.c.l.s4 1983009808
    %v3277 = vunpack.c.0.s8 %v3276
    %v3278 = vlaneseq
    %v3279 = vshrl.u32 %v3278, 7
    %v3280 = vsub.s32 %v3277, %v3279
    %v3281 = vrot.slane %v3267, %v3280
    %v3282 = vcombine.low %v2433, %v2441
    %v3283 = vcombine.high %v2433, %v2441
    %v3285 = vunpack.c.l.s4 1983009808
    %v3286 = vunpack.c.0.s8 %v3285
    %v3287 = vlaneseq
    %v3288 = vshrl.u32 %v3287, 7
    %v3289 = vsub.s32 %v3286, %v3288
    %v3290 = vrot.slane %v3282, %v3289
    %v3292 = vunpack.c.l.s4 1983009808
    %v3293 = vunpack.c.0.s8 %v3292
    %v3294 = vlaneseq
    %v3295 = vshrl.u32 %v3294, 7
    %v3296 = vsub.s32 %v3293, %v3295
    %v3297 = vrot.slane %v3283, %v3296
    %v3298 = vcombine.low %v2445, %v2453
    %v3299 = vcombine.high %v2445, %v2453
    %v3301 = vunpack.c.l.s4 1983009808
    %v3302 = vunpack.c.0.s8 %v3301
    %v3303 = vlaneseq
    %v3304 = vshrl.u32 %v3303, 7
    %v3305 = vsub.s32 %v3302, %v3304
    %v3306 = vrot.slane %v3298, %v3305
    %v3308 = vunpack.c.l.s4 1983009808
    %v3309 = vunpack.c.0.s8 %v3308
    %v3310 = vlaneseq
    %v3311 = vshrl.u32 %v3310, 7
    %v3312 = vsub.s32 %v3309, %v3311
    %v3313 = vrot.slane %v3299, %v3312
    %v3314 = vcombine.low %v2449, %v2457
    %v3315 = vcombine.high %v2449, %v2457
    %v3317 = vunpack.c.l.s4 1983009808
    %v3318 = vunpack.c.0.s8 %v3317
    %v3319 = vlaneseq
    %v3320 = vshrl.u32 %v3319, 7
    %v3321 = vsub.s32 %v3318, %v3320
    %v3322 = vrot.slane %v3314, %v3321
    %v3324 = vunpack.c.l.s4 1983009808
    %v3325 = vunpack.c.0.s8 %v3324
    %v3326 = vlaneseq
    %v3327 = vshrl.u32 %v3326, 7
    %v3328 = vsub.s32 %v3325, %v3327
    %v3329 = vrot.slane %v3315, %v3328
    %v3330 = vcombine.low %v3274, %v3290
    %v3331 = vcombine.high %v3274, %v3290
    %v3333 = vunpack.c.l.s4 1934713408
    %v3334 = vunpack.c.0.s8 %v3333
    %v3335 = vlaneseq
    %v3336 = vshrl.u32 %v3335, 7
    %v3337 = vsub.s32 %v3334, %v3336
    %v3338 = vrot.slane %v3330, %v3337
    %v3340 = vunpack.c.l.s4 1934713408
    %v3341 = vunpack.c.0.s8 %v3340
    %v3342 = vlaneseq
    %v3343 = vshrl.u32 %v3342, 7
    %v3344 = vsub.s32 %v3341, %v3343
    %v3345 = vrot.slane %v3331, %v3344
    %v3346 = vcombine.low %v3281, %v3297
    %v3347 = vcombine.high %v3281, %v3297
    %v3349 = vunpack.c.l.s4 1934713408
    %v3350 = vunpack.c.0.s8 %v3349
    %v3351 = vlaneseq
    %v3352 = vshrl.u32 %v3351, 7
    %v3353 = vsub.s32 %v3350, %v3352
    %v3354 = vrot.slane %v3346, %v3353
    %v3356 = vunpack.c.l.s4 1934713408
    %v3357 = vunpack.c.0.s8 %v3356
    %v3358 = vlaneseq
    %v3359 = vshrl.u32 %v3358, 7
    %v3360 = vsub.s32 %v3357, %v3359
    %v3361 = vrot.slane %v3347, %v3360
    %v3362 = vcombine.low %v3306, %v3322
    %v3363 = vcombine.high %v3306, %v3322
    %v3365 = vunpack.c.l.s4 1934713408
    %v3366 = vunpack.c.0.s8 %v3365
    %v3367 = vlaneseq
    %v3368 = vshrl.u32 %v3367, 7
    %v3369 = vsub.s32 %v3366, %v3368
    %v3370 = vrot.slane %v3362, %v3369
    %v3372 = vunpack.c.l.s4 1934713408
    %v3373 = vunpack.c.0.s8 %v3372
    %v3374 = vlaneseq
    %v3375 = vshrl.u32 %v3374, 7
    %v3376 = vsub.s32 %v3373, %v3375
    %v3377 = vrot.slane %v3363, %v3376
    %v3378 = vcombine.low %v3313, %v3329
    %v3379 = vcombine.high %v3313, %v3329
    %v3381 = vunpack.c.l.s4 1934713408
    %v3382 = vunpack.c.0.s8 %v3381
    %v3383 = vlaneseq
    %v3384 = vshrl.u32 %v3383, 7
    %v3385 = vsub.s32 %v3382, %v3384
    %v3386 = vrot.slane %v3378, %v3385
    %v3388 = vunpack.c.l.s4 1934713408
    %v3389 = vunpack.c.0.s8 %v3388
    %v3390 = vlaneseq
    %v3391 = vshrl.u32 %v3390, 7
    %v3392 = vsub.s32 %v3389, %v3391
    %v3393 = vrot.slane %v3379, %v3392
    %v3394 = vcombine.low %v3338, %v3370
    %v3395 = vcombine.high %v3338, %v3370
    %v3396 = vcombine.low %v3345, %v3377
    %v3397 = vcombine.high %v3345, %v3377
    %v3398 = vcombine.low %v3354, %v3386
    %v3399 = vcombine.high %v3354, %v3386
    %v3400 = vcombine.low %v3361, %v3393
    %v3401 = vcombine.high %v3361, %v3393
    %v3402 = vcombine.low %v2461, %v2469
    %v3403 = vcombine.high %v2461, %v2469
    %v3405 = vunpack.c.l.s4 1983009808
    %v3406 = vunpack.c.0.s8 %v3405
    %v3407 = vlaneseq
    %v3408 = vshrl.u32 %v3407, 7
    %v3409 = vsub.s32 %v3406, %v3408
    %v3410 = vrot.slane %v3402, %v3409
    %v3412 = vunpack.c.l.s4 1983009808
    %v3413 = vunpack.c.0.s8 %v3412
    %v3414 = vlaneseq
    %v3415 = vshrl.u32 %v3414, 7
    %v3416 = vsub.s32 %v3413, %v3415
    %v3417 = vrot.slane %v3403, %v3416
    %v3418 = vcombine.low %v2465, %v2473
    %v3419 = vcombine.high %v2465, %v2473
    %v3421 = vunpack.c.l.s4 1983009808
    %v3422 = vunpack.c.0.s8 %v3421
    %v3423 = vlaneseq
    %v3424 = vshrl.u32 %v3423, 7
    %v3425 = vsub.s32 %v3422, %v3424
    %v3426 = vrot.slane %v3418, %v3425
    %v3428 = vunpack.c.l.s4 1983009808
    %v3429 = vunpack.c.0.s8 %v3428
    %v3430 = vlaneseq
    %v3431 = vshrl.u32 %v3430, 7
    %v3432 = vsub.s32 %v3429, %v3431
    %v3433 = vrot.slane %v3419, %v3432
    %v3434 = vcombine.low %v2477, %v2485
    %v3435 = vcombine.high %v2477, %v2485
    %v3437 = vunpack.c.l.s4 1983009808
    %v3438 = vunpack.c.0.s8 %v3437
    %v3439 = vlaneseq
    %v3440 = vshrl.u32 %v3439, 7
    %v3441 = vsub.s32 %v3438, %v3440
    %v3442 = vrot.slane %v3434, %v3441
    %v3444 = vunpack.c.l.s4 1983009808
    %v3445 = vunpack.c.0.s8 %v3444
    %v3446 = vlaneseq
    %v3447 = vshrl.u32 %v3446, 7
    %v3448 = vsub.s32 %v3445, %v3447
    %v3449 = vrot.slane %v3435, %v3448
    %v3450 = vcombine.low %v2481, %v2489
    %v3451 = vcombine.high %v2481, %v2489
    %v3453 = vunpack.c.l.s4 1983009808
    %v3454 = vunpack.c.0.s8 %v3453
    %v3455 = vlaneseq
    %v3456 = vshrl.u32 %v3455, 7
    %v3457 = vsub.s32 %v3454, %v3456
    %v3458 = vrot.slane %v3450, %v3457
    %v3460 = vunpack.c.l.s4 1983009808
    %v3461 = vunpack.c.0.s8 %v3460
    %v3462 = vlaneseq
    %v3463 = vshrl.u32 %v3462, 7
    %v3464 = vsub.s32 %v3461, %v3463
    %v3465 = vrot.slane %v3451, %v3464
    %v3466 = vcombine.low %v3410, %v3426
    %v3467 = vcombine.high %v3410, %v3426
    %v3469 = vunpack.c.l.s4 1934713408
    %v3470 = vunpack.c.0.s8 %v3469
    %v3471 = vlaneseq
    %v3472 = vshrl.u32 %v3471, 7
    %v3473 = vsub.s32 %v3470, %v3472
    %v3474 = vrot.slane %v3466, %v3473
    %v3476 = vunpack.c.l.s4 1934713408
    %v3477 = vunpack.c.0.s8 %v3476
    %v3478 = vlaneseq
    %v3479 = vshrl.u32 %v3478, 7
    %v3480 = vsub.s32 %v3477, %v3479
    %v3481 = vrot.slane %v3467, %v3480
    %v3482 = vcombine.low %v3417, %v3433
    %v3483 = vcombine.high %v3417, %v3433
    %v3485 = vunpack.c.l.s4 1934713408
    %v3486 = vunpack.c.0.s8 %v3485
    %v3487 = vlaneseq
    %v3488 = vshrl.u32 %v3487, 7
    %v3489 = vsub.s32 %v3486, %v3488
    %v3490 = vrot.slane %v3482, %v3489
    %v3492 = vunpack.c.l.s4 1934713408
    %v3493 = vunpack.c.0.s8 %v3492
    %v3494 = vlaneseq
    %v3495 = vshrl.u32 %v3494, 7
    %v3496 = vsub.s32 %v3493, %v3495
    %v3497 = vrot.slane %v3483, %v3496
    %v3498 = vcombine.low %v3442, %v3458
    %v3499 = vcombine.high %v3442, %v3458
    %v3501 = vunpack.c.l.s4 1934713408
    %v3502 = vunpack.c.0.s8 %v3501
    %v3503 = vlaneseq
    %v3504 = vshrl.u32 %v3503, 7
    %v3505 = vsub.s32 %v3502, %v3504
    %v3506 = vrot.slane %v3498, %v3505
    %v3508 = vunpack.c.l.s4 1934713408
    %v3509 = vunpack.c.0.s8 %v3508
    %v3510 = vlaneseq
    %v3511 = vshrl.u32 %v3510, 7
    %v3512 = vsub.s32 %v3509, %v3511
    %v3513 = vrot.slane %v3499, %v3512
    %v3514 = vcombine.low %v3449, %v3465
    %v3515 = vcombine.high %v3449, %v3465
    %v3517 = vunpack.c.l.s4 1934713408
    %v3518 = vunpack.c.0.s8 %v3517
    %v3519 = vlaneseq
    %v3520 = vshrl.u32 %v3519, 7
    %v3521 = vsub.s32 %v3518, %v3520
    %v3522 = vrot.slane %v3514, %v3521
    %v3524 = vunpack.c.l.s4 1934713408
    %v3525 = vunpack.c.0.s8 %v3524
    %v3526 = vlaneseq
    %v3527 = vshrl.u32 %v3526, 7
    %v3528 = vsub.s32 %v3525, %v3527
    %v3529 = vrot.slane %v3515, %v3528
    %v3530 = vcombine.low %v3474, %v3506
    %v3531 = vcombine.high %v3474, %v3506
    %v3532 = vcombine.low %v3481, %v3513
    %v3533 = vcombine.high %v3481, %v3513
    %v3534 = vcombine.low %v3490, %v3522
    %v3535 = vcombine.high %v3490, %v3522
    %v3536 = vcombine.low %v3497, %v3529
    %v3537 = vcombine.high %v3497, %v3529
    %v3538 = vcombine.low %v2493, %v2501
    %v3539 = vcombine.high %v2493, %v2501
    %v3541 = vunpack.c.l.s4 1983009808
    %v3542 = vunpack.c.0.s8 %v3541
    %v3543 = vlaneseq
    %v3544 = vshrl.u32 %v3543, 7
    %v3545 = vsub.s32 %v3542, %v3544
    %v3546 = vrot.slane %v3538, %v3545
    %v3548 = vunpack.c.l.s4 1983009808
    %v3549 = vunpack.c.0.s8 %v3548
    %v3550 = vlaneseq
    %v3551 = vshrl.u32 %v3550, 7
    %v3552 = vsub.s32 %v3549, %v3551
    %v3553 = vrot.slane %v3539, %v3552
    %v3554 = vcombine.low %v2497, %v2505
    %v3555 = vcombine.high %v2497, %v2505
    %v3557 = vunpack.c.l.s4 1983009808
    %v3558 = vunpack.c.0.s8 %v3557
    %v3559 = vlaneseq
    %v3560 = vshrl.u32 %v3559, 7
    %v3561 = vsub.s32 %v3558, %v3560
    %v3562 = vrot.slane %v3554, %v3561
    %v3564 = vunpack.c.l.s4 1983009808
    %v3565 = vunpack.c.0.s8 %v3564
    %v3566 = vlaneseq
    %v3567 = vshrl.u32 %v3566, 7
    %v3568 = vsub.s32 %v3565, %v3567
    %v3569 = vrot.slane %v3555, %v3568
    %v3570 = vcombine.low %v2509, %v2517
    %v3571 = vcombine.high %v2509, %v2517
    %v3573 = vunpack.c.l.s4 1983009808
    %v3574 = vunpack.c.0.s8 %v3573
    %v3575 = vlaneseq
    %v3576 = vshrl.u32 %v3575, 7
    %v3577 = vsub.s32 %v3574, %v3576
    %v3578 = vrot.slane %v3570, %v3577
    %v3580 = vunpack.c.l.s4 1983009808
    %v3581 = vunpack.c.0.s8 %v3580
    %v3582 = vlaneseq
    %v3583 = vshrl.u32 %v3582, 7
    %v3584 = vsub.s32 %v3581, %v3583
    %v3585 = vrot.slane %v3571, %v3584
    %v3586 = vcombine.low %v2513, %v2521
    %v3587 = vcombine.high %v2513, %v2521
    %v3589 = vunpack.c.l.s4 1983009808
    %v3590 = vunpack.c.0.s8 %v3589
    %v3591 = vlaneseq
    %v3592 = vshrl.u32 %v3591, 7
    %v3593 = vsub.s32 %v3590, %v3592
    %v3594 = vrot.slane %v3586, %v3593
    %v3596 = vunpack.c.l.s4 1983009808
    %v3597 = vunpack.c.0.s8 %v3596
    %v3598 = vlaneseq
    %v3599 = vshrl.u32 %v3598, 7
    %v3600 = vsub.s32 %v3597, %v3599
    %v3601 = vrot.slane %v3587, %v3600
    %v3602 = vcombine.low %v3546, %v3562
    %v3603 = vcombine.high %v3546, %v3562
    %v3605 = vunpack.c.l.s4 1934713408
    %v3606 = vunpack.c.0.s8 %v3605
    %v3607 = vlaneseq
    %v3608 = vshrl.u32 %v3607, 7
    %v3609 = vsub.s32 %v3606, %v3608
    %v3610 = vrot.slane %v3602, %v3609
    %v3612 = vunpack.c.l.s4 1934713408
    %v3613 = vunpack.c.0.s8 %v3612
    %v3614 = vlaneseq
    %v3615 = vshrl.u32 %v3614, 7
    %v3616 = vsub.s32 %v3613, %v3615
    %v3617 = vrot.slane %v3603, %v3616
    %v3618 = vcombine.low %v3553, %v3569
    %v3619 = vcombine.high %v3553, %v3569
    %v3621 = vunpack.c.l.s4 1934713408
    %v3622 = vunpack.c.0.s8 %v3621
    %v3623 = vlaneseq
    %v3624 = vshrl.u32 %v3623, 7
    %v3625 = vsub.s32 %v3622, %v3624
    %v3626 = vrot.slane %v3618, %v3625
    %v3628 = vunpack.c.l.s4 1934713408
    %v3629 = vunpack.c.0.s8 %v3628
    %v3630 = vlaneseq
    %v3631 = vshrl.u32 %v3630, 7
    %v3632 = vsub.s32 %v3629, %v3631
    %v3633 = vrot.slane %v3619, %v3632
    %v3634 = vcombine.low %v3578, %v3594
    %v3635 = vcombine.high %v3578, %v3594
    %v3637 = vunpack.c.l.s4 1934713408
    %v3638 = vunpack.c.0.s8 %v3637
    %v3639 = vlaneseq
    %v3640 = vshrl.u32 %v3639, 7
    %v3641 = vsub.s32 %v3638, %v3640
    %v3642 = vrot.slane %v3634, %v3641
    %v3644 = vunpack.c.l.s4 1934713408
    %v3645 = vunpack.c.0.s8 %v3644
    %v3646 = vlaneseq
    %v3647 = vshrl.u32 %v3646, 7
    %v3648 = vsub.s32 %v3645, %v3647
    %v3649 = vrot.slane %v3635, %v3648
    %v3650 = vcombine.low %v3585, %v3601
    %v3651 = vcombine.high %v3585, %v3601
    %v3653 = vunpack.c.l.s4 1934713408
    %v3654 = vunpack.c.0.s8 %v3653
    %v3655 = vlaneseq
    %v3656 = vshrl.u32 %v3655, 7
    %v3657 = vsub.s32 %v3654, %v3656
    %v3658 = vrot.slane %v3650, %v3657
    %v3660 = vunpack.c.l.s4 1934713408
    %v3661 = vunpack.c.0.s8 %v3660
    %v3662 = vlaneseq
    %v3663 = vshrl.u32 %v3662, 7
    %v3664 = vsub.s32 %v3661, %v3663
    %v3665 = vrot.slane %v3651, %v3664
    %v3666 = vcombine.low %v3610, %v3642
    %v3667 = vcombine.high %v3610, %v3642
    %v3668 = vcombine.low %v3617, %v3649
    %v3669 = vcombine.high %v3617, %v3649
    %v3670 = vcombine.low %v3626, %v3658
    %v3671 = vcombine.high %v3626, %v3658
    %v3672 = vcombine.low %v3633, %v3665
    %v3673 = vcombine.high %v3633, %v3665
    %3682 = vrot.lane.b32.xlu0 %v2715, 8
    %v3683 = vpop.permute.xlu0 %3682
    %3684 = vrot.lane.b32.xlu0 %v2851, 8
    %v3685 = vpop.permute.xlu0 %3684
    %3686 = vrot.lane.b32.xlu0 %v2987, 8
    %v3687 = vpop.permute.xlu0 %3686
    %3688 = vrot.lane.b32.xlu0 %v3123, 8
    %v3689 = vpop.permute.xlu0 %3688
    %3690 = vrot.lane.b32.xlu0 %v3259, 8
    %v3691 = vpop.permute.xlu0 %3690
    %3692 = vrot.lane.b32.xlu0 %v3395, 8
    %v3693 = vpop.permute.xlu0 %3692
    %3694 = vrot.lane.b32.xlu0 %v3531, 8
    %v3695 = vpop.permute.xlu0 %3694
    %3696 = vrot.lane.b32.xlu0 %v3667, 8
    %v3697 = vpop.permute.xlu0 %3696
    %3714 = vrot.lane.b32.xlu0 %v2716, 16
    %v3715 = vpop.permute.xlu0 %3714
    %3716 = vrot.lane.b32.xlu0 %v2852, 16
    %v3717 = vpop.permute.xlu0 %3716
    %3718 = vrot.lane.b32.xlu0 %v2988, 16
    %v3719 = vpop.permute.xlu0 %3718
    %3720 = vrot.lane.b32.xlu0 %v3124, 16
    %v3721 = vpop.permute.xlu0 %3720
    %3722 = vrot.lane.b32.xlu0 %v3260, 16
    %v3723 = vpop.permute.xlu0 %3722
    %3724 = vrot.lane.b32.xlu0 %v3396, 16
    %v3725 = vpop.permute.xlu0 %3724
    %3726 = vrot.lane.b32.xlu0 %v3532, 16
    %v3727 = vpop.permute.xlu0 %3726
    %3728 = vrot.lane.b32.xlu0 %v3668, 16
    %v3729 = vpop.permute.xlu0 %3728
    %3746 = vrot.lane.b32.xlu0 %v2717, 24
    %v3747 = vpop.permute.xlu0 %3746
    %3748 = vrot.lane.b32.xlu0 %v2853, 24
    %v3749 = vpop.permute.xlu0 %3748
    %3750 = vrot.lane.b32.xlu0 %v2989, 24
    %v3751 = vpop.permute.xlu0 %3750
    %3752 = vrot.lane.b32.xlu0 %v3125, 24
    %v3753 = vpop.permute.xlu0 %3752
    %3754 = vrot.lane.b32.xlu0 %v3261, 24
    %v3755 = vpop.permute.xlu0 %3754
    %3756 = vrot.lane.b32.xlu0 %v3397, 24
    %v3757 = vpop.permute.xlu0 %3756
    %3758 = vrot.lane.b32.xlu0 %v3533, 24
    %v3759 = vpop.permute.xlu0 %3758
    %3760 = vrot.lane.b32.xlu0 %v3669, 24
    %v3761 = vpop.permute.xlu0 %3760
    %3778 = vrot.lane.b32.xlu0 %v2718, 32
    %v3779 = vpop.permute.xlu0 %3778
    %3780 = vrot.lane.b32.xlu0 %v2854, 32
    %v3781 = vpop.permute.xlu0 %3780
    %3782 = vrot.lane.b32.xlu0 %v2990, 32
    %v3783 = vpop.permute.xlu0 %3782
    %3784 = vrot.lane.b32.xlu0 %v3126, 32
    %v3785 = vpop.permute.xlu0 %3784
    %3786 = vrot.lane.b32.xlu0 %v3262, 32
    %v3787 = vpop.permute.xlu0 %3786
    %3788 = vrot.lane.b32.xlu0 %v3398, 32
    %v3789 = vpop.permute.xlu0 %3788
    %3790 = vrot.lane.b32.xlu0 %v3534, 32
    %v3791 = vpop.permute.xlu0 %3790
    %3792 = vrot.lane.b32.xlu0 %v3670, 32
    %v3793 = vpop.permute.xlu0 %3792
    %3810 = vrot.lane.b32.xlu0 %v2719, 40
    %v3811 = vpop.permute.xlu0 %3810
    %3812 = vrot.lane.b32.xlu0 %v2855, 40
    %v3813 = vpop.permute.xlu0 %3812
    %3814 = vrot.lane.b32.xlu0 %v2991, 40
    %v3815 = vpop.permute.xlu0 %3814
    %3816 = vrot.lane.b32.xlu0 %v3127, 40
    %v3817 = vpop.permute.xlu0 %3816
    %3818 = vrot.lane.b32.xlu0 %v3263, 40
    %v3819 = vpop.permute.xlu0 %3818
    %3820 = vrot.lane.b32.xlu0 %v3399, 40
    %v3821 = vpop.permute.xlu0 %3820
    %3822 = vrot.lane.b32.xlu0 %v3535, 40
    %v3823 = vpop.permute.xlu0 %3822
    %3824 = vrot.lane.b32.xlu0 %v3671, 40
    %v3825 = vpop.permute.xlu0 %3824
    %3842 = vrot.lane.b32.xlu0 %v2720, 48
    %v3843 = vpop.permute.xlu0 %3842
    %3844 = vrot.lane.b32.xlu0 %v2856, 48
    %v3845 = vpop.permute.xlu0 %3844
    %3846 = vrot.lane.b32.xlu0 %v2992, 48
    %v3847 = vpop.permute.xlu0 %3846
    %3848 = vrot.lane.b32.xlu0 %v3128, 48
    %v3849 = vpop.permute.xlu0 %3848
    %3850 = vrot.lane.b32.xlu0 %v3264, 48
    %v3851 = vpop.permute.xlu0 %3850
    %3852 = vrot.lane.b32.xlu0 %v3400, 48
    %v3853 = vpop.permute.xlu0 %3852
    %3854 = vrot.lane.b32.xlu0 %v3536, 48
    %v3855 = vpop.permute.xlu0 %3854
    %3856 = vrot.lane.b32.xlu0 %v3672, 48
    %v3857 = vpop.permute.xlu0 %3856
    %3874 = vrot.lane.b32.xlu0 %v2721, 56
    %v3875 = vpop.permute.xlu0 %3874
    %3876 = vrot.lane.b32.xlu0 %v2857, 56
    %v3877 = vpop.permute.xlu0 %3876
    %3878 = vrot.lane.b32.xlu0 %v2993, 56
    %v3879 = vpop.permute.xlu0 %3878
    %3880 = vrot.lane.b32.xlu0 %v3129, 56
    %v3881 = vpop.permute.xlu0 %3880
    %3882 = vrot.lane.b32.xlu0 %v3265, 56
    %v3883 = vpop.permute.xlu0 %3882
    %3884 = vrot.lane.b32.xlu0 %v3401, 56
    %v3885 = vpop.permute.xlu0 %3884
    %3886 = vrot.lane.b32.xlu0 %v3537, 56
    %v3887 = vpop.permute.xlu0 %3886
    %3888 = vrot.lane.b32.xlu0 %v3673, 56
    %v3889 = vpop.permute.xlu0 %3888
    %vm3898 = vcmask 64512
    %v3899 = vsel %vm3898, %v2714, %v3683
    %v3900 = vsel %vm3898, %v2850, %v3685
    %v3901 = vsel %vm3898, %v2986, %v3687
    %v3902 = vsel %vm3898, %v3122, %v3689
    %v3903 = vsel %vm3898, %v3258, %v3691
    %v3904 = vsel %vm3898, %v3394, %v3693
    %v3905 = vsel %vm3898, %v3530, %v3695
    %v3906 = vsel %vm3898, %v3666, %v3697
    %vm3907 = vcmask 130048
    %v3908 = vsel %vm3907, %v3899, %v3715
    %v3909 = vsel %vm3907, %v3900, %v3717
    %v3910 = vsel %vm3907, %v3901, %v3719
    %v3911 = vsel %vm3907, %v3902, %v3721
    %v3912 = vsel %vm3907, %v3903, %v3723
    %v3913 = vsel %vm3907, %v3904, %v3725
    %v3914 = vsel %vm3907, %v3905, %v3727
    %v3915 = vsel %vm3907, %v3906, %v3729
    %vm3916 = vcmask 195584
    %v3917 = vsel %vm3916, %v3908, %v3747
    %v3918 = vsel %vm3916, %v3909, %v3749
    %v3919 = vsel %vm3916, %v3910, %v3751
    %v3920 = vsel %vm3916, %v3911, %v3753
    %v3921 = vsel %vm3916, %v3912, %v3755
    %v3922 = vsel %vm3916, %v3913, %v3757
    %v3923 = vsel %vm3916, %v3914, %v3759
    %v3924 = vsel %vm3916, %v3915, %v3761
    %v3925 = vsel %vm73, %v3917, %v3779
    %v3926 = vsel %vm73, %v3918, %v3781
    %v3927 = vsel %vm73, %v3919, %v3783
    %v3928 = vsel %vm73, %v3920, %v3785
    %v3929 = vsel %vm73, %v3921, %v3787
    %v3930 = vsel %vm73, %v3922, %v3789
    %v3931 = vsel %vm73, %v3923, %v3791
    %v3932 = vsel %vm73, %v3924, %v3793
    %vm3933 = vcmask 326656
    %v3934 = vsel %vm3933, %v3925, %v3811
    %v3935 = vsel %vm3933, %v3926, %v3813
    %v3936 = vsel %vm3933, %v3927, %v3815
    %v3937 = vsel %vm3933, %v3928, %v3817
    %v3938 = vsel %vm3933, %v3929, %v3819
    %v3939 = vsel %vm3933, %v3930, %v3821
    %v3940 = vsel %vm3933, %v3931, %v3823
    %v3941 = vsel %vm3933, %v3932, %v3825
    %vm3942 = vcmask 392192
    %v3943 = vsel %vm3942, %v3934, %v3843
    %v3944 = vsel %vm3942, %v3935, %v3845
    %v3945 = vsel %vm3942, %v3936, %v3847
    %v3946 = vsel %vm3942, %v3937, %v3849
    %v3947 = vsel %vm3942, %v3938, %v3851
    %v3948 = vsel %vm3942, %v3939, %v3853
    %v3949 = vsel %vm3942, %v3940, %v3855
    %v3950 = vsel %vm3942, %v3941, %v3857
    %vm3951 = vcmask 457728
    %v3952 = vsel %vm3951, %v3943, %v3875
    %v3953 = vsel %vm3951, %v3944, %v3877
    %v3954 = vsel %vm3951, %v3945, %v3879
    %v3955 = vsel %vm3951, %v3946, %v3881
    %v3956 = vsel %vm3951, %v3947, %v3883
    %v3957 = vsel %vm3951, %v3948, %v3885
    %v3958 = vsel %vm3951, %v3949, %v3887
    %v3959 = vsel %vm3951, %v3950, %v3889
    %v3960 = vld [vmem:[%s11] sm:$0x1]
    %v3962 = vlaneseq
    %v3963 = vshrl.u32 %v3962, 7
    %v3964 = vsub.s32 0, %v3963
    %v3965 = vrot.slane %v3960, %v3964
    %v3967 = vsub.f32 %v3952, %v3965
    %v3968 = vsub.f32 %v3953, %v3965
    %v3969 = vsub.f32 %v3954, %v3965
    %v3970 = vsub.f32 %v3955, %v3965
    %v3971 = vsub.f32 %v3956, %v3965
    %v3972 = vsub.f32 %v3957, %v3965
    %v3973 = vsub.f32 %v3958, %v3965
    %v3974 = vsub.f32 %v3959, %v3965
    %v3975 = vmul.f32 %v3967, %v3967
    %v3976 = vmul.f32 %v3968, %v3968
    %v3977 = vmul.f32 %v3969, %v3969
    %v3978 = vmul.f32 %v3970, %v3970
    %v3979 = vmul.f32 %v3971, %v3971
    %v3980 = vmul.f32 %v3972, %v3972
    %v3981 = vmul.f32 %v3973, %v3973
    %v3982 = vmul.f32 %v3974, %v3974
    %v3983 = vsub.f32 0.0, %v3975
    %v3984 = vsub.f32 0.0, %v3976
    %v3985 = vsub.f32 0.0, %v3977
    %v3986 = vsub.f32 0.0, %v3978
    %v3987 = vsub.f32 0.0, %v3979
    %v3988 = vsub.f32 0.0, %v3980
    %v3989 = vsub.f32 0.0, %v3981
    %v3990 = vsub.f32 0.0, %v3982
    %v3991 = vstv %s58
    %v3992 = vmul.f32 %v3983, %v3991
    %v3993 = vmul.f32 %v3984, %v3991
    %v3994 = vmul.f32 %v3985, %v3991
    %v3995 = vmul.f32 %v3986, %v3991
    %v3996 = vmul.f32 %v3987, %v3991
    %v3997 = vmul.f32 %v3988, %v3991
    %v3998 = vmul.f32 %v3989, %v3991
    %v3999 = vmul.f32 %v3990, %v3991
    %v4000 = vmul.f32 %v3992, 1.442695
    %v4001 = vpow.pop %v4000
    %v4002 = vmul.f32 %v3993, 1.442695
    %v4003 = vpow.pop %v4002
    %v4004 = vmul.f32 %v3994, 1.442695
    %v4005 = vpow.pop %v4004
    %v4006 = vmul.f32 %v3995, 1.442695
    %v4007 = vpow.pop %v4006
    %v4008 = vmul.f32 %v3996, 1.442695
    %v4009 = vpow.pop %v4008
    %v4010 = vmul.f32 %v3997, 1.442695
    %v4011 = vpow.pop %v4010
    %v4012 = vmul.f32 %v3998, 1.442695
    %v4013 = vpow.pop %v4012
    %v4014 = vmul.f32 %v3999, 1.442695
    %v4015 = vpow.pop %v4014
    %v4016 = vld [vmem:[%s2] sm:$0xff]
    %v4017 = vld [vmem:[%s2 + $0x8] sm:$0xff]
    %v4018 = vld [vmem:[%s2 + $0x10] sm:$0xff]
    %v4019 = vld [vmem:[%s2 + $0x18] sm:$0xff]
    %v4020 = vld [vmem:[%s2 + $0x20] sm:$0xff]
    %v4021 = vld [vmem:[%s2 + $0x28] sm:$0xff]
    %v4022 = vld [vmem:[%s2 + $0x30] sm:$0xff]
    %v4023 = vld [vmem:[%s2 + $0x38] sm:$0xff]
    %4025 = vset.pattern.permute.xlu0 0
    %4026 = vperm.xlu0 %4025, %v4016
    %v4027 = vpop.permute.xlu0 %4026
    %4030 = vset.pattern.permute.xlu0 0
    %4031 = vperm.xlu0 %4030, %v4017
    %v4032 = vpop.permute.xlu0 %4031
    %4035 = vset.pattern.permute.xlu0 0
    %4036 = vperm.xlu0 %4035, %v4018
    %v4037 = vpop.permute.xlu0 %4036
    %4040 = vset.pattern.permute.xlu0 0
    %4041 = vperm.xlu0 %4040, %v4019
    %v4042 = vpop.permute.xlu0 %4041
    %4045 = vset.pattern.permute.xlu0 0
    %4046 = vperm.xlu0 %4045, %v4020
    %v4047 = vpop.permute.xlu0 %4046
    %4050 = vset.pattern.permute.xlu0 0
    %4051 = vperm.xlu0 %4050, %v4021
    %v4052 = vpop.permute.xlu0 %4051
    %4055 = vset.pattern.permute.xlu0 0
    %4056 = vperm.xlu0 %4055, %v4022
    %v4057 = vpop.permute.xlu0 %4056
    %4060 = vset.pattern.permute.xlu0 0
    %4061 = vperm.xlu0 %4060, %v4023
    %v4062 = vpop.permute.xlu0 %4061
    %v4064 = vmul.f32 %v4001, %v4027
    %v4065 = vmul.f32 %v4003, %v4032
    %v4066 = vmul.f32 %v4005, %v4037
    %v4067 = vmul.f32 %v4007, %v4042
    %v4068 = vmul.f32 %v4009, %v4047
    %v4069 = vmul.f32 %v4011, %v4052
    %v4070 = vmul.f32 %v4013, %v4057
    %v4071 = vmul.f32 %v4015, %v4062
    %v4072 = vld [vmem:[%s6] sm:$0xff]
    %v4073 = vld [vmem:[%s6 + $0x8] sm:$0xff]
    %v4074 = vld [vmem:[%s6 + $0x10] sm:$0xff]
    %v4075 = vld [vmem:[%s6 + $0x18] sm:$0xff]
    %vm4076 = vcmask 523264
    %v4078 = vsel %vm4076, %v4072, 0
    %v4081 = vsel %vm4076, %v4073, 0
    %v4084 = vsel %vm4076, %v4074, 0
    %v4087 = vsel %vm4076, %v4075, 0
    %4089 = vmatprep.subr.mxu0 0.0
    %v4090 = vand.u32 %v4064, 4294901760
    %4091 = vmatpush1.msra.mxu0 %v4090
    %4092 = vmatprep.subr.mxu0 0.0
    %v4093 = vand.u32 %v4065, 4294901760
    %4094 = vmatpush1.msra.mxu0 %v4093
    %4095 = vmatprep.subr.mxu0 0.0
    %v4096 = vand.u32 %v4066, 4294901760
    %4097 = vmatpush1.msra.mxu0 %v4096
    %4098 = vmatprep.subr.mxu0 0.0
    %v4099 = vand.u32 %v4067, 4294901760
    %4100 = vmatpush1.msra.mxu0 %v4099
    %4101 = vmatprep.subr.mxu0 0.0
    %v4102 = vand.u32 %v4068, 4294901760
    %4103 = vmatpush1.msra.mxu0 %v4102
    %4104 = vmatprep.subr.mxu0 0.0
    %v4105 = vand.u32 %v4069, 4294901760
    %4106 = vmatpush1.msra.mxu0 %v4105
    %4107 = vmatprep.subr.mxu0 0.0
    %v4108 = vand.u32 %v4070, 4294901760
    %4109 = vmatpush1.msra.mxu0 %v4108
    %4110 = vmatprep.subr.mxu0 0.0
    %v4111 = vand.u32 %v4071, 4294901760
    %4112 = vmatpush1.msra.mxu0 %v4111
    %4113 = vmatprep.subr.mxu0 0.0
    %4114 = vmatpush1.msra.mxu0 0.0
    %4115 = vmatprep.subr.mxu0 0.0
    %4116 = vmatpush1.msra.mxu0 0.0
    %4117 = vmatprep.subr.mxu0 0.0
    %4118 = vmatpush1.msra.mxu0 0.0
    %4119 = vmatprep.subr.mxu0 0.0
    %4120 = vmatpush1.msra.mxu0 0.0
    %4121 = vmatprep.subr.mxu0 0.0
    %4122 = vmatpush1.msra.mxu0 0.0
    %4123 = vmatprep.subr.mxu0 0.0
    %4124 = vmatpush1.msra.mxu0 0.0
    %4125 = vmatprep.subr.mxu0 0.0
    %4126 = vmatpush1.msra.mxu0 0.0
    %4127 = vmatprep.subr.mxu0 0.0
    %4128 = vmatpush1.msra.mxu0 0.0
    %4129 = vmatprep.subr.mxu0 0.0
    %4130 = vmatpush1.msra.mxu0 0.0
    %4131 = vmatprep.subr.mxu0 0.0
    %4132 = vmatpush1.msra.mxu0 0.0
    %4133 = vmatprep.subr.mxu0 0.0
    %4134 = vmatpush1.msra.mxu0 0.0
    %4135 = vmatprep.subr.mxu0 0.0
    %4136 = vmatpush1.msra.mxu0 0.0
    %4137 = vmatprep.subr.mxu0 0.0
    %4138 = vmatpush1.msra.mxu0 0.0
    %4139 = vmatprep.subr.mxu0 0.0
    %4140 = vmatpush1.msra.mxu0 0.0
    %4141 = vmatprep.subr.mxu0 0.0
    %4142 = vmatpush1.msra.mxu0 0.0
    %4143 = vmatprep.subr.mxu0 0.0
    %4144 = vmatpush1.msra.mxu0 0.0
    %4145 = vmatprep.subr.mxu0 0.0
    %4146 = vmatpush1.msra.mxu0 0.0
    %4147 = vmatprep.subr.mxu0 0.0
    %4148 = vmatpush1.msra.mxu0 0.0
    %4149 = vmatprep.subr.mxu0 0.0
    %4150 = vmatpush1.msra.mxu0 0.0
    %4151 = vmatprep.subr.mxu0 0.0
    %4152 = vmatpush1.msra.mxu0 0.0
    %4153 = vmatprep.subr.mxu0 0.0
    %4154 = vmatpush1.msra.mxu0 0.0
    %4155 = vmatprep.subr.mxu0 0.0
    %4156 = vmatpush1.msra.mxu0 0.0
    %4157 = vmatprep.subr.mxu0 0.0
    %4158 = vmatpush1.msra.mxu0 0.0
    %4159 = vmatprep.subr.mxu0 0.0
    %4160 = vmatpush1.msra.mxu0 0.0
    %4161 = vmatprep.mubr.f32.mxu0 0.0
    %v4162 = vand.u32 %v4078, 4294901760
    %v4163 = vsub.f32 %v4078, %v4162
    %v4164 = vand.u32 %v4163, 4294901760
    %v4165 = vsub.f32 %v4163, %v4164
    %v4166 = vand.u32 %v4165, 4294901760
    %4167 = vmatmul.mubr.f32.gmra.mrb[0].mxu0 %v4166
    %v4168 = vpop.f32.mrb[0].mxu0
    %v4169 = vadd.f32 1e-06, %v4168
    %v4170 = vpop.f32.mrb[0].mxu0
    %4171 = vmatprep.mubr.f32.mxu0 0.0
    %v4172 = vand.u32 %v4081, 4294901760
    %v4173 = vsub.f32 %v4081, %v4172
    %v4174 = vand.u32 %v4173, 4294901760
    %v4175 = vsub.f32 %v4173, %v4174
    %v4176 = vand.u32 %v4175, 4294901760
    %4177 = vmatmul.mubr.f32.gmra.mrb[0].mxu0 %v4176
    %v4178 = vpop.f32.mrb[0].mxu0
    %v4179 = vadd.f32 1e-06, %v4178
    %v4180 = vpop.f32.mrb[0].mxu0
    %4181 = vmatprep.mubr.f32.mxu0 0.0
    %v4182 = vand.u32 %v4084, 4294901760
    %v4183 = vsub.f32 %v4084, %v4182
    %v4184 = vand.u32 %v4183, 4294901760
    %v4185 = vsub.f32 %v4183, %v4184
    %v4186 = vand.u32 %v4185, 4294901760
    %4187 = vmatmul.mubr.f32.gmra.mrb[0].mxu0 %v4186
    %v4188 = vpop.f32.mrb[0].mxu0
    %v4189 = vadd.f32 1e-06, %v4188
    %v4190 = vpop.f32.mrb[0].mxu0
    %4191 = vmatprep.mubr.f32.mxu0 0.0
    %v4192 = vand.u32 %v4087, 4294901760
    %v4193 = vsub.f32 %v4087, %v4192
    %v4194 = vand.u32 %v4193, 4294901760
    %v4195 = vsub.f32 %v4193, %v4194
    %v4196 = vand.u32 %v4195, 4294901760
    %4197 = vmatmul.mubr.f32.gmra.mrb[0].mxu0 %v4196
    %v4198 = vpop.f32.mrb[0].mxu0
    %v4199 = vadd.f32 1e-06, %v4198
    %v4200 = vpop.f32.mrb[0].mxu0
    %4201 = vdwg.mxu0
    %4202 = vmatprep.subr.mxu0 0.0
    %v4203 = vand.u32 %v4064, 4294901760
    %v4204 = vsub.f32 %v4064, %v4203
    %v4205 = vand.u32 %v4204, 4294901760
    %v4206 = vsub.f32 %v4204, %v4205
    %v4207 = vand.u32 %v4206, 4294901760
    %4208 = vmatpush1.msra.mxu0 %v4207
    %4209 = vmatprep.subr.mxu0 0.0
    %v4210 = vand.u32 %v4065, 4294901760
    %v4211 = vsub.f32 %v4065, %v4210
    %v4212 = vand.u32 %v4211, 4294901760
    %v4213 = vsub.f32 %v4211, %v4212
    %v4214 = vand.u32 %v4213, 4294901760
    %4215 = vmatpush1.msra.mxu0 %v4214
    %4216 = vmatprep.subr.mxu0 0.0
    %v4217 = vand.u32 %v4066, 4294901760
    %v4218 = vsub.f32 %v4066, %v4217
    %v4219 = vand.u32 %v4218, 4294901760
    %v4220 = vsub.f32 %v4218, %v4219
    %v4221 = vand.u32 %v4220, 4294901760
    %4222 = vmatpush1.msra.mxu0 %v4221
    %4223 = vmatprep.subr.mxu0 0.0
    %v4224 = vand.u32 %v4067, 4294901760
    %v4225 = vsub.f32 %v4067, %v4224
    %v4226 = vand.u32 %v4225, 4294901760
    %v4227 = vsub.f32 %v4225, %v4226
    %v4228 = vand.u32 %v4227, 4294901760
    %4229 = vmatpush1.msra.mxu0 %v4228
    %4230 = vmatprep.subr.mxu0 0.0
    %v4231 = vand.u32 %v4068, 4294901760
    %v4232 = vsub.f32 %v4068, %v4231
    %v4233 = vand.u32 %v4232, 4294901760
    %v4234 = vsub.f32 %v4232, %v4233
    %v4235 = vand.u32 %v4234, 4294901760
    %4236 = vmatpush1.msra.mxu0 %v4235
    %4237 = vmatprep.subr.mxu0 0.0
    %v4238 = vand.u32 %v4069, 4294901760
    %v4239 = vsub.f32 %v4069, %v4238
    %v4240 = vand.u32 %v4239, 4294901760
    %v4241 = vsub.f32 %v4239, %v4240
    %v4242 = vand.u32 %v4241, 4294901760
    %4243 = vmatpush1.msra.mxu0 %v4242
    %4244 = vmatprep.subr.mxu0 0.0
    %v4245 = vand.u32 %v4070, 4294901760
    %v4246 = vsub.f32 %v4070, %v4245
    %v4247 = vand.u32 %v4246, 4294901760
    %v4248 = vsub.f32 %v4246, %v4247
    %v4249 = vand.u32 %v4248, 4294901760
    %4250 = vmatpush1.msra.mxu0 %v4249
    %4251 = vmatprep.subr.mxu0 0.0
    %v4252 = vand.u32 %v4071, 4294901760
    %v4253 = vsub.f32 %v4071, %v4252
    %v4254 = vand.u32 %v4253, 4294901760
    %v4255 = vsub.f32 %v4253, %v4254
    %v4256 = vand.u32 %v4255, 4294901760
    %4257 = vmatpush1.msra.mxu0 %v4256
    %4258 = vmatprep.subr.mxu0 0.0
    %4259 = vmatpush1.msra.mxu0 0.0
    %4260 = vmatprep.subr.mxu0 0.0
    %4261 = vmatpush1.msra.mxu0 0.0
    %4262 = vmatprep.subr.mxu0 0.0
    %4263 = vmatpush1.msra.mxu0 0.0
    %4264 = vmatprep.subr.mxu0 0.0
    %4265 = vmatpush1.msra.mxu0 0.0
    %4266 = vmatprep.subr.mxu0 0.0
    %4267 = vmatpush1.msra.mxu0 0.0
    %4268 = vmatprep.subr.mxu0 0.0
    %4269 = vmatpush1.msra.mxu0 0.0
    %4270 = vmatprep.subr.mxu0 0.0
    %4271 = vmatpush1.msra.mxu0 0.0
    %4272 = vmatprep.subr.mxu0 0.0
    %4273 = vmatpush1.msra.mxu0 0.0
    %4274 = vmatprep.subr.mxu0 0.0
    %4275 = vmatpush1.msra.mxu0 0.0
    %4276 = vmatprep.subr.mxu0 0.0
    %4277 = vmatpush1.msra.mxu0 0.0
    %4278 = vmatprep.subr.mxu0 0.0
    %4279 = vmatpush1.msra.mxu0 0.0
    %4280 = vmatprep.subr.mxu0 0.0
    %4281 = vmatpush1.msra.mxu0 0.0
    %4282 = vmatprep.subr.mxu0 0.0
    %4283 = vmatpush1.msra.mxu0 0.0
    %4284 = vmatprep.subr.mxu0 0.0
    %4285 = vmatpush1.msra.mxu0 0.0
    %4286 = vmatprep.subr.mxu0 0.0
    %4287 = vmatpush1.msra.mxu0 0.0
    %4288 = vmatprep.subr.mxu0 0.0
    %4289 = vmatpush1.msra.mxu0 0.0
    %4290 = vmatprep.subr.mxu0 0.0
    %4291 = vmatpush1.msra.mxu0 0.0
    %4292 = vmatprep.subr.mxu0 0.0
    %4293 = vmatpush1.msra.mxu0 0.0
    %4294 = vmatprep.subr.mxu0 0.0
    %4295 = vmatpush1.msra.mxu0 0.0
    %4296 = vmatprep.subr.mxu0 0.0
    %4297 = vmatpush1.msra.mxu0 0.0
    %4298 = vmatprep.subr.mxu0 0.0
    %4299 = vmatpush1.msra.mxu0 0.0
    %4300 = vmatprep.subr.mxu0 0.0
    %4301 = vmatpush1.msra.mxu0 0.0
    %4302 = vmatprep.subr.mxu0 0.0
    %4303 = vmatpush1.msra.mxu0 0.0
    %4304 = vmatprep.subr.mxu0 0.0
    %4305 = vmatpush1.msra.mxu0 0.0
    %4306 = vmatprep.mubr.f32.mxu0 0.0
    %v4307 = vand.u32 %v4078, 4294901760
    %4308 = vmatmul.mubr.f32.gmra.mrb[0].mxu0 %v4307
    %v4309 = vpop.f32.mrb[0].mxu0
    %v4310 = vadd.f32 %v4169, %v4309
    %v4311 = vpop.f32.mrb[0].mxu0
    %4312 = vmatprep.mubr.f32.mxu0 0.0
    %v4313 = vand.u32 %v4081, 4294901760
    %4314 = vmatmul.mubr.f32.gmra.mrb[0].mxu0 %v4313
    %v4315 = vpop.f32.mrb[0].mxu0
    %v4316 = vadd.f32 %v4179, %v4315
    %v4317 = vpop.f32.mrb[0].mxu0
    %4318 = vmatprep.mubr.f32.mxu0 0.0
    %v4319 = vand.u32 %v4084, 4294901760
    %4320 = vmatmul.mubr.f32.gmra.mrb[0].mxu0 %v4319
    %v4321 = vpop.f32.mrb[0].mxu0
    %v4322 = vadd.f32 %v4189, %v4321
    %v4323 = vpop.f32.mrb[0].mxu0
    %4324 = vmatprep.mubr.f32.mxu0 0.0
    %v4325 = vand.u32 %v4087, 4294901760
    %4326 = vmatmul.mubr.f32.gmra.mrb[0].mxu0 %v4325
    %v4327 = vpop.f32.mrb[0].mxu0
    %v4328 = vadd.f32 %v4199, %v4327
    %v4329 = vpop.f32.mrb[0].mxu0
    %4330 = vdwg.mxu0
    %4331 = vmatprep.subr.mxu0 0.0
    %v4332 = vand.u32 %v4064, 4294901760
    %v4333 = vsub.f32 %v4064, %v4332
    %4334 = vmatpush1.msra.mxu0 %v4333
    %4335 = vmatprep.subr.mxu0 0.0
    %v4336 = vand.u32 %v4065, 4294901760
    %v4337 = vsub.f32 %v4065, %v4336
    %4338 = vmatpush1.msra.mxu0 %v4337
    %4339 = vmatprep.subr.mxu0 0.0
    %v4340 = vand.u32 %v4066, 4294901760
    %v4341 = vsub.f32 %v4066, %v4340
    %4342 = vmatpush1.msra.mxu0 %v4341
    %4343 = vmatprep.subr.mxu0 0.0
    %v4344 = vand.u32 %v4067, 4294901760
    %v4345 = vsub.f32 %v4067, %v4344
    %4346 = vmatpush1.msra.mxu0 %v4345
    %4347 = vmatprep.subr.mxu0 0.0
    %v4348 = vand.u32 %v4068, 4294901760
    %v4349 = vsub.f32 %v4068, %v4348
    %4350 = vmatpush1.msra.mxu0 %v4349
    %4351 = vmatprep.subr.mxu0 0.0
    %v4352 = vand.u32 %v4069, 4294901760
    %v4353 = vsub.f32 %v4069, %v4352
    %4354 = vmatpush1.msra.mxu0 %v4353
    %4355 = vmatprep.subr.mxu0 0.0
    %v4356 = vand.u32 %v4070, 4294901760
    %v4357 = vsub.f32 %v4070, %v4356
    %4358 = vmatpush1.msra.mxu0 %v4357
    %4359 = vmatprep.subr.mxu0 0.0
    %v4360 = vand.u32 %v4071, 4294901760
    %v4361 = vsub.f32 %v4071, %v4360
    %4362 = vmatpush1.msra.mxu0 %v4361
    %4363 = vmatprep.subr.mxu0 0.0
    %4364 = vmatpush1.msra.mxu0 0.0
    %4365 = vmatprep.subr.mxu0 0.0
    %4366 = vmatpush1.msra.mxu0 0.0
    %4367 = vmatprep.subr.mxu0 0.0
    %4368 = vmatpush1.msra.mxu0 0.0
    %4369 = vmatprep.subr.mxu0 0.0
    %4370 = vmatpush1.msra.mxu0 0.0
    %4371 = vmatprep.subr.mxu0 0.0
    %4372 = vmatpush1.msra.mxu0 0.0
    %4373 = vmatprep.subr.mxu0 0.0
    %4374 = vmatpush1.msra.mxu0 0.0
    %4375 = vmatprep.subr.mxu0 0.0
    %4376 = vmatpush1.msra.mxu0 0.0
    %4377 = vmatprep.subr.mxu0 0.0
    %4378 = vmatpush1.msra.mxu0 0.0
    %4379 = vmatprep.subr.mxu0 0.0
    %4380 = vmatpush1.msra.mxu0 0.0
    %4381 = vmatprep.subr.mxu0 0.0
    %4382 = vmatpush1.msra.mxu0 0.0
    %4383 = vmatprep.subr.mxu0 0.0
    %4384 = vmatpush1.msra.mxu0 0.0
    %4385 = vmatprep.subr.mxu0 0.0
    %4386 = vmatpush1.msra.mxu0 0.0
    %4387 = vmatprep.subr.mxu0 0.0
    %4388 = vmatpush1.msra.mxu0 0.0
    %4389 = vmatprep.subr.mxu0 0.0
    %4390 = vmatpush1.msra.mxu0 0.0
    %4391 = vmatprep.subr.mxu0 0.0
    %4392 = vmatpush1.msra.mxu0 0.0
    %4393 = vmatprep.subr.mxu0 0.0
    %4394 = vmatpush1.msra.mxu0 0.0
    %4395 = vmatprep.subr.mxu0 0.0
    %4396 = vmatpush1.msra.mxu0 0.0
    %4397 = vmatprep.subr.mxu0 0.0
    %4398 = vmatpush1.msra.mxu0 0.0
    %4399 = vmatprep.subr.mxu0 0.0
    %4400 = vmatpush1.msra.mxu0 0.0
    %4401 = vmatprep.subr.mxu0 0.0
    %4402 = vmatpush1.msra.mxu0 0.0
    %4403 = vmatprep.subr.mxu0 0.0
    %4404 = vmatpush1.msra.mxu0 0.0
    %4405 = vmatprep.subr.mxu0 0.0
    %4406 = vmatpush1.msra.mxu0 0.0
    %4407 = vmatprep.subr.mxu0 0.0
    %4408 = vmatpush1.msra.mxu0 0.0
    %4409 = vmatprep.subr.mxu0 0.0
    %4410 = vmatpush1.msra.mxu0 0.0
    %4411 = vmatprep.mubr.f32.mxu0 0.0
    %v4412 = vand.u32 %v4078, 4294901760
    %v4413 = vsub.f32 %v4078, %v4412
    %4414 = vmatmul.mubr.f32.gmra.mrb[0].mxu0 %v4413
    %v4415 = vpop.f32.mrb[0].mxu0
    %v4416 = vadd.f32 %v4310, %v4415
    %v4417 = vpop.f32.mrb[0].mxu0
    %4418 = vmatprep.mubr.f32.mxu0 0.0
    %v4419 = vand.u32 %v4081, 4294901760
    %v4420 = vsub.f32 %v4081, %v4419
    %4421 = vmatmul.mubr.f32.gmra.mrb[0].mxu0 %v4420
    %v4422 = vpop.f32.mrb[0].mxu0
    %v4423 = vadd.f32 %v4316, %v4422
    %v4424 = vpop.f32.mrb[0].mxu0
    %4425 = vmatprep.mubr.f32.mxu0 0.0
    %v4426 = vand.u32 %v4084, 4294901760
    %v4427 = vsub.f32 %v4084, %v4426
    %4428 = vmatmul.mubr.f32.gmra.mrb[0].mxu0 %v4427
    %v4429 = vpop.f32.mrb[0].mxu0
    %v4430 = vadd.f32 %v4322, %v4429
    %v4431 = vpop.f32.mrb[0].mxu0
    %4432 = vmatprep.mubr.f32.mxu0 0.0
    %v4433 = vand.u32 %v4087, 4294901760
    %v4434 = vsub.f32 %v4087, %v4433
    %4435 = vmatmul.mubr.f32.gmra.mrb[0].mxu0 %v4434
    %v4436 = vpop.f32.mrb[0].mxu0
    %v4437 = vadd.f32 %v4328, %v4436
    %v4438 = vpop.f32.mrb[0].mxu0
    %4439 = vdwg.mxu0
    %4440 = vmatprep.subr.mxu0 0.0
    %v4441 = vand.u32 %v4064, 4294901760
    %4442 = vmatpush1.msra.mxu0 %v4441
    %4443 = vmatprep.subr.mxu0 0.0
    %v4444 = vand.u32 %v4065, 4294901760
    %4445 = vmatpush1.msra.mxu0 %v4444
    %4446 = vmatprep.subr.mxu0 0.0
    %v4447 = vand.u32 %v4066, 4294901760
    %4448 = vmatpush1.msra.mxu0 %v4447
    %4449 = vmatprep.subr.mxu0 0.0
    %v4450 = vand.u32 %v4067, 4294901760
    %4451 = vmatpush1.msra.mxu0 %v4450
    %4452 = vmatprep.subr.mxu0 0.0
    %v4453 = vand.u32 %v4068, 4294901760
    %4454 = vmatpush1.msra.mxu0 %v4453
    %4455 = vmatprep.subr.mxu0 0.0
    %v4456 = vand.u32 %v4069, 4294901760
    %4457 = vmatpush1.msra.mxu0 %v4456
    %4458 = vmatprep.subr.mxu0 0.0
    %v4459 = vand.u32 %v4070, 4294901760
    %4460 = vmatpush1.msra.mxu0 %v4459
    %4461 = vmatprep.subr.mxu0 0.0
    %v4462 = vand.u32 %v4071, 4294901760
    %4463 = vmatpush1.msra.mxu0 %v4462
    %4464 = vmatprep.subr.mxu0 0.0
    %4465 = vmatpush1.msra.mxu0 0.0
    %4466 = vmatprep.subr.mxu0 0.0
    %4467 = vmatpush1.msra.mxu0 0.0
    %4468 = vmatprep.subr.mxu0 0.0
    %4469 = vmatpush1.msra.mxu0 0.0
    %4470 = vmatprep.subr.mxu0 0.0
    %4471 = vmatpush1.msra.mxu0 0.0
    %4472 = vmatprep.subr.mxu0 0.0
    %4473 = vmatpush1.msra.mxu0 0.0
    %4474 = vmatprep.subr.mxu0 0.0
    %4475 = vmatpush1.msra.mxu0 0.0
    %4476 = vmatprep.subr.mxu0 0.0
    %4477 = vmatpush1.msra.mxu0 0.0
    %4478 = vmatprep.subr.mxu0 0.0
    %4479 = vmatpush1.msra.mxu0 0.0
    %4480 = vmatprep.subr.mxu0 0.0
    %4481 = vmatpush1.msra.mxu0 0.0
    %4482 = vmatprep.subr.mxu0 0.0
    %4483 = vmatpush1.msra.mxu0 0.0
    %4484 = vmatprep.subr.mxu0 0.0
    %4485 = vmatpush1.msra.mxu0 0.0
    %4486 = vmatprep.subr.mxu0 0.0
    %4487 = vmatpush1.msra.mxu0 0.0
    %4488 = vmatprep.subr.mxu0 0.0
    %4489 = vmatpush1.msra.mxu0 0.0
    %4490 = vmatprep.subr.mxu0 0.0
    %4491 = vmatpush1.msra.mxu0 0.0
    %4492 = vmatprep.subr.mxu0 0.0
    %4493 = vmatpush1.msra.mxu0 0.0
    %4494 = vmatprep.subr.mxu0 0.0
    %4495 = vmatpush1.msra.mxu0 0.0
    %4496 = vmatprep.subr.mxu0 0.0
    %4497 = vmatpush1.msra.mxu0 0.0
    %4498 = vmatprep.subr.mxu0 0.0
    %4499 = vmatpush1.msra.mxu0 0.0
    %4500 = vmatprep.subr.mxu0 0.0
    %4501 = vmatpush1.msra.mxu0 0.0
    %4502 = vmatprep.subr.mxu0 0.0
    %4503 = vmatpush1.msra.mxu0 0.0
    %4504 = vmatprep.subr.mxu0 0.0
    %4505 = vmatpush1.msra.mxu0 0.0
    %4506 = vmatprep.subr.mxu0 0.0
    %4507 = vmatpush1.msra.mxu0 0.0
    %4508 = vmatprep.subr.mxu0 0.0
    %4509 = vmatpush1.msra.mxu0 0.0
    %4510 = vmatprep.subr.mxu0 0.0
    %4511 = vmatpush1.msra.mxu0 0.0
    %4512 = vmatprep.mubr.f32.mxu0 0.0
    %v4513 = vand.u32 %v4078, 4294901760
    %v4514 = vsub.f32 %v4078, %v4513
    %v4515 = vand.u32 %v4514, 4294901760
    %4516 = vmatmul.mubr.f32.gmra.mrb[0].mxu0 %v4515
    %v4517 = vpop.f32.mrb[0].mxu0
    %v4518 = vadd.f32 %v4416, %v4517
    %v4519 = vpop.f32.mrb[0].mxu0
    %4520 = vmatprep.mubr.f32.mxu0 0.0
    %v4521 = vand.u32 %v4081, 4294901760
    %v4522 = vsub.f32 %v4081, %v4521
    %v4523 = vand.u32 %v4522, 4294901760
    %4524 = vmatmul.mubr.f32.gmra.mrb[0].mxu0 %v4523
    %v4525 = vpop.f32.mrb[0].mxu0
    %v4526 = vadd.f32 %v4423, %v4525
    %v4527 = vpop.f32.mrb[0].mxu0
    %4528 = vmatprep.mubr.f32.mxu0 0.0
    %v4529 = vand.u32 %v4084, 4294901760
    %v4530 = vsub.f32 %v4084, %v4529
    %v4531 = vand.u32 %v4530, 4294901760
    %4532 = vmatmul.mubr.f32.gmra.mrb[0].mxu0 %v4531
    %v4533 = vpop.f32.mrb[0].mxu0
    %v4534 = vadd.f32 %v4430, %v4533
    %v4535 = vpop.f32.mrb[0].mxu0
    %4536 = vmatprep.mubr.f32.mxu0 0.0
    %v4537 = vand.u32 %v4087, 4294901760
    %v4538 = vsub.f32 %v4087, %v4537
    %v4539 = vand.u32 %v4538, 4294901760
    %4540 = vmatmul.mubr.f32.gmra.mrb[0].mxu0 %v4539
    %v4541 = vpop.f32.mrb[0].mxu0
    %v4542 = vadd.f32 %v4437, %v4541
    %v4543 = vpop.f32.mrb[0].mxu0
    %4544 = vdwg.mxu0
    %4545 = vmatprep.subr.mxu0 0.0
    %v4546 = vand.u32 %v4064, 4294901760
    %v4547 = vsub.f32 %v4064, %v4546
    %v4548 = vand.u32 %v4547, 4294901760
    %4549 = vmatpush1.msra.mxu0 %v4548
    %4550 = vmatprep.subr.mxu0 0.0
    %v4551 = vand.u32 %v4065, 4294901760
    %v4552 = vsub.f32 %v4065, %v4551
    %v4553 = vand.u32 %v4552, 4294901760
    %4554 = vmatpush1.msra.mxu0 %v4553
    %4555 = vmatprep.subr.mxu0 0.0
    %v4556 = vand.u32 %v4066, 4294901760
    %v4557 = vsub.f32 %v4066, %v4556
    %v4558 = vand.u32 %v4557, 4294901760
    %4559 = vmatpush1.msra.mxu0 %v4558
    %4560 = vmatprep.subr.mxu0 0.0
    %v4561 = vand.u32 %v4067, 4294901760
    %v4562 = vsub.f32 %v4067, %v4561
    %v4563 = vand.u32 %v4562, 4294901760
    %4564 = vmatpush1.msra.mxu0 %v4563
    %4565 = vmatprep.subr.mxu0 0.0
    %v4566 = vand.u32 %v4068, 4294901760
    %v4567 = vsub.f32 %v4068, %v4566
    %v4568 = vand.u32 %v4567, 4294901760
    %4569 = vmatpush1.msra.mxu0 %v4568
    %4570 = vmatprep.subr.mxu0 0.0
    %v4571 = vand.u32 %v4069, 4294901760
    %v4572 = vsub.f32 %v4069, %v4571
    %v4573 = vand.u32 %v4572, 4294901760
    %4574 = vmatpush1.msra.mxu0 %v4573
    %4575 = vmatprep.subr.mxu0 0.0
    %v4576 = vand.u32 %v4070, 4294901760
    %v4577 = vsub.f32 %v4070, %v4576
    %v4578 = vand.u32 %v4577, 4294901760
    %4579 = vmatpush1.msra.mxu0 %v4578
    %4580 = vmatprep.subr.mxu0 0.0
    %v4581 = vand.u32 %v4071, 4294901760
    %v4582 = vsub.f32 %v4071, %v4581
    %v4583 = vand.u32 %v4582, 4294901760
    %4584 = vmatpush1.msra.mxu0 %v4583
    %4585 = vmatprep.subr.mxu0 0.0
    %4586 = vmatpush1.msra.mxu0 0.0
    %4587 = vmatprep.subr.mxu0 0.0
    %4588 = vmatpush1.msra.mxu0 0.0
    %4589 = vmatprep.subr.mxu0 0.0
    %4590 = vmatpush1.msra.mxu0 0.0
    %4591 = vmatprep.subr.mxu0 0.0
    %4592 = vmatpush1.msra.mxu0 0.0
    %4593 = vmatprep.subr.mxu0 0.0
    %4594 = vmatpush1.msra.mxu0 0.0
    %4595 = vmatprep.subr.mxu0 0.0
    %4596 = vmatpush1.msra.mxu0 0.0
    %4597 = vmatprep.subr.mxu0 0.0
    %4598 = vmatpush1.msra.mxu0 0.0
    %4599 = vmatprep.subr.mxu0 0.0
    %4600 = vmatpush1.msra.mxu0 0.0
    %4601 = vmatprep.subr.mxu0 0.0
    %4602 = vmatpush1.msra.mxu0 0.0
    %4603 = vmatprep.subr.mxu0 0.0
    %4604 = vmatpush1.msra.mxu0 0.0
    %4605 = vmatprep.subr.mxu0 0.0
    %4606 = vmatpush1.msra.mxu0 0.0
    %4607 = vmatprep.subr.mxu0 0.0
    %4608 = vmatpush1.msra.mxu0 0.0
    %4609 = vmatprep.subr.mxu0 0.0
    %4610 = vmatpush1.msra.mxu0 0.0
    %4611 = vmatprep.subr.mxu0 0.0
    %4612 = vmatpush1.msra.mxu0 0.0
    %4613 = vmatprep.subr.mxu0 0.0
    %4614 = vmatpush1.msra.mxu0 0.0
    %4615 = vmatprep.subr.mxu0 0.0
    %4616 = vmatpush1.msra.mxu0 0.0
    %4617 = vmatprep.subr.mxu0 0.0
    %4618 = vmatpush1.msra.mxu0 0.0
    %4619 = vmatprep.subr.mxu0 0.0
    %4620 = vmatpush1.msra.mxu0 0.0
    %4621 = vmatprep.subr.mxu0 0.0
    %4622 = vmatpush1.msra.mxu0 0.0
    %4623 = vmatprep.subr.mxu0 0.0
    %4624 = vmatpush1.msra.mxu0 0.0
    %4625 = vmatprep.subr.mxu0 0.0
    %4626 = vmatpush1.msra.mxu0 0.0
    %4627 = vmatprep.subr.mxu0 0.0
    %4628 = vmatpush1.msra.mxu0 0.0
    %4629 = vmatprep.subr.mxu0 0.0
    %4630 = vmatpush1.msra.mxu0 0.0
    %4631 = vmatprep.subr.mxu0 0.0
    %4632 = vmatpush1.msra.mxu0 0.0
    %4633 = vmatprep.mubr.f32.mxu0 0.0
    %v4634 = vand.u32 %v4078, 4294901760
    %4635 = vmatmul.mubr.f32.gmra.mrb[0].mxu0 %v4634
    %v4636 = vpop.f32.mrb[0].mxu0
    %v4637 = vadd.f32 %v4518, %v4636
    %v4638 = vpop.f32.mrb[0].mxu0
    %4639 = vmatprep.mubr.f32.mxu0 0.0
    %v4640 = vand.u32 %v4081, 4294901760
    %4641 = vmatmul.mubr.f32.gmra.mrb[0].mxu0 %v4640
    %v4642 = vpop.f32.mrb[0].mxu0
    %v4643 = vadd.f32 %v4526, %v4642
    %v4644 = vpop.f32.mrb[0].mxu0
    %4645 = vmatprep.mubr.f32.mxu0 0.0
    %v4646 = vand.u32 %v4084, 4294901760
    %4647 = vmatmul.mubr.f32.gmra.mrb[0].mxu0 %v4646
    %v4648 = vpop.f32.mrb[0].mxu0
    %v4649 = vadd.f32 %v4534, %v4648
    %v4650 = vpop.f32.mrb[0].mxu0
    %4651 = vmatprep.mubr.f32.mxu0 0.0
    %v4652 = vand.u32 %v4087, 4294901760
    %4653 = vmatmul.mubr.f32.gmra.mrb[0].mxu0 %v4652
    %v4654 = vpop.f32.mrb[0].mxu0
    %v4655 = vadd.f32 %v4542, %v4654
    %v4656 = vpop.f32.mrb[0].mxu0
    %4657 = vdwg.mxu0
    %4658 = vmatprep.subr.mxu0 0.0
    %v4659 = vand.u32 %v4064, 4294901760
    %4660 = vmatpush1.msra.mxu0 %v4659
    %4661 = vmatprep.subr.mxu0 0.0
    %v4662 = vand.u32 %v4065, 4294901760
    %4663 = vmatpush1.msra.mxu0 %v4662
    %4664 = vmatprep.subr.mxu0 0.0
    %v4665 = vand.u32 %v4066, 4294901760
    %4666 = vmatpush1.msra.mxu0 %v4665
    %4667 = vmatprep.subr.mxu0 0.0
    %v4668 = vand.u32 %v4067, 4294901760
    %4669 = vmatpush1.msra.mxu0 %v4668
    %4670 = vmatprep.subr.mxu0 0.0
    %v4671 = vand.u32 %v4068, 4294901760
    %4672 = vmatpush1.msra.mxu0 %v4671
    %4673 = vmatprep.subr.mxu0 0.0
    %v4674 = vand.u32 %v4069, 4294901760
    %4675 = vmatpush1.msra.mxu0 %v4674
    %4676 = vmatprep.subr.mxu0 0.0
    %v4677 = vand.u32 %v4070, 4294901760
    %4678 = vmatpush1.msra.mxu0 %v4677
    %4679 = vmatprep.subr.mxu0 0.0
    %v4680 = vand.u32 %v4071, 4294901760
    %4681 = vmatpush1.msra.mxu0 %v4680
    %4682 = vmatprep.subr.mxu0 0.0
    %4683 = vmatpush1.msra.mxu0 0.0
    %4684 = vmatprep.subr.mxu0 0.0
    %4685 = vmatpush1.msra.mxu0 0.0
    %4686 = vmatprep.subr.mxu0 0.0
    %4687 = vmatpush1.msra.mxu0 0.0
    %4688 = vmatprep.subr.mxu0 0.0
    %4689 = vmatpush1.msra.mxu0 0.0
    %4690 = vmatprep.subr.mxu0 0.0
    %4691 = vmatpush1.msra.mxu0 0.0
    %4692 = vmatprep.subr.mxu0 0.0
    %4693 = vmatpush1.msra.mxu0 0.0
    %4694 = vmatprep.subr.mxu0 0.0
    %4695 = vmatpush1.msra.mxu0 0.0
    %4696 = vmatprep.subr.mxu0 0.0
    %4697 = vmatpush1.msra.mxu0 0.0
    %4698 = vmatprep.subr.mxu0 0.0
    %4699 = vmatpush1.msra.mxu0 0.0
    %4700 = vmatprep.subr.mxu0 0.0
    %4701 = vmatpush1.msra.mxu0 0.0
    %4702 = vmatprep.subr.mxu0 0.0
    %4703 = vmatpush1.msra.mxu0 0.0
    %4704 = vmatprep.subr.mxu0 0.0
    %4705 = vmatpush1.msra.mxu0 0.0
    %4706 = vmatprep.subr.mxu0 0.0
    %4707 = vmatpush1.msra.mxu0 0.0
    %4708 = vmatprep.subr.mxu0 0.0
    %4709 = vmatpush1.msra.mxu0 0.0
    %4710 = vmatprep.subr.mxu0 0.0
    %4711 = vmatpush1.msra.mxu0 0.0
    %4712 = vmatprep.subr.mxu0 0.0
    %4713 = vmatpush1.msra.mxu0 0.0
    %4714 = vmatprep.subr.mxu0 0.0
    %4715 = vmatpush1.msra.mxu0 0.0
    %4716 = vmatprep.subr.mxu0 0.0
    %4717 = vmatpush1.msra.mxu0 0.0
    %4718 = vmatprep.subr.mxu0 0.0
    %4719 = vmatpush1.msra.mxu0 0.0
    %4720 = vmatprep.subr.mxu0 0.0
    %4721 = vmatpush1.msra.mxu0 0.0
    %4722 = vmatprep.subr.mxu0 0.0
    %4723 = vmatpush1.msra.mxu0 0.0
    %4724 = vmatprep.subr.mxu0 0.0
    %4725 = vmatpush1.msra.mxu0 0.0
    %4726 = vmatprep.subr.mxu0 0.0
    %4727 = vmatpush1.msra.mxu0 0.0
    %4728 = vmatprep.subr.mxu0 0.0
    %4729 = vmatpush1.msra.mxu0 0.0
    %4730 = vmatprep.mubr.f32.mxu0 0.0
    %v4731 = vand.u32 %v4078, 4294901760
    %4732 = vmatmul.mubr.f32.gmra.mrb[0].mxu0 %v4731
    %v4733 = vpop.f32.mrb[0].mxu0
    %v4734 = vadd.f32 %v4637, %v4733
    %v4735 = vpop.f32.mrb[0].mxu0
    %4736 = vmatprep.mubr.f32.mxu0 0.0
    %v4737 = vand.u32 %v4081, 4294901760
    %4738 = vmatmul.mubr.f32.gmra.mrb[0].mxu0 %v4737
    %v4739 = vpop.f32.mrb[0].mxu0
    %v4740 = vadd.f32 %v4643, %v4739
    %v4741 = vpop.f32.mrb[0].mxu0
    %4742 = vmatprep.mubr.f32.mxu0 0.0
    %v4743 = vand.u32 %v4084, 4294901760
    %4744 = vmatmul.mubr.f32.gmra.mrb[0].mxu0 %v4743
    %v4745 = vpop.f32.mrb[0].mxu0
    %v4746 = vadd.f32 %v4649, %v4745
    %v4747 = vpop.f32.mrb[0].mxu0
    %4748 = vmatprep.mubr.f32.mxu0 0.0
    %v4749 = vand.u32 %v4087, 4294901760
    %4750 = vmatmul.mubr.f32.gmra.mrb[0].mxu0 %v4749
    %v4751 = vpop.f32.mrb[0].mxu0
    %v4752 = vadd.f32 %v4655, %v4751
    %v4753 = vpop.f32.mrb[0].mxu0
    %4754 = vdwg.mxu0
    %v4755 = vlog2.pop %v4734
    %v4756 = vmul.f32 %v4755, 0.6931472
    %v4757 = vlog2.pop %v4740
    %v4758 = vmul.f32 %v4757, 0.6931472
    %v4759 = vlog2.pop %v4746
    %v4760 = vmul.f32 %v4759, 0.6931472
    %v4761 = vlog2.pop %v4752
    %v4762 = vmul.f32 %v4761, 0.6931472
    %v4763 = vld [vmem:[%s7] sm:$0xff]
    %v4764 = vld [vmem:[%s7 + $0x8] sm:$0xff]
    %v4765 = vld [vmem:[%s7 + $0x10] sm:$0xff]
    %v4766 = vld [vmem:[%s7 + $0x18] sm:$0xff]
    %v4767 = vld [vmem:[%s7 + $0x20] sm:$0xff]
    %v4768 = vld [vmem:[%s7 + $0x28] sm:$0xff]
    %v4769 = vld [vmem:[%s7 + $0x30] sm:$0xff]
    %v4770 = vld [vmem:[%s7 + $0x38] sm:$0xff]
    %v4771 = vld [vmem:[%s7 + $0x40] sm:$0xff]
    %v4772 = vld [vmem:[%s7 + $0x48] sm:$0xff]
    %v4773 = vld [vmem:[%s7 + $0x50] sm:$0xff]
    %v4774 = vld [vmem:[%s7 + $0x58] sm:$0xff]
    %v4775 = vld [vmem:[%s7 + $0x60] sm:$0xff]
    %v4776 = vld [vmem:[%s7 + $0x68] sm:$0xff]
    %v4777 = vld [vmem:[%s7 + $0x70] sm:$0xff]
    %v4778 = vld [vmem:[%s7 + $0x78] sm:$0xff]
    %v4779 = vld [vmem:[%s8] sm:$0x3]
    %v4781 = vlaneseq
    %v4782 = vshrl.u32 %v4781, 7
    %v4783 = vsub.s32 0, %v4782
    %v4784 = vrot.slane %v4779, %v4783
    %v4785 = vlaneseq
    %v4786 = vshrl.u32 %v4785, 7
    %v4787 = vsub.s32 1, %v4786
    %v4788 = vrot.slane %v4779, %v4787
    %v4792 = vsel %vm4076, %v4756, 0
    %v4795 = vsel %vm4076, %v4758, 0
    %v4798 = vsel %vm4076, %v4760, 0
    %v4801 = vsel %vm4076, %v4762, 0
    %4803 = vmatprep.subr.mxu0 %v4764
    %4804 = vmatpush1.msra.mxu0 %v4763
    %4805 = vmatprep.subr.mxu0 %v4766
    %4806 = vmatpush1.msra.mxu0 %v4765
    %4807 = vmatprep.subr.mxu0 %v4768
    %4808 = vmatpush1.msra.mxu0 %v4767
    %4809 = vmatprep.subr.mxu0 %v4770
    %4810 = vmatpush1.msra.mxu0 %v4769
    %4811 = vmatprep.subr.mxu0 %v4772
    %4812 = vmatpush1.msra.mxu0 %v4771
    %4813 = vmatprep.subr.mxu0 %v4774
    %4814 = vmatpush1.msra.mxu0 %v4773
    %4815 = vmatprep.subr.mxu0 %v4776
    %4816 = vmatpush1.msra.mxu0 %v4775
    %4817 = vmatprep.subr.mxu0 %v4778
    %4818 = vmatpush1.msra.mxu0 %v4777
    %4819 = vmatprep.subr.mxu0 0.0
    %4820 = vmatpush1.msra.mxu0 0.0
    %4821 = vmatprep.subr.mxu0 0.0
    %4822 = vmatpush1.msra.mxu0 0.0
    %4823 = vmatprep.subr.mxu0 0.0
    %4824 = vmatpush1.msra.mxu0 0.0
    %4825 = vmatprep.subr.mxu0 0.0
    %4826 = vmatpush1.msra.mxu0 0.0
    %4827 = vmatprep.subr.mxu0 0.0
    %4828 = vmatpush1.msra.mxu0 0.0
    %4829 = vmatprep.subr.mxu0 0.0
    %4830 = vmatpush1.msra.mxu0 0.0
    %4831 = vmatprep.subr.mxu0 0.0
    %4832 = vmatpush1.msra.mxu0 0.0
    %4833 = vmatprep.subr.mxu0 0.0
    %4834 = vmatpush1.msra.mxu0 0.0
    %4835 = vmatprep.subr.mxu0 0.0
    %4836 = vmatpush1.msra.mxu0 0.0
    %4837 = vmatprep.subr.mxu0 0.0
    %4838 = vmatpush1.msra.mxu0 0.0
    %4839 = vmatprep.subr.mxu0 0.0
    %4840 = vmatpush1.msra.mxu0 0.0
    %4841 = vmatprep.subr.mxu0 0.0
    %4842 = vmatpush1.msra.mxu0 0.0
    %4843 = vmatprep.subr.mxu0 0.0
    %4844 = vmatpush1.msra.mxu0 0.0
    %4845 = vmatprep.subr.mxu0 0.0
    %4846 = vmatpush1.msra.mxu0 0.0
    %4847 = vmatprep.subr.mxu0 0.0
    %4848 = vmatpush1.msra.mxu0 0.0
    %4849 = vmatprep.subr.mxu0 0.0
    %4850 = vmatpush1.msra.mxu0 0.0
    %4851 = vmatprep.subr.mxu0 0.0
    %4852 = vmatpush1.msra.mxu0 0.0
    %4853 = vmatprep.subr.mxu0 0.0
    %4854 = vmatpush1.msra.mxu0 0.0
    %4855 = vmatprep.subr.mxu0 0.0
    %4856 = vmatpush1.msra.mxu0 0.0
    %4857 = vmatprep.subr.mxu0 0.0
    %4858 = vmatpush1.msra.mxu0 0.0
    %4859 = vmatprep.subr.mxu0 0.0
    %4860 = vmatpush1.msra.mxu0 0.0
    %4861 = vmatprep.subr.mxu0 0.0
    %4862 = vmatpush1.msra.mxu0 0.0
    %4863 = vmatprep.subr.mxu0 0.0
    %4864 = vmatpush1.msra.mxu0 0.0
    %4865 = vmatprep.subr.mxu0 0.0
    %4866 = vmatpush1.msra.mxu0 0.0
    %4867 = vmatprep.mubr.f32.mxu0 0.0
    %4868 = vmatmul.mubr.f32.gmra.mrb[0].mxu0 %v4792
    %v4869 = vpop.f32.mrb[0].mxu0
    %v4870 = vadd.f32 %v4784, %v4869
    %v4871 = vpop.f32.mrb[0].mxu0
    %v4872 = vadd.f32 %v4788, %v4871
    %4873 = vmatprep.mubr.f32.mxu0 0.0
    %4874 = vmatmul.mubr.f32.gmra.mrb[0].mxu0 %v4795
    %v4875 = vpop.f32.mrb[0].mxu0
    %v4876 = vadd.f32 %v4784, %v4875
    %v4877 = vpop.f32.mrb[0].mxu0
    %v4878 = vadd.f32 %v4788, %v4877
    %4879 = vmatprep.mubr.f32.mxu0 0.0
    %4880 = vmatmul.mubr.f32.gmra.mrb[0].mxu0 %v4798
    %v4881 = vpop.f32.mrb[0].mxu0
    %v4882 = vadd.f32 %v4784, %v4881
    %v4883 = vpop.f32.mrb[0].mxu0
    %v4884 = vadd.f32 %v4788, %v4883
    %4885 = vmatprep.mubr.f32.mxu0 0.0
    %4886 = vmatmul.mubr.f32.gmra.mrb[0].mxu0 %v4801
    %v4887 = vpop.f32.mrb[0].mxu0
    %v4888 = vadd.f32 %v4784, %v4887
    %v4889 = vpop.f32.mrb[0].mxu0
    %v4890 = vadd.f32 %v4788, %v4889
    %4891 = vdwg.mxu0
    %v4892 = vmax.f32 %v4870, 0.0
    %v4893 = vmax.f32 %v4872, 0.0
    %v4894 = vmax.f32 %v4876, 0.0
    %v4895 = vmax.f32 %v4878, 0.0
    %v4896 = vmax.f32 %v4882, 0.0
    %v4897 = vmax.f32 %v4884, 0.0
    %v4898 = vmax.f32 %v4888, 0.0
    %v4899 = vmax.f32 %v4890, 0.0
    %v4900 = vld [vmem:[%s9] sm:$0xff]
    %v4901 = vld [vmem:[%s9 + $0x8] sm:$0xff]
    %v4902 = vld [vmem:[%s9 + $0x10] sm:$0xff]
    %v4903 = vld [vmem:[%s9 + $0x18] sm:$0xff]
    %v4904 = vld [vmem:[%s9 + $0x20] sm:$0xff]
    %v4905 = vld [vmem:[%s9 + $0x28] sm:$0xff]
    %v4906 = vld [vmem:[%s9 + $0x30] sm:$0xff]
    %v4907 = vld [vmem:[%s9 + $0x38] sm:$0xff]
    %v4908 = vld [vmem:[%s9 + $0x40] sm:$0xff]
    %v4909 = vld [vmem:[%s9 + $0x48] sm:$0xff]
    %v4910 = vld [vmem:[%s9 + $0x50] sm:$0xff]
    %v4911 = vld [vmem:[%s9 + $0x58] sm:$0xff]
    %v4912 = vld [vmem:[%s9 + $0x60] sm:$0xff]
    %v4913 = vld [vmem:[%s9 + $0x68] sm:$0xff]
    %v4914 = vld [vmem:[%s9 + $0x70] sm:$0xff]
    %v4915 = vld [vmem:[%s9 + $0x78] sm:$0xff]
    %v4916 = vld [vmem:[%s9 + $0x80] sm:$0xff]
    %v4917 = vld [vmem:[%s9 + $0x88] sm:$0xff]
    %v4918 = vld [vmem:[%s9 + $0x90] sm:$0xff]
    %v4919 = vld [vmem:[%s9 + $0x98] sm:$0xff]
    %v4920 = vld [vmem:[%s9 + $0xa0] sm:$0xff]
    %v4921 = vld [vmem:[%s9 + $0xa8] sm:$0xff]
    %v4922 = vld [vmem:[%s9 + $0xb0] sm:$0xff]
    %v4923 = vld [vmem:[%s9 + $0xb8] sm:$0xff]
    %v4924 = vld [vmem:[%s9 + $0xc0] sm:$0xff]
    %v4925 = vld [vmem:[%s9 + $0xc8] sm:$0xff]
    %v4926 = vld [vmem:[%s9 + $0xd0] sm:$0xff]
    %v4927 = vld [vmem:[%s9 + $0xd8] sm:$0xff]
    %v4928 = vld [vmem:[%s9 + $0xe0] sm:$0xff]
    %v4929 = vld [vmem:[%s9 + $0xe8] sm:$0xff]
    %v4930 = vld [vmem:[%s9 + $0xf0] sm:$0xff]
    %v4931 = vld [vmem:[%s9 + $0xf8] sm:$0xff]
    %v4932 = vstv %s59
    %4933 = vmatprep.subr.mxu0 0.0
    %4934 = vmatpush1.msra.mxu0 %v4900
    %4935 = vmatprep.subr.mxu0 0.0
    %4936 = vmatpush1.msra.mxu0 %v4901
    %4937 = vmatprep.subr.mxu0 0.0
    %4938 = vmatpush1.msra.mxu0 %v4902
    %4939 = vmatprep.subr.mxu0 0.0
    %4940 = vmatpush1.msra.mxu0 %v4903
    %4941 = vmatprep.subr.mxu0 0.0
    %4942 = vmatpush1.msra.mxu0 %v4904
    %4943 = vmatprep.subr.mxu0 0.0
    %4944 = vmatpush1.msra.mxu0 %v4905
    %4945 = vmatprep.subr.mxu0 0.0
    %4946 = vmatpush1.msra.mxu0 %v4906
    %4947 = vmatprep.subr.mxu0 0.0
    %4948 = vmatpush1.msra.mxu0 %v4907
    %4949 = vmatprep.subr.mxu0 0.0
    %4950 = vmatpush1.msra.mxu0 %v4908
    %4951 = vmatprep.subr.mxu0 0.0
    %4952 = vmatpush1.msra.mxu0 %v4909
    %4953 = vmatprep.subr.mxu0 0.0
    %4954 = vmatpush1.msra.mxu0 %v4910
    %4955 = vmatprep.subr.mxu0 0.0
    %4956 = vmatpush1.msra.mxu0 %v4911
    %4957 = vmatprep.subr.mxu0 0.0
    %4958 = vmatpush1.msra.mxu0 %v4912
    %4959 = vmatprep.subr.mxu0 0.0
    %4960 = vmatpush1.msra.mxu0 %v4913
    %4961 = vmatprep.subr.mxu0 0.0
    %4962 = vmatpush1.msra.mxu0 %v4914
    %4963 = vmatprep.subr.mxu0 0.0
    %4964 = vmatpush1.msra.mxu0 %v4915
    %4965 = vmatprep.subr.mxu0 0.0
    %4966 = vmatpush1.msra.mxu0 %v4916
    %4967 = vmatprep.subr.mxu0 0.0
    %4968 = vmatpush1.msra.mxu0 %v4917
    %4969 = vmatprep.subr.mxu0 0.0
    %4970 = vmatpush1.msra.mxu0 %v4918
    %4971 = vmatprep.subr.mxu0 0.0
    %4972 = vmatpush1.msra.mxu0 %v4919
    %4973 = vmatprep.subr.mxu0 0.0
    %4974 = vmatpush1.msra.mxu0 %v4920
    %4975 = vmatprep.subr.mxu0 0.0
    %4976 = vmatpush1.msra.mxu0 %v4921
    %4977 = vmatprep.subr.mxu0 0.0
    %4978 = vmatpush1.msra.mxu0 %v4922
    %4979 = vmatprep.subr.mxu0 0.0
    %4980 = vmatpush1.msra.mxu0 %v4923
    %4981 = vmatprep.subr.mxu0 0.0
    %4982 = vmatpush1.msra.mxu0 %v4924
    %4983 = vmatprep.subr.mxu0 0.0
    %4984 = vmatpush1.msra.mxu0 %v4925
    %4985 = vmatprep.subr.mxu0 0.0
    %4986 = vmatpush1.msra.mxu0 %v4926
    %4987 = vmatprep.subr.mxu0 0.0
    %4988 = vmatpush1.msra.mxu0 %v4927
    %4989 = vmatprep.subr.mxu0 0.0
    %4990 = vmatpush1.msra.mxu0 %v4928
    %4991 = vmatprep.subr.mxu0 0.0
    %4992 = vmatpush1.msra.mxu0 %v4929
    %4993 = vmatprep.subr.mxu0 0.0
    %4994 = vmatpush1.msra.mxu0 %v4930
    %4995 = vmatprep.subr.mxu0 0.0
    %4996 = vmatpush1.msra.mxu0 %v4931
    %4997 = vmatprep.mubr.f32.mxu0 %v4893
    %4998 = vmatmul.mubr.f32.gmra.mrb[0].mxu0 %v4892
    %v4999 = vpop.f32.mrb[0].mxu0
    %v5000 = vadd.f32 %v4932, %v4999
    %v5001 = vpop.f32.mrb[0].mxu0
    %5002 = vmatprep.mubr.f32.mxu0 %v4895
    %5003 = vmatmul.mubr.f32.gmra.mrb[0].mxu0 %v4894
    %v5004 = vpop.f32.mrb[0].mxu0
    %v5005 = vadd.f32 %v4932, %v5004
    %v5006 = vpop.f32.mrb[0].mxu0
    %5007 = vmatprep.mubr.f32.mxu0 %v4897
    %5008 = vmatmul.mubr.f32.gmra.mrb[0].mxu0 %v4896
    %v5009 = vpop.f32.mrb[0].mxu0
    %v5010 = vadd.f32 %v4932, %v5009
    %v5011 = vpop.f32.mrb[0].mxu0
    %5012 = vmatprep.mubr.f32.mxu0 %v4899
    %5013 = vmatmul.mubr.f32.gmra.mrb[0].mxu0 %v4898
    %v5014 = vpop.f32.mrb[0].mxu0
    %v5015 = vadd.f32 %v4932, %v5014
    %v5016 = vpop.f32.mrb[0].mxu0
    %5017 = vdwg.mxu0
    %v5018 = vld [vmem:[%s10] sm:$0xff]
    %v5019 = vld [vmem:[%s10 + $0x8] sm:$0xff]
    %v5020 = vld [vmem:[%s10 + $0x10] sm:$0xff]
    %v5021 = vld [vmem:[%s10 + $0x18] sm:$0xff]
    %5023 = vset.pattern.permute.xlu0 0
    %5024 = vperm.xlu0 %5023, %v5018
    %v5025 = vpop.permute.xlu0 %5024
    %5028 = vset.pattern.permute.xlu0 0
    %5029 = vperm.xlu0 %5028, %v5019
    %v5030 = vpop.permute.xlu0 %5029
    %5033 = vset.pattern.permute.xlu0 0
    %5034 = vperm.xlu0 %5033, %v5020
    %v5035 = vpop.permute.xlu0 %5034
    %5038 = vset.pattern.permute.xlu0 0
    %5039 = vperm.xlu0 %5038, %v5021
    %v5040 = vpop.permute.xlu0 %5039
    %v5042 = vadd.f32 %v5000, %v5025
    %v5043 = vadd.f32 %v5005, %v5030
    %v5044 = vadd.f32 %v5010, %v5035
    %v5045 = vadd.f32 %v5015, %v5040
    %v5046 = vsel %vm3898, %v5042, -inf
    %v5047 = vrot.slane %v5046, 4
    %v5048 = vmax.f32 %v5046, %v5047
    %v5049 = vrot.slane %v5048, 2
    %v5050 = vmax.f32 %v5048, %v5049
    %v5051 = vrot.slane %v5050, 1
    %v5052 = vmax.f32 %v5050, %v5051
    %v5053 = vsel %vm3898, %v5043, -inf
    %v5054 = vrot.slane %v5053, 4
    %v5055 = vmax.f32 %v5053, %v5054
    %v5056 = vrot.slane %v5055, 2
    %v5057 = vmax.f32 %v5055, %v5056
    %v5058 = vrot.slane %v5057, 1
    %v5059 = vmax.f32 %v5057, %v5058
    %v5060 = vsel %vm3898, %v5044, -inf
    %v5061 = vrot.slane %v5060, 4
    %v5062 = vmax.f32 %v5060, %v5061
    %v5063 = vrot.slane %v5062, 2
    %v5064 = vmax.f32 %v5062, %v5063
    %v5065 = vrot.slane %v5064, 1
    %v5066 = vmax.f32 %v5064, %v5065
    %v5067 = vsel %vm3898, %v5045, -inf
    %v5068 = vrot.slane %v5067, 4
    %v5069 = vmax.f32 %v5067, %v5068
    %v5070 = vrot.slane %v5069, 2
    %v5071 = vmax.f32 %v5069, %v5070
    %v5072 = vrot.slane %v5071, 1
    %v5073 = vmax.f32 %v5071, %v5072
    %v5074 = vld [vmem:[%s3] sm:$0x1]
    %v5075 = vld [vmem:[%s3 + $0x1] sm:$0x1]
    %v5078 = vlaneseq
    %v5079 = vshrl.u32 %v5078, 7
    %v5080 = vsub.s32 0, %v5079
    %v5081 = vrot.slane %v5074, %v5080
    %v5082 = vlaneseq
    %v5083 = vshrl.u32 %v5082, 7
    %v5084 = vsub.s32 0, %v5083
    %v5085 = vrot.slane %v5075, %v5084
    %v5088 = vmul.f32 %v5052, %v5081
    %v5089 = vmul.f32 %v5059, %v5081
    %v5090 = vmul.f32 %v5066, %v5085
    %v5091 = vmul.f32 %v5073, %v5085
    %v5096 = vrot.slane %v5089, 7
    %vm5097 = vcmask 1041409
    %v5098 = vsel %vm5097, %v5096, %v5088
    %v5099 = vrot.slane %v5091, 7
    %v5100 = vsel %vm5097, %v5099, %v5090
    %vm5103 = vcmask 58368
    %v5104 = vsel %vm5103, %v5098, 0.0
    %5105 = vadd.xlane.f32.xlu0 %v5104
    %v5106 = vpop.xlane.xlu0 %5105
    %v5107 = vsel %vm5103, %v5100, 0.0
    %5108 = vadd.xlane.f32.xlu0 %v5107
    %v5109 = vpop.xlane.xlu0 %5108
    %v5112 = vlaneseq
    %v5113 = vand.u32 %v5112, 127
    %v5114 = vlaneseq
    %v5115 = vshrl.u32 %v5114, 7
    %v5116 = vsub.s32 %v5113, %v5115
    %v5117 = vrot.slane %v5106, %v5116
    %v5118 = vlaneseq
    %v5119 = vshrl.u32 %v5118, 7
    %v5120 = vsub.s32 %v5113, %v5119
    %v5121 = vrot.slane %v5109, %v5120
    %v5122 = vsel %vm5097, %v5121, %v5117
    %vm5124 = vcmask 9216
    %5125 = vst.msk [vmem:[#allocation5] sm:$0x3] %vm5124, %v5122
    // Predicated region
    $region58: #{ndrm1_forward.1} parent=1 // pred_check
      _
    $region59: #{ndrm1_forward.1} parent=1 // pred_check_branch
      %5127 = sbr.rel (0) target = $region61
    $region60: #{ndrm1_forward.1} parent=1 // pred_region
      %s5129 = ssub.s32 32, 32
      %5130 = vsyncadd [#allocation3], %s5129
      %s5132 = sshll.u32 [#allocation5], 4
      %s5133 = int_to_ptr.vmem [resolvable:$true] %s5132
      %5135 = dma.vmem_to_hbm [thread:$0]  %s5133, 32, %s13, [#allocation3]
    $region61: #{ndrm1_forward.1} parent=1 // pred_fallthru
      _
    // Predicated region
    $region62: #{ndrm1_forward.1} parent=1 // pred_check
      _
    $region63: #{ndrm1_forward.1} parent=1 // pred_check_branch
      %5137 = sbr.rel (0) target = $region65
    $region64: #{ndrm1_forward.1} parent=1 // pred_region
      %5138 = dma.done [#allocation3], 32
    $region65: #{ndrm1_forward.1} parent=1 // pred_fallthru
      _
    %5139 = vsyncpa [#allocation3], 1
    %5140 = vsyncpa [#allocation4], 1

</llo_original>
